<compile_context>
chip_gen: v7x
topology: tpu7x:2x2x1
jax: 0.10.0
libtpu: 0.0.40
codegen_flags: <defaults>
</compile_context>

<pallas_src>
import functools
import math

import jax
import jax.numpy as jnp
from jax import lax
from jax.experimental import pallas as pl
from jax.experimental.pallas import tpu as pltpu


# ------------------------- fused Pallas kernel -------------------------

def _l2_normalize(x):
    # F.normalize(p=2, dim=-1, eps=1e-12): x / max(||x||, 1e-12)
    # == x * rsqrt(max(sum(x^2), 1e-24))   (exactly, incl. the clamp branch)
    ss = jnp.sum(x * x, axis=-1, keepdims=True)
    return x * lax.rsqrt(jnp.maximum(ss, 1e-24))


def _decoder_kernel(tgt_ref, mem_ref,
                    s_wqkv_ref, s_wt_ref, s_w1_ref, s_b1_ref, s_w2_ref,
                    s_b2_ref, s_g_ref, s_bt_ref,
                    c_wq_ref, c_wkv_ref, c_wt_ref, c_w1_ref, c_b1_ref,
                    c_w2_ref, c_b2_ref, c_g_ref, c_bt_ref,
                    o_ref, *, num_layers, B, L, Lm, Kd):
    """Entire TransformerDecoder forward, VMEM-resident, flat (L*B, D) layout."""
    D = tgt_ref.shape[-1]
    LB = L * B
    LmB = Lm * B
    f32 = jnp.float32

    x = tgt_ref[...]            # (L*B, D), row index = l*B + b
    mem = mem_ref[...]          # (Lm*B, D)

    # ---------------- hoisted constants (computed once, reused per layer) ----
    # same-batch 0/1 masks for the flat batch-masked attention matmuls
    row_b = lax.broadcasted_iota(jnp.int32, (LB, LB), 0) % B
    col_b = lax.broadcasted_iota(jnp.int32, (LB, LB), 1) % B
    mask_self = (row_b == col_b).astype(f32)                     # (LB, LB)
    seg_mean = mask_self * (1.0 / L)                             # per-batch mean operator

    row_bc = lax.broadcasted_iota(jnp.int32, (LB, LmB), 0) % B
    col_bc = lax.broadcasted_iota(jnp.int32, (LB, LmB), 1) % B
    mask_cross = (row_bc == col_bc).astype(f32)                  # (LB, LmB)

    def load_ffn(wt_ref, w1_ref, b1_ref, w2_ref, b2_ref, g_ref, bt_ref):
        # Broadcast biases / LayerNorm params ONCE (JAX does not CSE broadcasts).
        return dict(
            wt_t=wt_ref[...], w1_t=w1_ref[...],
            b1=jnp.broadcast_to(b1_ref[...], (LB, Kd)),
            w2_t=w2_ref[...],
            b2=jnp.broadcast_to(b2_ref[...], (LB, D)),
            g=jnp.broadcast_to(g_ref[...], (LB, D)),
            beta=jnp.broadcast_to(bt_ref[...], (LB, D)),
        )

    self_W = load_ffn(s_wt_ref, s_w1_ref, s_b1_ref, s_w2_ref, s_b2_ref,
                      s_g_ref, s_bt_ref)
    cross_W = load_ffn(c_wt_ref, c_w1_ref, c_b1_ref, c_w2_ref, c_b2_ref,
                       c_g_ref, c_bt_ref)
    s_wqkv = s_wqkv_ref[...]    # (D, 2*Kd + D)  fused Q|K|V projection
    c_wq = c_wq_ref[...]        # (D, Kd)
    c_wkv = c_wkv_ref[...]      # (D, Kd + D)    fused K|V projection

    # Cross-attention K/V of `memory` are layer-invariant (memory constant,
    # weights shared across layers) -> one fused matmul, hoisted.
    mem_kv = jnp.dot(mem, c_wkv, preferred_element_type=f32)     # (LmB, Kd+D)
    mem_k = _l2_normalize(mem_kv[:, :Kd])                        # (LmB, Kd)
    mem_v = mem_kv[:, Kd:]                                       # (LmB, D)

    def attn_core(wq, wk, wv, q, mask, W):
        # RelationUnit (single head, temp=1) as one flat batch-masked matmul.
        dot = lax.dot_general(wq, wk, (((1,), (1,)), ((), ())),
                              preferred_element_type=f32)        # (LB, Nk)
        dot = dot - jnp.max(dot, axis=-1, keepdims=True)
        e = jnp.exp(dot) * mask                                  # exact zeros off-batch
        # softmax over keys: reciprocal-multiply on the small reduced vector
        aff = e * (1.0 / jnp.sum(e, axis=-1, keepdims=True))
        # affinity / (1e-9 + affinity.sum over queries): off-batch entries are
        # exactly 0, so a plain axis-0 sum is the per-batch query sum.
        aff = aff * (1.0 / (1e-9 + jnp.sum(aff, axis=0, keepdims=True)))
        attn = jnp.dot(aff, wv, preferred_element_type=f32)      # (LB, D)
        out = jnp.maximum(jnp.dot(q - attn, W["wt_t"],
                                  preferred_element_type=f32), 0.0)  # trans_conv + ReLU
        # TransNonlinear (dropout = identity in eval) + LayerNorm(eps=1e-5)
        h = jnp.maximum(jnp.dot(out, W["w1_t"],
                                preferred_element_type=f32) + W["b1"], 0.0)
        src = out + jnp.dot(h, W["w2_t"], preferred_element_type=f32) + W["b2"]
        mu = jnp.mean(src, axis=-1, keepdims=True)
        var = jnp.mean((src - mu) ** 2, axis=-1, keepdims=True)
        return (src - mu) * lax.rsqrt(var + 1e-5) * W["g"] + W["beta"]

    def add_instnorm_relu(a, b):
        # relu(InstanceNorm1d(a + b)): normalize over L per (batch, feature),
        # no affine, eps=1e-5, biased variance.  Per-batch mean/var via a tiny
        # segment-mean matmul -> no 2D<->3D reshape / relayout.
        s = a + b                                                # (LB, D)
        mu = jnp.dot(seg_mean, s, preferred_element_type=f32)    # per-batch mean (row-broadcast)
        c = s - mu
        var = jnp.dot(seg_mean, c * c, preferred_element_type=f32)
        return jnp.maximum(c * lax.rsqrt(var + 1e-5), 0.0)

    def layer_step(x):
        # --- self-attention block (fused Q|K|V projection) ---
        qkv = jnp.dot(x, s_wqkv, preferred_element_type=f32)     # (LB, 2Kd+D)
        wq = _l2_normalize(qkv[:, :Kd])
        wk = _l2_normalize(qkv[:, Kd:2 * Kd])
        wv = qkv[:, 2 * Kd:]
        x = add_instnorm_relu(x, attn_core(wq, wk, wv, x, mask_self, self_W))      # norm1
        # --- cross-attention block (memory K/V hoisted) ---
        wq_c = _l2_normalize(jnp.dot(x, c_wq, preferred_element_type=f32))
        x = add_instnorm_relu(x, attn_core(wq_c, mem_k, mem_v, x, mask_cross,
                                           cross_W))                               # norm2
        return x

    if num_layers <= 4:
        for _ in range(num_layers):          # static unroll; all layers share weights
            x = layer_step(x)
    else:
        # bound vreg live ranges for deep decoders (body is layer-invariant)
        x = lax.fori_loop(0, num_layers, lambda _, v: layer_step(v), x)

    o_ref[...] = x


# ------------------------- wrapper (single fused pallas_call) -------------------------

@functools.partial(jax.jit, static_argnums=(4,))
def transformer_decoder(tgt, memory, self_w, cross_w, num_layers):
    """tgt: (L, B, D), memory: (Lm, B, D) — PyTorch layout. Returns (L, B, D)."""
    L, B, D = tgt.shape
    Lm = memory.shape[0]
    Kd = self_w["wq_t"].shape[1]

    # Native layout kept: only contiguous (free) reshapes at the boundary,
    # no transposes / HBM round-trips.
    x = tgt.reshape(L * B, D).astype(jnp.float32)
    mem = memory.reshape(Lm * B, D).astype(jnp.float32)

    # Fuse the tiny projection weights once, outside the kernel.
    s_wqkv = jnp.concatenate([self_w["wq_t"], self_w["wk_t"], self_w["wv_t"]], axis=1)
    c_wkv = jnp.concatenate([cross_w["wk_t"], cross_w["wv_t"]], axis=1)

    args = (x, mem,
            s_wqkv, self_w["wt_t"], self_w["w1_t"], self_w["b1"],
            self_w["w2_t"], self_w["b2"], self_w["g"], self_w["beta"],
            cross_w["wq_t"], c_wkv, cross_w["wt_t"], cross_w["w1_t"], cross_w["b1"],
            cross_w["w2_t"], cross_w["b2"], cross_w["g"], cross_w["beta"])

    vmem = pl.BlockSpec(memory_space=pltpu.MemorySpace.VMEM)  # whole array in VMEM
    out = pl.pallas_call(
        functools.partial(_decoder_kernel, num_layers=num_layers,
                          B=B, L=L, Lm=Lm, Kd=Kd),
        out_shape=jax.ShapeDtypeStruct((L * B, D), jnp.float32),
        in_specs=[vmem] * len(args),
        out_specs=vmem,
        compiler_params=pltpu.CompilerParams(vmem_limit_bytes=32 * 1024 * 1024),
    )(*args)
    # TODO(synk): on v7x (2 TensorCores) a grid=(B,) "parallel" variant could
    # shard the batch across cores; the grid-less single call is optimal on
    # v5e/v6e at these shapes.
    return out.reshape(L, B, D)


# ------------------------- parameters (deterministic, synthetic) -------------------------

def init_attn_weights(key, D, Kd):
    ks = jax.random.split(key, 8)
    std_kq = math.sqrt(2.0 / Kd)
    std_v = math.sqrt(2.0 / D)
    wk = jax.random.normal(ks[0], (Kd, D), jnp.float32) * std_kq   # WK.weight
    wq = jax.random.normal(ks[1], (Kd, D), jnp.float32) * std_kq   # WQ.weight
    wv = jax.random.normal(ks[2], (D, D), jnp.float32) * std_v     # WV.weight
    wt = jax.random.normal(ks[3], (D, D), jnp.float32) * (1.0 / math.sqrt(D))    # trans_conv
    w1 = jax.random.normal(ks[4], (Kd, D), jnp.float32) * (1.0 / math.sqrt(D))   # linear1
    b1 = jax.random.normal(ks[5], (1, Kd), jnp.float32) * 0.01
    w2 = jax.random.normal(ks[6], (D, Kd), jnp.float32) * (1.0 / math.sqrt(Kd))  # linear2
    b2 = jax.random.normal(ks[7], (1, D), jnp.float32) * 0.01
    return dict(wk_t=wk.T, wq_t=wq.T, wv_t=wv.T, wt_t=wt.T,
                w1_t=w1.T, b1=b1, w2_t=w2.T, b2=b2,
                g=jnp.ones((1, D), jnp.float32), beta=jnp.zeros((1, D), jnp.float32))


# ------------------------- plain-JAX reference (for verification) -------------------------

def _ref_attn_block(x, kv, W):
    wq = x @ W["wq_t"]
    wq = wq / jnp.maximum(jnp.linalg.norm(wq, axis=-1, keepdims=True), 1e-12)
    wk = kv @ W["wk_t"]
    wk = wk / jnp.maximum(jnp.linalg.norm(wk, axis=-1, keepdims=True), 1e-12)
    dot = jnp.einsum("blk,bmk->blm", wq, wk)
    aff = jax.nn.softmax(dot, axis=-1)
    aff = aff / (1e-9 + jnp.sum(aff, axis=1, keepdims=True))
    wv = kv @ W["wv_t"]
    out = jnp.einsum("blm,bmd->bld", aff, wv)
    out = jax.nn.relu((x - out) @ W["wt_t"])
    h = jax.nn.relu(out @ W["w1_t"] + W["b1"])
    src = out + (h @ W["w2_t"] + W["b2"])
    mean = src.mean(-1, keepdims=True)
    var = ((src - mean) ** 2).mean(-1, keepdims=True)
    return (src - mean) / jnp.sqrt(var + 1e-5) * W["g"] + W["beta"]


def _ref_add_instnorm_relu(x, y):
    s = x + y
    mean = s.mean(axis=1, keepdims=True)
    var = ((s - mean) ** 2).mean(axis=1, keepdims=True)
    return jax.nn.relu((s - mean) / jnp.sqrt(var + 1e-5))


def _ref_decoder(tgt, memory, self_w, cross_w, num_layers):
    x = jnp.transpose(tgt, (1, 0, 2))
    mem = jnp.transpose(memory, (1, 0, 2))
    for _ in range(num_layers):
        x = _ref_add_instnorm_relu(x, _ref_attn_block(x, x, self_w))
        x = _ref_add_instnorm_relu(x, _ref_attn_block(x, mem, cross_w))
    return jnp.transpose(x, (1, 0, 2))


# ------------------------- main -------------------------

if __name__ == "__main__":
    B, L, Lm, D, Kd, NLAYERS = 2, 8, 16, 32, 16, 2

    key = jax.random.PRNGKey(0)
    k1, k2, k3, k4 = jax.random.split(key, 4)
    tgt = jax.random.normal(k1, (L, B, D), jnp.float32)      # #pixel x batch x dim
    memory = jax.random.normal(k2, (Lm, B, D), jnp.float32)  # #pixel_mem x batch x dim

    self_w = init_attn_weights(k3, D, Kd)    # shared self-attn (passed-in multihead_attn)
    cross_w = init_attn_weights(k4, D, Kd)   # shared cross-attn (built inside the layer)

    out = transformer_decoder(tgt, memory, self_w, cross_w, NLAYERS)
    out = jax.block_until_ready(out)

    ref = jax.block_until_ready(_ref_decoder(tgt, memory, self_w, cross_w, NLAYERS))
    assert out.shape == (L, B, D)
    assert jnp.allclose(out, ref, atol=2e-4, rtol=1e-3), "mismatch vs. JAX reference"

    print("KERNEL_OK")
</pallas_src>

<mosaic_0001>
module attributes {stable_mosaic.version = 11 : i64} {
  func.func @_decoder_kernel(%arg0: memref<16x32xf32, #tpu.memory_space<vmem>>, %arg1: memref<32x32xf32, #tpu.memory_space<vmem>>, %arg2: memref<32x64xf32, #tpu.memory_space<vmem>>, %arg3: memref<32x32xf32, #tpu.memory_space<vmem>>, %arg4: memref<32x16xf32, #tpu.memory_space<vmem>>, %arg5: memref<1x16xf32, #tpu.memory_space<vmem>>, %arg6: memref<16x32xf32, #tpu.memory_space<vmem>>, %arg7: memref<1x32xf32, #tpu.memory_space<vmem>>, %arg8: memref<1x32xf32, #tpu.memory_space<vmem>>, %arg9: memref<1x32xf32, #tpu.memory_space<vmem>>, %arg10: memref<32x16xf32, #tpu.memory_space<vmem>>, %arg11: memref<32x48xf32, #tpu.memory_space<vmem>>, %arg12: memref<32x32xf32, #tpu.memory_space<vmem>>, %arg13: memref<32x16xf32, #tpu.memory_space<vmem>>, %arg14: memref<1x16xf32, #tpu.memory_space<vmem>>, %arg15: memref<16x32xf32, #tpu.memory_space<vmem>>, %arg16: memref<1x32xf32, #tpu.memory_space<vmem>>, %arg17: memref<1x32xf32, #tpu.memory_space<vmem>>, %arg18: memref<1x32xf32, #tpu.memory_space<vmem>>, %arg19: memref<16x32xf32, #tpu.memory_space<vmem>>) attributes {dimension_semantics = [], scalar_prefetch = 0 : i64, scratch_operands = 0 : i64, tpu.core_type = #tpu.core_type<tc>} {
    %c0 = arith.constant 0 : index
    %c0_0 = arith.constant 0 : index
    %0 = vector.load %arg0[%c0, %c0_0] : memref<16x32xf32, #tpu.memory_space<vmem>>, vector<16x32xf32>
    %c0_1 = arith.constant 0 : index
    %c0_2 = arith.constant 0 : index
    %1 = vector.load %arg1[%c0_1, %c0_2] : memref<32x32xf32, #tpu.memory_space<vmem>>, vector<32x32xf32>
    %2 = tpu.iota {dimensions = array<i32: 0>} : vector<16x16xi32>
    %c2_i32 = arith.constant 2 : i32
    %c0_i32 = arith.constant 0 : i32
    %3 = arith.cmpi eq, %c2_i32, %c0_i32 : i32
    %c1_i32 = arith.constant 1 : i32
    %4 = arith.select %3, %c1_i32, %c2_i32 : i32
    %5 = vector.broadcast %4 : i32 to vector<16x16xi32>
    %6 = arith.remsi %2, %5 : vector<16x16xi32>
    %c0_i32_3 = arith.constant 0 : i32
    %7 = vector.broadcast %c0_i32_3 : i32 to vector<16x16xi32>
    %8 = arith.cmpi ne, %6, %7 : vector<16x16xi32>
    %c0_i32_4 = arith.constant 0 : i32
    %9 = vector.broadcast %c0_i32_4 : i32 to vector<16x16xi32>
    %10 = arith.cmpi slt, %6, %9 : vector<16x16xi32>
    %c0_i32_5 = arith.constant 0 : i32
    %11 = arith.cmpi slt, %4, %c0_i32_5 : i32
    %12 = vector.broadcast %11 : i1 to vector<16x16xi1>
    %13 = vector.broadcast %12 : vector<16x16xi1> to vector<16x16xi1>
    %14 = arith.xori %10, %13 : vector<16x16xi1>
    %15 = arith.andi %14, %8 : vector<16x16xi1>
    %16 = vector.broadcast %4 : i32 to vector<16x16xi32>
    %17 = arith.addi %6, %16 : vector<16x16xi32>
    %18 = arith.select %15, %17, %6 : vector<16x16xi1>, vector<16x16xi32>
    %19 = tpu.iota {dimensions = array<i32: 1>} : vector<16x16xi32>
    %c2_i32_6 = arith.constant 2 : i32
    %c0_i32_7 = arith.constant 0 : i32
    %20 = arith.cmpi eq, %c2_i32_6, %c0_i32_7 : i32
    %c1_i32_8 = arith.constant 1 : i32
    %21 = arith.select %20, %c1_i32_8, %c2_i32_6 : i32
    %22 = vector.broadcast %21 : i32 to vector<16x16xi32>
    %23 = arith.remsi %19, %22 : vector<16x16xi32>
    %c0_i32_9 = arith.constant 0 : i32
    %24 = vector.broadcast %c0_i32_9 : i32 to vector<16x16xi32>
    %25 = arith.cmpi ne, %23, %24 : vector<16x16xi32>
    %c0_i32_10 = arith.constant 0 : i32
    %26 = vector.broadcast %c0_i32_10 : i32 to vector<16x16xi32>
    %27 = arith.cmpi slt, %23, %26 : vector<16x16xi32>
    %c0_i32_11 = arith.constant 0 : i32
    %28 = arith.cmpi slt, %21, %c0_i32_11 : i32
    %29 = vector.broadcast %28 : i1 to vector<16x16xi1>
    %30 = vector.broadcast %29 : vector<16x16xi1> to vector<16x16xi1>
    %31 = arith.xori %27, %30 : vector<16x16xi1>
    %32 = arith.andi %31, %25 : vector<16x16xi1>
    %33 = vector.broadcast %21 : i32 to vector<16x16xi32>
    %34 = arith.addi %23, %33 : vector<16x16xi32>
    %35 = arith.select %32, %34, %23 : vector<16x16xi1>, vector<16x16xi32>
    %36 = arith.cmpi eq, %18, %35 : vector<16x16xi32>
    %37 = arith.extui %36 : vector<16x16xi1> to vector<16x16xi32>
    %38 = arith.sitofp %37 : vector<16x16xi32> to vector<16x16xf32>
    %cst = arith.constant 1.250000e-01 : f32
    %39 = vector.broadcast %cst : f32 to vector<16x16xf32>
    %40 = arith.mulf %38, %39 : vector<16x16xf32>
    %41 = tpu.iota {dimensions = array<i32: 0>} : vector<16x32xi32>
    %c2_i32_12 = arith.constant 2 : i32
    %c0_i32_13 = arith.constant 0 : i32
    %42 = arith.cmpi eq, %c2_i32_12, %c0_i32_13 : i32
    %c1_i32_14 = arith.constant 1 : i32
    %43 = arith.select %42, %c1_i32_14, %c2_i32_12 : i32
    %44 = vector.broadcast %43 : i32 to vector<16x32xi32>
    %45 = arith.remsi %41, %44 : vector<16x32xi32>
    %c0_i32_15 = arith.constant 0 : i32
    %46 = vector.broadcast %c0_i32_15 : i32 to vector<16x32xi32>
    %47 = arith.cmpi ne, %45, %46 : vector<16x32xi32>
    %c0_i32_16 = arith.constant 0 : i32
    %48 = vector.broadcast %c0_i32_16 : i32 to vector<16x32xi32>
    %49 = arith.cmpi slt, %45, %48 : vector<16x32xi32>
    %c0_i32_17 = arith.constant 0 : i32
    %50 = arith.cmpi slt, %43, %c0_i32_17 : i32
    %51 = vector.broadcast %50 : i1 to vector<16x32xi1>
    %52 = vector.broadcast %51 : vector<16x32xi1> to vector<16x32xi1>
    %53 = arith.xori %49, %52 : vector<16x32xi1>
    %54 = arith.andi %53, %47 : vector<16x32xi1>
    %55 = vector.broadcast %43 : i32 to vector<16x32xi32>
    %56 = arith.addi %45, %55 : vector<16x32xi32>
    %57 = arith.select %54, %56, %45 : vector<16x32xi1>, vector<16x32xi32>
    %58 = tpu.iota {dimensions = array<i32: 1>} : vector<16x32xi32>
    %c2_i32_18 = arith.constant 2 : i32
    %c0_i32_19 = arith.constant 0 : i32
    %59 = arith.cmpi eq, %c2_i32_18, %c0_i32_19 : i32
    %c1_i32_20 = arith.constant 1 : i32
    %60 = arith.select %59, %c1_i32_20, %c2_i32_18 : i32
    %61 = vector.broadcast %60 : i32 to vector<16x32xi32>
    %62 = arith.remsi %58, %61 : vector<16x32xi32>
    %c0_i32_21 = arith.constant 0 : i32
    %63 = vector.broadcast %c0_i32_21 : i32 to vector<16x32xi32>
    %64 = arith.cmpi ne, %62, %63 : vector<16x32xi32>
    %c0_i32_22 = arith.constant 0 : i32
    %65 = vector.broadcast %c0_i32_22 : i32 to vector<16x32xi32>
    %66 = arith.cmpi slt, %62, %65 : vector<16x32xi32>
    %c0_i32_23 = arith.constant 0 : i32
    %67 = arith.cmpi slt, %60, %c0_i32_23 : i32
    %68 = vector.broadcast %67 : i1 to vector<16x32xi1>
    %69 = vector.broadcast %68 : vector<16x32xi1> to vector<16x32xi1>
    %70 = arith.xori %66, %69 : vector<16x32xi1>
    %71 = arith.andi %70, %64 : vector<16x32xi1>
    %72 = vector.broadcast %60 : i32 to vector<16x32xi32>
    %73 = arith.addi %62, %72 : vector<16x32xi32>
    %74 = arith.select %71, %73, %62 : vector<16x32xi1>, vector<16x32xi32>
    %75 = arith.cmpi eq, %57, %74 : vector<16x32xi32>
    %76 = arith.extui %75 : vector<16x32xi1> to vector<16x32xi32>
    %77 = arith.sitofp %76 : vector<16x32xi32> to vector<16x32xf32>
    %c0_24 = arith.constant 0 : index
    %c0_25 = arith.constant 0 : index
    %78 = vector.load %arg3[%c0_24, %c0_25] : memref<32x32xf32, #tpu.memory_space<vmem>>, vector<32x32xf32>
    %c0_26 = arith.constant 0 : index
    %c0_27 = arith.constant 0 : index
    %79 = vector.load %arg4[%c0_26, %c0_27] : memref<32x16xf32, #tpu.memory_space<vmem>>, vector<32x16xf32>
    %c0_28 = arith.constant 0 : index
    %c0_29 = arith.constant 0 : index
    %80 = vector.load %arg5[%c0_28, %c0_29] : memref<1x16xf32, #tpu.memory_space<vmem>>, vector<1x16xf32>
    %81 = vector.shape_cast %80 : vector<1x16xf32> to vector<1x16xf32>
    %82 = vector.broadcast %81 : vector<1x16xf32> to vector<16x16xf32>
    %c0_30 = arith.constant 0 : index
    %c0_31 = arith.constant 0 : index
    %83 = vector.load %arg6[%c0_30, %c0_31] : memref<16x32xf32, #tpu.memory_space<vmem>>, vector<16x32xf32>
    %c0_32 = arith.constant 0 : index
    %c0_33 = arith.constant 0 : index
    %84 = vector.load %arg7[%c0_32, %c0_33] : memref<1x32xf32, #tpu.memory_space<vmem>>, vector<1x32xf32>
    %85 = vector.shape_cast %84 : vector<1x32xf32> to vector<1x32xf32>
    %86 = vector.broadcast %85 : vector<1x32xf32> to vector<16x32xf32>
    %c0_34 = arith.constant 0 : index
    %c0_35 = arith.constant 0 : index
    %87 = vector.load %arg8[%c0_34, %c0_35] : memref<1x32xf32, #tpu.memory_space<vmem>>, vector<1x32xf32>
    %88 = vector.shape_cast %87 : vector<1x32xf32> to vector<1x32xf32>
    %89 = vector.broadcast %88 : vector<1x32xf32> to vector<16x32xf32>
    %c0_36 = arith.constant 0 : index
    %c0_37 = arith.constant 0 : index
    %90 = vector.load %arg9[%c0_36, %c0_37] : memref<1x32xf32, #tpu.memory_space<vmem>>, vector<1x32xf32>
    %91 = vector.shape_cast %90 : vector<1x32xf32> to vector<1x32xf32>
    %92 = vector.broadcast %91 : vector<1x32xf32> to vector<16x32xf32>
    %c0_38 = arith.constant 0 : index
    %c0_39 = arith.constant 0 : index
    %93 = vector.load %arg12[%c0_38, %c0_39] : memref<32x32xf32, #tpu.memory_space<vmem>>, vector<32x32xf32>
    %c0_40 = arith.constant 0 : index
    %c0_41 = arith.constant 0 : index
    %94 = vector.load %arg13[%c0_40, %c0_41] : memref<32x16xf32, #tpu.memory_space<vmem>>, vector<32x16xf32>
    %c0_42 = arith.constant 0 : index
    %c0_43 = arith.constant 0 : index
    %95 = vector.load %arg14[%c0_42, %c0_43] : memref<1x16xf32, #tpu.memory_space<vmem>>, vector<1x16xf32>
    %96 = vector.shape_cast %95 : vector<1x16xf32> to vector<1x16xf32>
    %97 = vector.broadcast %96 : vector<1x16xf32> to vector<16x16xf32>
    %c0_44 = arith.constant 0 : index
    %c0_45 = arith.constant 0 : index
    %98 = vector.load %arg15[%c0_44, %c0_45] : memref<16x32xf32, #tpu.memory_space<vmem>>, vector<16x32xf32>
    %c0_46 = arith.constant 0 : index
    %c0_47 = arith.constant 0 : index
    %99 = vector.load %arg16[%c0_46, %c0_47] : memref<1x32xf32, #tpu.memory_space<vmem>>, vector<1x32xf32>
    %100 = vector.shape_cast %99 : vector<1x32xf32> to vector<1x32xf32>
    %101 = vector.broadcast %100 : vector<1x32xf32> to vector<16x32xf32>
    %c0_48 = arith.constant 0 : index
    %c0_49 = arith.constant 0 : index
    %102 = vector.load %arg17[%c0_48, %c0_49] : memref<1x32xf32, #tpu.memory_space<vmem>>, vector<1x32xf32>
    %103 = vector.shape_cast %102 : vector<1x32xf32> to vector<1x32xf32>
    %104 = vector.broadcast %103 : vector<1x32xf32> to vector<16x32xf32>
    %c0_50 = arith.constant 0 : index
    %c0_51 = arith.constant 0 : index
    %105 = vector.load %arg18[%c0_50, %c0_51] : memref<1x32xf32, #tpu.memory_space<vmem>>, vector<1x32xf32>
    %106 = vector.shape_cast %105 : vector<1x32xf32> to vector<1x32xf32>
    %107 = vector.broadcast %106 : vector<1x32xf32> to vector<16x32xf32>
    %c0_52 = arith.constant 0 : index
    %c0_53 = arith.constant 0 : index
    %108 = vector.load %arg2[%c0_52, %c0_53] : memref<32x64xf32, #tpu.memory_space<vmem>>, vector<32x64xf32>
    %c0_54 = arith.constant 0 : index
    %c0_55 = arith.constant 0 : index
    %109 = vector.load %arg10[%c0_54, %c0_55] : memref<32x16xf32, #tpu.memory_space<vmem>>, vector<32x16xf32>
    %c0_56 = arith.constant 0 : index
    %c0_57 = arith.constant 0 : index
    %110 = vector.load %arg11[%c0_56, %c0_57] : memref<32x48xf32, #tpu.memory_space<vmem>>, vector<32x48xf32>
    %cst_58 = arith.constant dense<0.000000e+00> : vector<32x48xf32>
    %111 = tpu.matmul %1, %110, %cst_58 {dimension_numbers = #tpu.dot_dimension_numbers<[1], [0], [0], [1], [0, 0, 1, 1], [], []>} : vector<32x32xf32>, vector<32x48xf32>, vector<32x48xf32> -> vector<32x48xf32>
    %112 = vector.extract_strided_slice %111 {offsets = [0, 0], sizes = [32, 16], strides = [1, 1]} : vector<32x48xf32> to vector<32x16xf32>
    %113 = arith.mulf %112, %112 : vector<32x16xf32>
    %cst_59 = arith.constant dense<0.000000e+00> : vector<32xf32>
    %114 = vector.multi_reduction <add>, %113, %cst_59 [1] : vector<32x16xf32> to vector<32xf32>
    %115 = vector.shape_cast %114 : vector<32xf32> to vector<32x1xf32>
    %cst_60 = arith.constant 1.000000e-24 : f32
    %116 = vector.broadcast %cst_60 : f32 to vector<32x1xf32>
    %117 = arith.maximumf %115, %116 : vector<32x1xf32>
    %118 = math.rsqrt %117 : vector<32x1xf32>
    %119 = vector.broadcast %118 : vector<32x1xf32> to vector<32x16xf32>
    %120 = arith.mulf %112, %119 : vector<32x16xf32>
    %121 = vector.extract_strided_slice %111 {offsets = [0, 16], sizes = [32, 32], strides = [1, 1]} : vector<32x48xf32> to vector<32x32xf32>
    %cst_61 = arith.constant dense<0.000000e+00> : vector<16x64xf32>
    %122 = tpu.matmul %0, %108, %cst_61 {dimension_numbers = #tpu.dot_dimension_numbers<[1], [0], [0], [1], [0, 0, 1, 1], [], []>} : vector<16x32xf32>, vector<32x64xf32>, vector<16x64xf32> -> vector<16x64xf32>
    %123 = vector.extract_strided_slice %122 {offsets = [0, 0], sizes = [16, 16], strides = [1, 1]} : vector<16x64xf32> to vector<16x16xf32>
    %124 = arith.mulf %123, %123 : vector<16x16xf32>
    %cst_62 = arith.constant dense<0.000000e+00> : vector<16xf32>
    %125 = vector.multi_reduction <add>, %124, %cst_62 [1] : vector<16x16xf32> to vector<16xf32>
    %126 = vector.shape_cast %125 : vector<16xf32> to vector<16x1xf32>
    %cst_63 = arith.constant 1.000000e-24 : f32
    %127 = vector.broadcast %cst_63 : f32 to vector<16x1xf32>
    %128 = arith.maximumf %126, %127 : vector<16x1xf32>
    %129 = math.rsqrt %128 : vector<16x1xf32>
    %130 = vector.broadcast %129 : vector<16x1xf32> to vector<16x16xf32>
    %131 = arith.mulf %123, %130 : vector<16x16xf32>
    %132 = vector.extract_strided_slice %122 {offsets = [0, 16], sizes = [16, 16], strides = [1, 1]} : vector<16x64xf32> to vector<16x16xf32>
    %133 = arith.mulf %132, %132 : vector<16x16xf32>
    %cst_64 = arith.constant dense<0.000000e+00> : vector<16xf32>
    %134 = vector.multi_reduction <add>, %133, %cst_64 [1] : vector<16x16xf32> to vector<16xf32>
    %135 = vector.shape_cast %134 : vector<16xf32> to vector<16x1xf32>
    %cst_65 = arith.constant 1.000000e-24 : f32
    %136 = vector.broadcast %cst_65 : f32 to vector<16x1xf32>
    %137 = arith.maximumf %135, %136 : vector<16x1xf32>
    %138 = math.rsqrt %137 : vector<16x1xf32>
    %139 = vector.broadcast %138 : vector<16x1xf32> to vector<16x16xf32>
    %140 = arith.mulf %132, %139 : vector<16x16xf32>
    %141 = vector.extract_strided_slice %122 {offsets = [0, 32], sizes = [16, 32], strides = [1, 1]} : vector<16x64xf32> to vector<16x32xf32>
    %cst_66 = arith.constant dense<0.000000e+00> : vector<16x16xf32>
    %142 = tpu.matmul %131, %140, %cst_66 {dimension_numbers = #tpu.dot_dimension_numbers<[1], [1], [0], [0], [0, 0, 1, 0], [], []>} : vector<16x16xf32>, vector<16x16xf32>, vector<16x16xf32> -> vector<16x16xf32>
    %cst_67 = arith.constant dense<0xFF800000> : vector<16xf32>
    %143 = vector.multi_reduction <maximumf>, %142, %cst_67 [1] : vector<16x16xf32> to vector<16xf32>
    %144 = vector.shape_cast %143 : vector<16xf32> to vector<16x1xf32>
    %145 = vector.broadcast %144 : vector<16x1xf32> to vector<16x16xf32>
    %146 = arith.subf %142, %145 : vector<16x16xf32>
    %147 = math.exp %146 : vector<16x16xf32>
    %148 = arith.mulf %147, %38 : vector<16x16xf32>
    %cst_68 = arith.constant dense<0.000000e+00> : vector<16xf32>
    %149 = vector.multi_reduction <add>, %148, %cst_68 [1] : vector<16x16xf32> to vector<16xf32>
    %150 = vector.shape_cast %149 : vector<16xf32> to vector<16x1xf32>
    %cst_69 = arith.constant 1.000000e+00 : f32
    %151 = vector.broadcast %cst_69 : f32 to vector<16x1xf32>
    %152 = arith.divf %151, %150 : vector<16x1xf32>
    %153 = vector.broadcast %152 : vector<16x1xf32> to vector<16x16xf32>
    %154 = arith.mulf %148, %153 : vector<16x16xf32>
    %cst_70 = arith.constant dense<0.000000e+00> : vector<16xf32>
    %155 = vector.multi_reduction <add>, %154, %cst_70 [0] : vector<16x16xf32> to vector<16xf32>
    %156 = vector.shape_cast %155 : vector<16xf32> to vector<1x16xf32>
    %cst_71 = arith.constant 9.99999971E-10 : f32
    %157 = vector.broadcast %cst_71 : f32 to vector<1x16xf32>
    %158 = arith.addf %157, %156 : vector<1x16xf32>
    %cst_72 = arith.constant 1.000000e+00 : f32
    %159 = vector.broadcast %cst_72 : f32 to vector<1x16xf32>
    %160 = arith.divf %159, %158 : vector<1x16xf32>
    %161 = vector.broadcast %160 : vector<1x16xf32> to vector<16x16xf32>
    %162 = arith.mulf %154, %161 : vector<16x16xf32>
    %cst_73 = arith.constant dense<0.000000e+00> : vector<16x32xf32>
    %163 = tpu.matmul %162, %141, %cst_73 {dimension_numbers = #tpu.dot_dimension_numbers<[1], [0], [0], [1], [0, 0, 1, 1], [], []>} : vector<16x16xf32>, vector<16x32xf32>, vector<16x32xf32> -> vector<16x32xf32>
    %164 = arith.subf %0, %163 : vector<16x32xf32>
    %cst_74 = arith.constant dense<0.000000e+00> : vector<16x32xf32>
    %165 = tpu.matmul %164, %78, %cst_74 {dimension_numbers = #tpu.dot_dimension_numbers<[1], [0], [0], [1], [0, 0, 1, 1], [], []>} : vector<16x32xf32>, vector<32x32xf32>, vector<16x32xf32> -> vector<16x32xf32>
    %cst_75 = arith.constant 0.000000e+00 : f32
    %166 = vector.broadcast %cst_75 : f32 to vector<16x32xf32>
    %167 = arith.maximumf %165, %166 : vector<16x32xf32>
    %cst_76 = arith.constant dense<0.000000e+00> : vector<16x16xf32>
    %168 = tpu.matmul %167, %79, %cst_76 {dimension_numbers = #tpu.dot_dimension_numbers<[1], [0], [0], [1], [0, 0, 1, 1], [], []>} : vector<16x32xf32>, vector<32x16xf32>, vector<16x16xf32> -> vector<16x16xf32>
    %169 = arith.addf %168, %82 : vector<16x16xf32>
    %cst_77 = arith.constant 0.000000e+00 : f32
    %170 = vector.broadcast %cst_77 : f32 to vector<16x16xf32>
    %171 = arith.maximumf %169, %170 : vector<16x16xf32>
    %cst_78 = arith.constant dense<0.000000e+00> : vector<16x32xf32>
    %172 = tpu.matmul %171, %83, %cst_78 {dimension_numbers = #tpu.dot_dimension_numbers<[1], [0], [0], [1], [0, 0, 1, 1], [], []>} : vector<16x16xf32>, vector<16x32xf32>, vector<16x32xf32> -> vector<16x32xf32>
    %173 = arith.addf %167, %172 : vector<16x32xf32>
    %174 = arith.addf %173, %86 : vector<16x32xf32>
    %cst_79 = arith.constant dense<0.000000e+00> : vector<16xf32>
    %175 = vector.multi_reduction <add>, %174, %cst_79 [1] : vector<16x32xf32> to vector<16xf32>
    %176 = vector.shape_cast %175 : vector<16xf32> to vector<16x1xf32>
    %cst_80 = arith.constant 3.200000e+01 : f32
    %177 = vector.broadcast %cst_80 : f32 to vector<16x1xf32>
    %178 = arith.divf %176, %177 : vector<16x1xf32>
    %179 = vector.broadcast %178 : vector<16x1xf32> to vector<16x32xf32>
    %180 = arith.subf %174, %179 : vector<16x32xf32>
    %181 = arith.mulf %180, %180 : vector<16x32xf32>
    %cst_81 = arith.constant dense<0.000000e+00> : vector<16xf32>
    %182 = vector.multi_reduction <add>, %181, %cst_81 [1] : vector<16x32xf32> to vector<16xf32>
    %183 = vector.shape_cast %182 : vector<16xf32> to vector<16x1xf32>
    %cst_82 = arith.constant 3.200000e+01 : f32
    %184 = vector.broadcast %cst_82 : f32 to vector<16x1xf32>
    %185 = arith.divf %183, %184 : vector<16x1xf32>
    %186 = vector.broadcast %178 : vector<16x1xf32> to vector<16x32xf32>
    %187 = arith.subf %174, %186 : vector<16x32xf32>
    %cst_83 = arith.constant 9.99999974E-6 : f32
    %188 = vector.broadcast %cst_83 : f32 to vector<16x1xf32>
    %189 = arith.addf %185, %188 : vector<16x1xf32>
    %190 = math.rsqrt %189 : vector<16x1xf32>
    %191 = vector.broadcast %190 : vector<16x1xf32> to vector<16x32xf32>
    %192 = arith.mulf %187, %191 : vector<16x32xf32>
    %193 = arith.mulf %192, %89 : vector<16x32xf32>
    %194 = arith.addf %193, %92 : vector<16x32xf32>
    %195 = arith.addf %0, %194 : vector<16x32xf32>
    %cst_84 = arith.constant dense<0.000000e+00> : vector<16x32xf32>
    %196 = tpu.matmul %40, %195, %cst_84 {dimension_numbers = #tpu.dot_dimension_numbers<[1], [0], [0], [1], [0, 0, 1, 1], [], []>} : vector<16x16xf32>, vector<16x32xf32>, vector<16x32xf32> -> vector<16x32xf32>
    %197 = arith.subf %195, %196 : vector<16x32xf32>
    %198 = arith.mulf %197, %197 : vector<16x32xf32>
    %cst_85 = arith.constant dense<0.000000e+00> : vector<16x32xf32>
    %199 = tpu.matmul %40, %198, %cst_85 {dimension_numbers = #tpu.dot_dimension_numbers<[1], [0], [0], [1], [0, 0, 1, 1], [], []>} : vector<16x16xf32>, vector<16x32xf32>, vector<16x32xf32> -> vector<16x32xf32>
    %cst_86 = arith.constant 9.99999974E-6 : f32
    %200 = vector.broadcast %cst_86 : f32 to vector<16x32xf32>
    %201 = arith.addf %199, %200 : vector<16x32xf32>
    %202 = math.rsqrt %201 : vector<16x32xf32>
    %203 = arith.mulf %197, %202 : vector<16x32xf32>
    %cst_87 = arith.constant 0.000000e+00 : f32
    %204 = vector.broadcast %cst_87 : f32 to vector<16x32xf32>
    %205 = arith.maximumf %203, %204 : vector<16x32xf32>
    %cst_88 = arith.constant dense<0.000000e+00> : vector<16x16xf32>
    %206 = tpu.matmul %205, %109, %cst_88 {dimension_numbers = #tpu.dot_dimension_numbers<[1], [0], [0], [1], [0, 0, 1, 1], [], []>} : vector<16x32xf32>, vector<32x16xf32>, vector<16x16xf32> -> vector<16x16xf32>
    %207 = arith.mulf %206, %206 : vector<16x16xf32>
    %cst_89 = arith.constant dense<0.000000e+00> : vector<16xf32>
    %208 = vector.multi_reduction <add>, %207, %cst_89 [1] : vector<16x16xf32> to vector<16xf32>
    %209 = vector.shape_cast %208 : vector<16xf32> to vector<16x1xf32>
    %cst_90 = arith.constant 1.000000e-24 : f32
    %210 = vector.broadcast %cst_90 : f32 to vector<16x1xf32>
    %211 = arith.maximumf %209, %210 : vector<16x1xf32>
    %212 = math.rsqrt %211 : vector<16x1xf32>
    %213 = vector.broadcast %212 : vector<16x1xf32> to vector<16x16xf32>
    %214 = arith.mulf %206, %213 : vector<16x16xf32>
    %cst_91 = arith.constant dense<0.000000e+00> : vector<16x32xf32>
    %215 = tpu.matmul %214, %120, %cst_91 {dimension_numbers = #tpu.dot_dimension_numbers<[1], [1], [0], [0], [0, 0, 1, 0], [], []>} : vector<16x16xf32>, vector<32x16xf32>, vector<16x32xf32> -> vector<16x32xf32>
    %cst_92 = arith.constant dense<0xFF800000> : vector<16xf32>
    %216 = vector.multi_reduction <maximumf>, %215, %cst_92 [1] : vector<16x32xf32> to vector<16xf32>
    %217 = vector.shape_cast %216 : vector<16xf32> to vector<16x1xf32>
    %218 = vector.broadcast %217 : vector<16x1xf32> to vector<16x32xf32>
    %219 = arith.subf %215, %218 : vector<16x32xf32>
    %220 = math.exp %219 : vector<16x32xf32>
    %221 = arith.mulf %220, %77 : vector<16x32xf32>
    %cst_93 = arith.constant dense<0.000000e+00> : vector<16xf32>
    %222 = vector.multi_reduction <add>, %221, %cst_93 [1] : vector<16x32xf32> to vector<16xf32>
    %223 = vector.shape_cast %222 : vector<16xf32> to vector<16x1xf32>
    %cst_94 = arith.constant 1.000000e+00 : f32
    %224 = vector.broadcast %cst_94 : f32 to vector<16x1xf32>
    %225 = arith.divf %224, %223 : vector<16x1xf32>
    %226 = vector.broadcast %225 : vector<16x1xf32> to vector<16x32xf32>
    %227 = arith.mulf %221, %226 : vector<16x32xf32>
    %cst_95 = arith.constant dense<0.000000e+00> : vector<32xf32>
    %228 = vector.multi_reduction <add>, %227, %cst_95 [0] : vector<16x32xf32> to vector<32xf32>
    %229 = vector.shape_cast %228 : vector<32xf32> to vector<1x32xf32>
    %cst_96 = arith.constant 9.99999971E-10 : f32
    %230 = vector.broadcast %cst_96 : f32 to vector<1x32xf32>
    %231 = arith.addf %230, %229 : vector<1x32xf32>
    %cst_97 = arith.constant 1.000000e+00 : f32
    %232 = vector.broadcast %cst_97 : f32 to vector<1x32xf32>
    %233 = arith.divf %232, %231 : vector<1x32xf32>
    %234 = vector.broadcast %233 : vector<1x32xf32> to vector<16x32xf32>
    %235 = arith.mulf %227, %234 : vector<16x32xf32>
    %cst_98 = arith.constant dense<0.000000e+00> : vector<16x32xf32>
    %236 = tpu.matmul %235, %121, %cst_98 {dimension_numbers = #tpu.dot_dimension_numbers<[1], [0], [0], [1], [0, 0, 1, 1], [], []>} : vector<16x32xf32>, vector<32x32xf32>, vector<16x32xf32> -> vector<16x32xf32>
    %237 = arith.subf %205, %236 : vector<16x32xf32>
    %cst_99 = arith.constant dense<0.000000e+00> : vector<16x32xf32>
    %238 = tpu.matmul %237, %93, %cst_99 {dimension_numbers = #tpu.dot_dimension_numbers<[1], [0], [0], [1], [0, 0, 1, 1], [], []>} : vector<16x32xf32>, vector<32x32xf32>, vector<16x32xf32> -> vector<16x32xf32>
    %cst_100 = arith.constant 0.000000e+00 : f32
    %239 = vector.broadcast %cst_100 : f32 to vector<16x32xf32>
    %240 = arith.maximumf %238, %239 : vector<16x32xf32>
    %cst_101 = arith.constant dense<0.000000e+00> : vector<16x16xf32>
    %241 = tpu.matmul %240, %94, %cst_101 {dimension_numbers = #tpu.dot_dimension_numbers<[1], [0], [0], [1], [0, 0, 1, 1], [], []>} : vector<16x32xf32>, vector<32x16xf32>, vector<16x16xf32> -> vector<16x16xf32>
    %242 = arith.addf %241, %97 : vector<16x16xf32>
    %cst_102 = arith.constant 0.000000e+00 : f32
    %243 = vector.broadcast %cst_102 : f32 to vector<16x16xf32>
    %244 = arith.maximumf %242, %243 : vector<16x16xf32>
    %cst_103 = arith.constant dense<0.000000e+00> : vector<16x32xf32>
    %245 = tpu.matmul %244, %98, %cst_103 {dimension_numbers = #tpu.dot_dimension_numbers<[1], [0], [0], [1], [0, 0, 1, 1], [], []>} : vector<16x16xf32>, vector<16x32xf32>, vector<16x32xf32> -> vector<16x32xf32>
    %246 = arith.addf %240, %245 : vector<16x32xf32>
    %247 = arith.addf %246, %101 : vector<16x32xf32>
    %cst_104 = arith.constant dense<0.000000e+00> : vector<16xf32>
    %248 = vector.multi_reduction <add>, %247, %cst_104 [1] : vector<16x32xf32> to vector<16xf32>
    %249 = vector.shape_cast %248 : vector<16xf32> to vector<16x1xf32>
    %cst_105 = arith.constant 3.200000e+01 : f32
    %250 = vector.broadcast %cst_105 : f32 to vector<16x1xf32>
    %251 = arith.divf %249, %250 : vector<16x1xf32>
    %252 = vector.broadcast %251 : vector<16x1xf32> to vector<16x32xf32>
    %253 = arith.subf %247, %252 : vector<16x32xf32>
    %254 = arith.mulf %253, %253 : vector<16x32xf32>
    %cst_106 = arith.constant dense<0.000000e+00> : vector<16xf32>
    %255 = vector.multi_reduction <add>, %254, %cst_106 [1] : vector<16x32xf32> to vector<16xf32>
    %256 = vector.shape_cast %255 : vector<16xf32> to vector<16x1xf32>
    %cst_107 = arith.constant 3.200000e+01 : f32
    %257 = vector.broadcast %cst_107 : f32 to vector<16x1xf32>
    %258 = arith.divf %256, %257 : vector<16x1xf32>
    %259 = vector.broadcast %251 : vector<16x1xf32> to vector<16x32xf32>
    %260 = arith.subf %247, %259 : vector<16x32xf32>
    %cst_108 = arith.constant 9.99999974E-6 : f32
    %261 = vector.broadcast %cst_108 : f32 to vector<16x1xf32>
    %262 = arith.addf %258, %261 : vector<16x1xf32>
    %263 = math.rsqrt %262 : vector<16x1xf32>
    %264 = vector.broadcast %263 : vector<16x1xf32> to vector<16x32xf32>
    %265 = arith.mulf %260, %264 : vector<16x32xf32>
    %266 = arith.mulf %265, %104 : vector<16x32xf32>
    %267 = arith.addf %266, %107 : vector<16x32xf32>
    %268 = arith.addf %205, %267 : vector<16x32xf32>
    %cst_109 = arith.constant dense<0.000000e+00> : vector<16x32xf32>
    %269 = tpu.matmul %40, %268, %cst_109 {dimension_numbers = #tpu.dot_dimension_numbers<[1], [0], [0], [1], [0, 0, 1, 1], [], []>} : vector<16x16xf32>, vector<16x32xf32>, vector<16x32xf32> -> vector<16x32xf32>
    %270 = arith.subf %268, %269 : vector<16x32xf32>
    %271 = arith.mulf %270, %270 : vector<16x32xf32>
    %cst_110 = arith.constant dense<0.000000e+00> : vector<16x32xf32>
    %272 = tpu.matmul %40, %271, %cst_110 {dimension_numbers = #tpu.dot_dimension_numbers<[1], [0], [0], [1], [0, 0, 1, 1], [], []>} : vector<16x16xf32>, vector<16x32xf32>, vector<16x32xf32> -> vector<16x32xf32>
    %cst_111 = arith.constant 9.99999974E-6 : f32
    %273 = vector.broadcast %cst_111 : f32 to vector<16x32xf32>
    %274 = arith.addf %272, %273 : vector<16x32xf32>
    %275 = math.rsqrt %274 : vector<16x32xf32>
    %276 = arith.mulf %270, %275 : vector<16x32xf32>
    %cst_112 = arith.constant 0.000000e+00 : f32
    %277 = vector.broadcast %cst_112 : f32 to vector<16x32xf32>
    %278 = arith.maximumf %276, %277 : vector<16x32xf32>
    %cst_113 = arith.constant dense<0.000000e+00> : vector<16x64xf32>
    %279 = tpu.matmul %278, %108, %cst_113 {dimension_numbers = #tpu.dot_dimension_numbers<[1], [0], [0], [1], [0, 0, 1, 1], [], []>} : vector<16x32xf32>, vector<32x64xf32>, vector<16x64xf32> -> vector<16x64xf32>
    %280 = vector.extract_strided_slice %279 {offsets = [0, 0], sizes = [16, 16], strides = [1, 1]} : vector<16x64xf32> to vector<16x16xf32>
    %281 = arith.mulf %280, %280 : vector<16x16xf32>
    %cst_114 = arith.constant dense<0.000000e+00> : vector<16xf32>
    %282 = vector.multi_reduction <add>, %281, %cst_114 [1] : vector<16x16xf32> to vector<16xf32>
    %283 = vector.shape_cast %282 : vector<16xf32> to vector<16x1xf32>
    %cst_115 = arith.constant 1.000000e-24 : f32
    %284 = vector.broadcast %cst_115 : f32 to vector<16x1xf32>
    %285 = arith.maximumf %283, %284 : vector<16x1xf32>
    %286 = math.rsqrt %285 : vector<16x1xf32>
    %287 = vector.broadcast %286 : vector<16x1xf32> to vector<16x16xf32>
    %288 = arith.mulf %280, %287 : vector<16x16xf32>
    %289 = vector.extract_strided_slice %279 {offsets = [0, 16], sizes = [16, 16], strides = [1, 1]} : vector<16x64xf32> to vector<16x16xf32>
    %290 = arith.mulf %289, %289 : vector<16x16xf32>
    %cst_116 = arith.constant dense<0.000000e+00> : vector<16xf32>
    %291 = vector.multi_reduction <add>, %290, %cst_116 [1] : vector<16x16xf32> to vector<16xf32>
    %292 = vector.shape_cast %291 : vector<16xf32> to vector<16x1xf32>
    %cst_117 = arith.constant 1.000000e-24 : f32
    %293 = vector.broadcast %cst_117 : f32 to vector<16x1xf32>
    %294 = arith.maximumf %292, %293 : vector<16x1xf32>
    %295 = math.rsqrt %294 : vector<16x1xf32>
    %296 = vector.broadcast %295 : vector<16x1xf32> to vector<16x16xf32>
    %297 = arith.mulf %289, %296 : vector<16x16xf32>
    %298 = vector.extract_strided_slice %279 {offsets = [0, 32], sizes = [16, 32], strides = [1, 1]} : vector<16x64xf32> to vector<16x32xf32>
    %cst_118 = arith.constant dense<0.000000e+00> : vector<16x16xf32>
    %299 = tpu.matmul %288, %297, %cst_118 {dimension_numbers = #tpu.dot_dimension_numbers<[1], [1], [0], [0], [0, 0, 1, 0], [], []>} : vector<16x16xf32>, vector<16x16xf32>, vector<16x16xf32> -> vector<16x16xf32>
    %cst_119 = arith.constant dense<0xFF800000> : vector<16xf32>
    %300 = vector.multi_reduction <maximumf>, %299, %cst_119 [1] : vector<16x16xf32> to vector<16xf32>
    %301 = vector.shape_cast %300 : vector<16xf32> to vector<16x1xf32>
    %302 = vector.broadcast %301 : vector<16x1xf32> to vector<16x16xf32>
    %303 = arith.subf %299, %302 : vector<16x16xf32>
    %304 = math.exp %303 : vector<16x16xf32>
    %305 = arith.mulf %304, %38 : vector<16x16xf32>
    %cst_120 = arith.constant dense<0.000000e+00> : vector<16xf32>
    %306 = vector.multi_reduction <add>, %305, %cst_120 [1] : vector<16x16xf32> to vector<16xf32>
    %307 = vector.shape_cast %306 : vector<16xf32> to vector<16x1xf32>
    %cst_121 = arith.constant 1.000000e+00 : f32
    %308 = vector.broadcast %cst_121 : f32 to vector<16x1xf32>
    %309 = arith.divf %308, %307 : vector<16x1xf32>
    %310 = vector.broadcast %309 : vector<16x1xf32> to vector<16x16xf32>
    %311 = arith.mulf %305, %310 : vector<16x16xf32>
    %cst_122 = arith.constant dense<0.000000e+00> : vector<16xf32>
    %312 = vector.multi_reduction <add>, %311, %cst_122 [0] : vector<16x16xf32> to vector<16xf32>
    %313 = vector.shape_cast %312 : vector<16xf32> to vector<1x16xf32>
    %cst_123 = arith.constant 9.99999971E-10 : f32
    %314 = vector.broadcast %cst_123 : f32 to vector<1x16xf32>
    %315 = arith.addf %314, %313 : vector<1x16xf32>
    %cst_124 = arith.constant 1.000000e+00 : f32
    %316 = vector.broadcast %cst_124 : f32 to vector<1x16xf32>
    %317 = arith.divf %316, %315 : vector<1x16xf32>
    %318 = vector.broadcast %317 : vector<1x16xf32> to vector<16x16xf32>
    %319 = arith.mulf %311, %318 : vector<16x16xf32>
    %cst_125 = arith.constant dense<0.000000e+00> : vector<16x32xf32>
    %320 = tpu.matmul %319, %298, %cst_125 {dimension_numbers = #tpu.dot_dimension_numbers<[1], [0], [0], [1], [0, 0, 1, 1], [], []>} : vector<16x16xf32>, vector<16x32xf32>, vector<16x32xf32> -> vector<16x32xf32>
    %321 = arith.subf %278, %320 : vector<16x32xf32>
    %cst_126 = arith.constant dense<0.000000e+00> : vector<16x32xf32>
    %322 = tpu.matmul %321, %78, %cst_126 {dimension_numbers = #tpu.dot_dimension_numbers<[1], [0], [0], [1], [0, 0, 1, 1], [], []>} : vector<16x32xf32>, vector<32x32xf32>, vector<16x32xf32> -> vector<16x32xf32>
    %cst_127 = arith.constant 0.000000e+00 : f32
    %323 = vector.broadcast %cst_127 : f32 to vector<16x32xf32>
    %324 = arith.maximumf %322, %323 : vector<16x32xf32>
    %cst_128 = arith.constant dense<0.000000e+00> : vector<16x16xf32>
    %325 = tpu.matmul %324, %79, %cst_128 {dimension_numbers = #tpu.dot_dimension_numbers<[1], [0], [0], [1], [0, 0, 1, 1], [], []>} : vector<16x32xf32>, vector<32x16xf32>, vector<16x16xf32> -> vector<16x16xf32>
    %326 = arith.addf %325, %82 : vector<16x16xf32>
    %cst_129 = arith.constant 0.000000e+00 : f32
    %327 = vector.broadcast %cst_129 : f32 to vector<16x16xf32>
    %328 = arith.maximumf %326, %327 : vector<16x16xf32>
    %cst_130 = arith.constant dense<0.000000e+00> : vector<16x32xf32>
    %329 = tpu.matmul %328, %83, %cst_130 {dimension_numbers = #tpu.dot_dimension_numbers<[1], [0], [0], [1], [0, 0, 1, 1], [], []>} : vector<16x16xf32>, vector<16x32xf32>, vector<16x32xf32> -> vector<16x32xf32>
    %330 = arith.addf %324, %329 : vector<16x32xf32>
    %331 = arith.addf %330, %86 : vector<16x32xf32>
    %cst_131 = arith.constant dense<0.000000e+00> : vector<16xf32>
    %332 = vector.multi_reduction <add>, %331, %cst_131 [1] : vector<16x32xf32> to vector<16xf32>
    %333 = vector.shape_cast %332 : vector<16xf32> to vector<16x1xf32>
    %cst_132 = arith.constant 3.200000e+01 : f32
    %334 = vector.broadcast %cst_132 : f32 to vector<16x1xf32>
    %335 = arith.divf %333, %334 : vector<16x1xf32>
    %336 = vector.broadcast %335 : vector<16x1xf32> to vector<16x32xf32>
    %337 = arith.subf %331, %336 : vector<16x32xf32>
    %338 = arith.mulf %337, %337 : vector<16x32xf32>
    %cst_133 = arith.constant dense<0.000000e+00> : vector<16xf32>
    %339 = vector.multi_reduction <add>, %338, %cst_133 [1] : vector<16x32xf32> to vector<16xf32>
    %340 = vector.shape_cast %339 : vector<16xf32> to vector<16x1xf32>
    %cst_134 = arith.constant 3.200000e+01 : f32
    %341 = vector.broadcast %cst_134 : f32 to vector<16x1xf32>
    %342 = arith.divf %340, %341 : vector<16x1xf32>
    %343 = vector.broadcast %335 : vector<16x1xf32> to vector<16x32xf32>
    %344 = arith.subf %331, %343 : vector<16x32xf32>
    %cst_135 = arith.constant 9.99999974E-6 : f32
    %345 = vector.broadcast %cst_135 : f32 to vector<16x1xf32>
    %346 = arith.addf %342, %345 : vector<16x1xf32>
    %347 = math.rsqrt %346 : vector<16x1xf32>
    %348 = vector.broadcast %347 : vector<16x1xf32> to vector<16x32xf32>
    %349 = arith.mulf %344, %348 : vector<16x32xf32>
    %350 = arith.mulf %349, %89 : vector<16x32xf32>
    %351 = arith.addf %350, %92 : vector<16x32xf32>
    %352 = arith.addf %278, %351 : vector<16x32xf32>
    %cst_136 = arith.constant dense<0.000000e+00> : vector<16x32xf32>
    %353 = tpu.matmul %40, %352, %cst_136 {dimension_numbers = #tpu.dot_dimension_numbers<[1], [0], [0], [1], [0, 0, 1, 1], [], []>} : vector<16x16xf32>, vector<16x32xf32>, vector<16x32xf32> -> vector<16x32xf32>
    %354 = arith.subf %352, %353 : vector<16x32xf32>
    %355 = arith.mulf %354, %354 : vector<16x32xf32>
    %cst_137 = arith.constant dense<0.000000e+00> : vector<16x32xf32>
    %356 = tpu.matmul %40, %355, %cst_137 {dimension_numbers = #tpu.dot_dimension_numbers<[1], [0], [0], [1], [0, 0, 1, 1], [], []>} : vector<16x16xf32>, vector<16x32xf32>, vector<16x32xf32> -> vector<16x32xf32>
    %cst_138 = arith.constant 9.99999974E-6 : f32
    %357 = vector.broadcast %cst_138 : f32 to vector<16x32xf32>
    %358 = arith.addf %356, %357 : vector<16x32xf32>
    %359 = math.rsqrt %358 : vector<16x32xf32>
    %360 = arith.mulf %354, %359 : vector<16x32xf32>
    %cst_139 = arith.constant 0.000000e+00 : f32
    %361 = vector.broadcast %cst_139 : f32 to vector<16x32xf32>
    %362 = arith.maximumf %360, %361 : vector<16x32xf32>
    %cst_140 = arith.constant dense<0.000000e+00> : vector<16x16xf32>
    %363 = tpu.matmul %362, %109, %cst_140 {dimension_numbers = #tpu.dot_dimension_numbers<[1], [0], [0], [1], [0, 0, 1, 1], [], []>} : vector<16x32xf32>, vector<32x16xf32>, vector<16x16xf32> -> vector<16x16xf32>
    %364 = arith.mulf %363, %363 : vector<16x16xf32>
    %cst_141 = arith.constant dense<0.000000e+00> : vector<16xf32>
    %365 = vector.multi_reduction <add>, %364, %cst_141 [1] : vector<16x16xf32> to vector<16xf32>
    %366 = vector.shape_cast %365 : vector<16xf32> to vector<16x1xf32>
    %cst_142 = arith.constant 1.000000e-24 : f32
    %367 = vector.broadcast %cst_142 : f32 to vector<16x1xf32>
    %368 = arith.maximumf %366, %367 : vector<16x1xf32>
    %369 = math.rsqrt %368 : vector<16x1xf32>
    %370 = vector.broadcast %369 : vector<16x1xf32> to vector<16x16xf32>
    %371 = arith.mulf %363, %370 : vector<16x16xf32>
    %cst_143 = arith.constant dense<0.000000e+00> : vector<16x32xf32>
    %372 = tpu.matmul %371, %120, %cst_143 {dimension_numbers = #tpu.dot_dimension_numbers<[1], [1], [0], [0], [0, 0, 1, 0], [], []>} : vector<16x16xf32>, vector<32x16xf32>, vector<16x32xf32> -> vector<16x32xf32>
    %cst_144 = arith.constant dense<0xFF800000> : vector<16xf32>
    %373 = vector.multi_reduction <maximumf>, %372, %cst_144 [1] : vector<16x32xf32> to vector<16xf32>
    %374 = vector.shape_cast %373 : vector<16xf32> to vector<16x1xf32>
    %375 = vector.broadcast %374 : vector<16x1xf32> to vector<16x32xf32>
    %376 = arith.subf %372, %375 : vector<16x32xf32>
    %377 = math.exp %376 : vector<16x32xf32>
    %378 = arith.mulf %377, %77 : vector<16x32xf32>
    %cst_145 = arith.constant dense<0.000000e+00> : vector<16xf32>
    %379 = vector.multi_reduction <add>, %378, %cst_145 [1] : vector<16x32xf32> to vector<16xf32>
    %380 = vector.shape_cast %379 : vector<16xf32> to vector<16x1xf32>
    %cst_146 = arith.constant 1.000000e+00 : f32
    %381 = vector.broadcast %cst_146 : f32 to vector<16x1xf32>
    %382 = arith.divf %381, %380 : vector<16x1xf32>
    %383 = vector.broadcast %382 : vector<16x1xf32> to vector<16x32xf32>
    %384 = arith.mulf %378, %383 : vector<16x32xf32>
    %cst_147 = arith.constant dense<0.000000e+00> : vector<32xf32>
    %385 = vector.multi_reduction <add>, %384, %cst_147 [0] : vector<16x32xf32> to vector<32xf32>
    %386 = vector.shape_cast %385 : vector<32xf32> to vector<1x32xf32>
    %cst_148 = arith.constant 9.99999971E-10 : f32
    %387 = vector.broadcast %cst_148 : f32 to vector<1x32xf32>
    %388 = arith.addf %387, %386 : vector<1x32xf32>
    %cst_149 = arith.constant 1.000000e+00 : f32
    %389 = vector.broadcast %cst_149 : f32 to vector<1x32xf32>
    %390 = arith.divf %389, %388 : vector<1x32xf32>
    %391 = vector.broadcast %390 : vector<1x32xf32> to vector<16x32xf32>
    %392 = arith.mulf %384, %391 : vector<16x32xf32>
    %cst_150 = arith.constant dense<0.000000e+00> : vector<16x32xf32>
    %393 = tpu.matmul %392, %121, %cst_150 {dimension_numbers = #tpu.dot_dimension_numbers<[1], [0], [0], [1], [0, 0, 1, 1], [], []>} : vector<16x32xf32>, vector<32x32xf32>, vector<16x32xf32> -> vector<16x32xf32>
    %394 = arith.subf %362, %393 : vector<16x32xf32>
    %cst_151 = arith.constant dense<0.000000e+00> : vector<16x32xf32>
    %395 = tpu.matmul %394, %93, %cst_151 {dimension_numbers = #tpu.dot_dimension_numbers<[1], [0], [0], [1], [0, 0, 1, 1], [], []>} : vector<16x32xf32>, vector<32x32xf32>, vector<16x32xf32> -> vector<16x32xf32>
    %cst_152 = arith.constant 0.000000e+00 : f32
    %396 = vector.broadcast %cst_152 : f32 to vector<16x32xf32>
    %397 = arith.maximumf %395, %396 : vector<16x32xf32>
    %cst_153 = arith.constant dense<0.000000e+00> : vector<16x16xf32>
    %398 = tpu.matmul %397, %94, %cst_153 {dimension_numbers = #tpu.dot_dimension_numbers<[1], [0], [0], [1], [0, 0, 1, 1], [], []>} : vector<16x32xf32>, vector<32x16xf32>, vector<16x16xf32> -> vector<16x16xf32>
    %399 = arith.addf %398, %97 : vector<16x16xf32>
    %cst_154 = arith.constant 0.000000e+00 : f32
    %400 = vector.broadcast %cst_154 : f32 to vector<16x16xf32>
    %401 = arith.maximumf %399, %400 : vector<16x16xf32>
    %cst_155 = arith.constant dense<0.000000e+00> : vector<16x32xf32>
    %402 = tpu.matmul %401, %98, %cst_155 {dimension_numbers = #tpu.dot_dimension_numbers<[1], [0], [0], [1], [0, 0, 1, 1], [], []>} : vector<16x16xf32>, vector<16x32xf32>, vector<16x32xf32> -> vector<16x32xf32>
    %403 = arith.addf %397, %402 : vector<16x32xf32>
    %404 = arith.addf %403, %101 : vector<16x32xf32>
    %cst_156 = arith.constant dense<0.000000e+00> : vector<16xf32>
    %405 = vector.multi_reduction <add>, %404, %cst_156 [1] : vector<16x32xf32> to vector<16xf32>
    %406 = vector.shape_cast %405 : vector<16xf32> to vector<16x1xf32>
    %cst_157 = arith.constant 3.200000e+01 : f32
    %407 = vector.broadcast %cst_157 : f32 to vector<16x1xf32>
    %408 = arith.divf %406, %407 : vector<16x1xf32>
    %409 = vector.broadcast %408 : vector<16x1xf32> to vector<16x32xf32>
    %410 = arith.subf %404, %409 : vector<16x32xf32>
    %411 = arith.mulf %410, %410 : vector<16x32xf32>
    %cst_158 = arith.constant dense<0.000000e+00> : vector<16xf32>
    %412 = vector.multi_reduction <add>, %411, %cst_158 [1] : vector<16x32xf32> to vector<16xf32>
    %413 = vector.shape_cast %412 : vector<16xf32> to vector<16x1xf32>
    %cst_159 = arith.constant 3.200000e+01 : f32
    %414 = vector.broadcast %cst_159 : f32 to vector<16x1xf32>
    %415 = arith.divf %413, %414 : vector<16x1xf32>
    %416 = vector.broadcast %408 : vector<16x1xf32> to vector<16x32xf32>
    %417 = arith.subf %404, %416 : vector<16x32xf32>
    %cst_160 = arith.constant 9.99999974E-6 : f32
    %418 = vector.broadcast %cst_160 : f32 to vector<16x1xf32>
    %419 = arith.addf %415, %418 : vector<16x1xf32>
    %420 = math.rsqrt %419 : vector<16x1xf32>
    %421 = vector.broadcast %420 : vector<16x1xf32> to vector<16x32xf32>
    %422 = arith.mulf %417, %421 : vector<16x32xf32>
    %423 = arith.mulf %422, %104 : vector<16x32xf32>
    %424 = arith.addf %423, %107 : vector<16x32xf32>
    %425 = arith.addf %362, %424 : vector<16x32xf32>
    %cst_161 = arith.constant dense<0.000000e+00> : vector<16x32xf32>
    %426 = tpu.matmul %40, %425, %cst_161 {dimension_numbers = #tpu.dot_dimension_numbers<[1], [0], [0], [1], [0, 0, 1, 1], [], []>} : vector<16x16xf32>, vector<16x32xf32>, vector<16x32xf32> -> vector<16x32xf32>
    %427 = arith.subf %425, %426 : vector<16x32xf32>
    %428 = arith.mulf %427, %427 : vector<16x32xf32>
    %cst_162 = arith.constant dense<0.000000e+00> : vector<16x32xf32>
    %429 = tpu.matmul %40, %428, %cst_162 {dimension_numbers = #tpu.dot_dimension_numbers<[1], [0], [0], [1], [0, 0, 1, 1], [], []>} : vector<16x16xf32>, vector<16x32xf32>, vector<16x32xf32> -> vector<16x32xf32>
    %cst_163 = arith.constant 9.99999974E-6 : f32
    %430 = vector.broadcast %cst_163 : f32 to vector<16x32xf32>
    %431 = arith.addf %429, %430 : vector<16x32xf32>
    %432 = math.rsqrt %431 : vector<16x32xf32>
    %433 = arith.mulf %427, %432 : vector<16x32xf32>
    %cst_164 = arith.constant 0.000000e+00 : f32
    %434 = vector.broadcast %cst_164 : f32 to vector<16x32xf32>
    %435 = arith.maximumf %433, %434 : vector<16x32xf32>
    %c0_165 = arith.constant 0 : index
    %c0_166 = arith.constant 0 : index
    %436 = vector.load %arg19[%c0_165, %c0_166] : memref<16x32xf32, #tpu.memory_space<vmem>>, vector<16x32xf32>
    tpu.vector_store %arg19[%c0_165, %c0_166], %435 {strides = array<i32>} : memref<16x32xf32, #tpu.memory_space<vmem>>, vector<16x32xf32>,
    return
  }
}

</mosaic_0001>

<llo_original>
// kernel: transformer_decoder.1
$region0: #{transformer_decoder.1}
  #allocation0 [shape = 'u32[]', space=smem, size = 0x4, offset = 0x4, fixed_abs, tag = 'smem constant byte address 0x4 - core index']
  #allocation1 [shape = 'u32[144,128]{1,0:T(1,128)}', space=vmem, size = 0x12000, scoped, tag = 'internal scratch']
  %s0 = inlined_call_operand.vmem [shape: f32[16,32], index: 0, kind: input, shape index: {}]
  %s1 = inlined_call_operand.vmem [shape: f32[32,32], index: 1, kind: input, shape index: {}]
  %s2 = inlined_call_operand.vmem [shape: f32[32,64], index: 2, kind: input, shape index: {}]
  %s3 = inlined_call_operand.vmem [shape: f32[32,32], index: 3, kind: input, shape index: {}]
  %s4 = inlined_call_operand.vmem [shape: f32[32,16], index: 4, kind: input, shape index: {}]
  %s5 = inlined_call_operand.vmem [shape: f32[1,16], index: 5, kind: input, shape index: {}]
  %s6 = inlined_call_operand.vmem [shape: f32[16,32], index: 6, kind: input, shape index: {}]
  %s7 = inlined_call_operand.vmem [shape: f32[1,32], index: 7, kind: input, shape index: {}]
  %s8 = inlined_call_operand.vmem [shape: f32[1,32], index: 8, kind: input, shape index: {}]
  %s9 = inlined_call_operand.vmem [shape: f32[1,32], index: 9, kind: input, shape index: {}]
  %s10 = inlined_call_operand.vmem [shape: f32[32,16], index: 10, kind: input, shape index: {}]
  %s11 = inlined_call_operand.vmem [shape: f32[32,48], index: 11, kind: input, shape index: {}]
  %s12 = inlined_call_operand.vmem [shape: f32[32,32], index: 12, kind: input, shape index: {}]
  %s13 = inlined_call_operand.vmem [shape: f32[32,16], index: 13, kind: input, shape index: {}]
  %s14 = inlined_call_operand.vmem [shape: f32[1,16], index: 14, kind: input, shape index: {}]
  %s15 = inlined_call_operand.vmem [shape: f32[16,32], index: 15, kind: input, shape index: {}]
  %s16 = inlined_call_operand.vmem [shape: f32[1,32], index: 16, kind: input, shape index: {}]
  %s17 = inlined_call_operand.vmem [shape: f32[1,32], index: 17, kind: input, shape index: {}]
  %s18 = inlined_call_operand.vmem [shape: f32[1,32], index: 18, kind: input, shape index: {}]
  %s19 = inlined_call_operand.hbm [shape: f32[16,32], index: 19, kind: output, shape index: {}]
  %s20 = sld [smem:[#allocation0]]
  $region86: #{transformer_decoder.1} parent=0
    _
  %s22 = ssub.s32 1, %s20
  %s23 = scalar_select 0, %s22, %s20
  $region1: #{transformer_decoder.1} parent=0
    #allocation2 [shape = 'u8[8192]{0}', space=vmem, size = 0x2000, scoped, tag = 'output window, operand 0, single buffered']
    #allocation3 [shape = 's32[1]{0}', space=sflag, size = 0x4, scoped, tag = 'scoped memory for transformer_decoder.1']
    %24 = vsyncpa [#allocation3], 0
    // Predicated region
    $region2: #{transformer_decoder.1} parent=1 // pred_check
      _
    $region3: #{transformer_decoder.1} parent=1 // pred_check_branch
      %26 = sbr.rel (0) target = $region5
    $region4: #{transformer_decoder.1} parent=1 // pred_region
      _
    $region5: #{transformer_decoder.1} parent=1 // pred_fallthru
      _
    // Predicated region
    $region6: #{transformer_decoder.1} parent=1 // pred_check
      _
    $region7: #{transformer_decoder.1} parent=1 // pred_check_branch
      %28 = sbr.rel (0) target = $region9
    $region8: #{transformer_decoder.1} parent=1 // pred_region
      _
    $region9: #{transformer_decoder.1} parent=1 // pred_fallthru
      _
    // Predicated region
    $region10: #{transformer_decoder.1} parent=1 // pred_check
      _
    $region11: #{transformer_decoder.1} parent=1 // pred_check_branch
      %30 = sbr.rel (0) target = $region13
    $region12: #{transformer_decoder.1} parent=1 // pred_region
      _
    $region13: #{transformer_decoder.1} parent=1 // pred_fallthru
      _
    // Predicated region
    $region14: #{transformer_decoder.1} parent=1 // pred_check
      _
    $region15: #{transformer_decoder.1} parent=1 // pred_check_branch
      %32 = sbr.rel (0) target = $region17
    $region16: #{transformer_decoder.1} parent=1 // pred_region
      _
    $region17: #{transformer_decoder.1} parent=1 // pred_fallthru
      _
    // Predicated region
    $region18: #{transformer_decoder.1} parent=1 // pred_check
      _
    $region19: #{transformer_decoder.1} parent=1 // pred_check_branch
      %34 = sbr.rel (0) target = $region21
    $region20: #{transformer_decoder.1} parent=1 // pred_region
      _
    $region21: #{transformer_decoder.1} parent=1 // pred_fallthru
      _
    // Predicated region
    $region22: #{transformer_decoder.1} parent=1 // pred_check
      _
    $region23: #{transformer_decoder.1} parent=1 // pred_check_branch
      %36 = sbr.rel (0) target = $region25
    $region24: #{transformer_decoder.1} parent=1 // pred_region
      _
    $region25: #{transformer_decoder.1} parent=1 // pred_fallthru
      _
    // Predicated region
    $region26: #{transformer_decoder.1} parent=1 // pred_check
      _
    $region27: #{transformer_decoder.1} parent=1 // pred_check_branch
      %38 = sbr.rel (0) target = $region29
    $region28: #{transformer_decoder.1} parent=1 // pred_region
      _
    $region29: #{transformer_decoder.1} parent=1 // pred_fallthru
      _
    // Predicated region
    $region30: #{transformer_decoder.1} parent=1 // pred_check
      _
    $region31: #{transformer_decoder.1} parent=1 // pred_check_branch
      %40 = sbr.rel (0) target = $region33
    $region32: #{transformer_decoder.1} parent=1 // pred_region
      _
    $region33: #{transformer_decoder.1} parent=1 // pred_fallthru
      _
    // Predicated region
    $region34: #{transformer_decoder.1} parent=1 // pred_check
      _
    $region35: #{transformer_decoder.1} parent=1 // pred_check_branch
      %42 = sbr.rel (0) target = $region37
    $region36: #{transformer_decoder.1} parent=1 // pred_region
      _
    $region37: #{transformer_decoder.1} parent=1 // pred_fallthru
      _
    // Predicated region
    $region38: #{transformer_decoder.1} parent=1 // pred_check
      _
    $region39: #{transformer_decoder.1} parent=1 // pred_check_branch
      %44 = sbr.rel (0) target = $region41
    $region40: #{transformer_decoder.1} parent=1 // pred_region
      _
    $region41: #{transformer_decoder.1} parent=1 // pred_fallthru
      _
    // Predicated region
    $region42: #{transformer_decoder.1} parent=1 // pred_check
      _
    $region43: #{transformer_decoder.1} parent=1 // pred_check_branch
      %46 = sbr.rel (0) target = $region45
    $region44: #{transformer_decoder.1} parent=1 // pred_region
      _
    $region45: #{transformer_decoder.1} parent=1 // pred_fallthru
      _
    // Predicated region
    $region46: #{transformer_decoder.1} parent=1 // pred_check
      _
    $region47: #{transformer_decoder.1} parent=1 // pred_check_branch
      %48 = sbr.rel (0) target = $region49
    $region48: #{transformer_decoder.1} parent=1 // pred_region
      _
    $region49: #{transformer_decoder.1} parent=1 // pred_fallthru
      _
    // Predicated region
    $region50: #{transformer_decoder.1} parent=1 // pred_check
      _
    $region51: #{transformer_decoder.1} parent=1 // pred_check_branch
      %50 = sbr.rel (0) target = $region53
    $region52: #{transformer_decoder.1} parent=1 // pred_region
      _
    $region53: #{transformer_decoder.1} parent=1 // pred_fallthru
      _
    // Predicated region
    $region54: #{transformer_decoder.1} parent=1 // pred_check
      _
    $region55: #{transformer_decoder.1} parent=1 // pred_check_branch
      %52 = sbr.rel (0) target = $region57
    $region56: #{transformer_decoder.1} parent=1 // pred_region
      _
    $region57: #{transformer_decoder.1} parent=1 // pred_fallthru
      _
    // Predicated region
    $region58: #{transformer_decoder.1} parent=1 // pred_check
      _
    $region59: #{transformer_decoder.1} parent=1 // pred_check_branch
      %54 = sbr.rel (0) target = $region61
    $region60: #{transformer_decoder.1} parent=1 // pred_region
      _
    $region61: #{transformer_decoder.1} parent=1 // pred_fallthru
      _
    // Predicated region
    $region62: #{transformer_decoder.1} parent=1 // pred_check
      _
    $region63: #{transformer_decoder.1} parent=1 // pred_check_branch
      %56 = sbr.rel (0) target = $region65
    $region64: #{transformer_decoder.1} parent=1 // pred_region
      _
    $region65: #{transformer_decoder.1} parent=1 // pred_fallthru
      _
    // Predicated region
    $region66: #{transformer_decoder.1} parent=1 // pred_check
      _
    $region67: #{transformer_decoder.1} parent=1 // pred_check_branch
      %58 = sbr.rel (0) target = $region69
    $region68: #{transformer_decoder.1} parent=1 // pred_region
      _
    $region69: #{transformer_decoder.1} parent=1 // pred_fallthru
      _
    // Predicated region
    $region70: #{transformer_decoder.1} parent=1 // pred_check
      _
    $region71: #{transformer_decoder.1} parent=1 // pred_check_branch
      %60 = sbr.rel (0) target = $region73
    $region72: #{transformer_decoder.1} parent=1 // pred_region
      _
    $region73: #{transformer_decoder.1} parent=1 // pred_fallthru
      _
    // Predicated region
    $region74: #{transformer_decoder.1} parent=1 // pred_check
      _
    $region75: #{transformer_decoder.1} parent=1 // pred_check_branch
      %62 = sbr.rel (0) target = $region77
    $region76: #{transformer_decoder.1} parent=1 // pred_region
      _
    $region77: #{transformer_decoder.1} parent=1 // pred_fallthru
      _
    %v63 = vld [vmem:[%s0] sm:$0xff]
    %v64 = vld [vmem:[%s0 + $0x8] sm:$0xff]
    %v65 = vld [vmem:[%s1] sm:$0xff]
    %v66 = vld [vmem:[%s1 + $0x8] sm:$0xff]
    %v67 = vld [vmem:[%s1 + $0x10] sm:$0xff]
    %v68 = vld [vmem:[%s1 + $0x18] sm:$0xff]
    %v69 = vlaneseq
    %v70 = vshrl.u32 %v69, 7
    %v71 = vadd.s32 %v70, 8
    %vm72 = vcmp.lt.s32.totalorder %v70, 0
    %v73 = vsub.s32 0, %v70
    %v74 = vsel %vm72, %v73, %v70
    %v75 = vshrl.u32 %v74, 1
    %v76 = vand.u32 %v74, 1
    %v77 = vsub.s32 0, %v76
    %v78 = vsel %vm72, %v77, %v76
    %vm79 = vcmp.lt.s32.totalorder %v71, 0
    %v80 = vsub.s32 0, %v71
    %v81 = vsel %vm79, %v80, %v71
    %v82 = vshrl.u32 %v81, 1
    %v83 = vand.u32 %v81, 1
    %v84 = vsub.s32 0, %v83
    %v85 = vsel %vm79, %v84, %v83
    %vm86 = vcmp.ne.s32.totalorder %v78, 0
    %vm87 = vcmp.ne.s32.totalorder %v85, 0
    %vm88 = vcmp.lt.s32.totalorder %v78, 0
    %vm89 = vcmp.lt.s32.totalorder %v85, 0
    %vm90 = vmand %vm88, %vm86
    %vm91 = vmand %vm89, %vm87
    %v92 = vadd.s32 %v78, 2
    %v93 = vadd.s32 %v85, 2
    %v94 = vsel %vm90, %v92, %v78
    %v95 = vsel %vm91, %v93, %v85
    %v96 = vlaneseq
    %v97 = vand.u32 %v96, 127
    %vm98 = vcmp.lt.s32.totalorder %v97, 0
    %v99 = vsub.s32 0, %v97
    %v100 = vsel %vm98, %v99, %v97
    %v101 = vshrl.u32 %v100, 1
    %v102 = vand.u32 %v100, 1
    %v103 = vsub.s32 0, %v102
    %v104 = vsel %vm98, %v103, %v102
    %vm105 = vcmp.ne.s32.totalorder %v104, 0
    %vm106 = vcmp.lt.s32.totalorder %v104, 0
    %vm107 = vmand %vm106, %vm105
    %v108 = vadd.s32 %v104, 2
    %v109 = vsel %vm107, %v108, %v104
    %vm110 = vcmp.eq.s32.totalorder %v94, %v109
    %vm111 = vcmp.eq.s32.totalorder %v95, %v109
    %v112 = vsel %vm110, 1, 0
    %v113 = vsel %vm111, 1, 0
    %v114 = vcvt.s32.f32 %v112
    %v115 = vcvt.s32.f32 %v113
    %v116 = vmul.f32 %v114, 0.125
    %v117 = vmul.f32 %v115, 0.125
    %v118 = vld [vmem:[%s3] sm:$0xff]
    %v119 = vld [vmem:[%s3 + $0x8] sm:$0xff]
    %v120 = vld [vmem:[%s3 + $0x10] sm:$0xff]
    %v121 = vld [vmem:[%s3 + $0x18] sm:$0xff]
    %v122 = vld [vmem:[%s4] sm:$0xff]
    %v123 = vld [vmem:[%s4 + $0x8] sm:$0xff]
    %v124 = vld [vmem:[%s4 + $0x10] sm:$0xff]
    %v125 = vld [vmem:[%s4 + $0x18] sm:$0xff]
    %v126 = vld [vmem:[%s5] sm:$0x1]
    %v128 = vlaneseq
    %v129 = vshrl.u32 %v128, 7
    %v130 = vsub.s32 0, %v129
    %v131 = vrot.slane %v126, %v130
    %v133 = vld [vmem:[%s6] sm:$0xff]
    %v134 = vld [vmem:[%s6 + $0x8] sm:$0xff]
    %v135 = vld [vmem:[%s7] sm:$0x1]
    %v137 = vlaneseq
    %v138 = vshrl.u32 %v137, 7
    %v139 = vsub.s32 0, %v138
    %v140 = vrot.slane %v135, %v139
    %v142 = vld [vmem:[%s8] sm:$0x1]
    %v144 = vlaneseq
    %v145 = vshrl.u32 %v144, 7
    %v146 = vsub.s32 0, %v145
    %v147 = vrot.slane %v142, %v146
    %v149 = vld [vmem:[%s9] sm:$0x1]
    %v151 = vlaneseq
    %v152 = vshrl.u32 %v151, 7
    %v153 = vsub.s32 0, %v152
    %v154 = vrot.slane %v149, %v153
    %v156 = vld [vmem:[%s12] sm:$0xff]
    %v157 = vld [vmem:[%s12 + $0x8] sm:$0xff]
    %v158 = vld [vmem:[%s12 + $0x10] sm:$0xff]
    %v159 = vld [vmem:[%s12 + $0x18] sm:$0xff]
    %v160 = vld [vmem:[%s13] sm:$0xff]
    %v161 = vld [vmem:[%s13 + $0x8] sm:$0xff]
    %v162 = vld [vmem:[%s13 + $0x10] sm:$0xff]
    %v163 = vld [vmem:[%s13 + $0x18] sm:$0xff]
    %v164 = vld [vmem:[%s14] sm:$0x1]
    %v166 = vlaneseq
    %v167 = vshrl.u32 %v166, 7
    %v168 = vsub.s32 0, %v167
    %v169 = vrot.slane %v164, %v168
    %v171 = vld [vmem:[%s15] sm:$0xff]
    %v172 = vld [vmem:[%s15 + $0x8] sm:$0xff]
    %v173 = vld [vmem:[%s16] sm:$0x1]
    %v175 = vlaneseq
    %v176 = vshrl.u32 %v175, 7
    %v177 = vsub.s32 0, %v176
    %v178 = vrot.slane %v173, %v177
    %v180 = vld [vmem:[%s17] sm:$0x1]
    %v182 = vlaneseq
    %v183 = vshrl.u32 %v182, 7
    %v184 = vsub.s32 0, %v183
    %v185 = vrot.slane %v180, %v184
    %v187 = vld [vmem:[%s18] sm:$0x1]
    %v189 = vlaneseq
    %v190 = vshrl.u32 %v189, 7
    %v191 = vsub.s32 0, %v190
    %v192 = vrot.slane %v187, %v191
    %v194 = vld [vmem:[%s2] sm:$0xff]
    %v195 = vld [vmem:[%s2 + $0x8] sm:$0xff]
    %v196 = vld [vmem:[%s2 + $0x10] sm:$0xff]
    %v197 = vld [vmem:[%s2 + $0x18] sm:$0xff]
    %v198 = vld [vmem:[%s10] sm:$0xff]
    %v199 = vld [vmem:[%s10 + $0x8] sm:$0xff]
    %v200 = vld [vmem:[%s10 + $0x10] sm:$0xff]
    %v201 = vld [vmem:[%s10 + $0x18] sm:$0xff]
    %v202 = vld [vmem:[%s11] sm:$0xff]
    %v203 = vld [vmem:[%s11 + $0x8] sm:$0xff]
    %v204 = vld [vmem:[%s11 + $0x10] sm:$0xff]
    %v205 = vld [vmem:[%s11 + $0x18] sm:$0xff]
    %vm206 = vcmask 261120
    %v208 = vsel %vm206, %v65, 0
    %v211 = vsel %vm206, %v66, 0
    %v214 = vsel %vm206, %v67, 0
    %v217 = vsel %vm206, %v68, 0
    %219 = vmatprep.subr.mxu0 0.0
    %220 = vmatpush1.msra.mxu0 %v202
    %221 = vmatprep.subr.mxu0 0.0
    %222 = vmatpush1.msra.mxu0 %v203
    %223 = vmatprep.subr.mxu0 0.0
    %224 = vmatpush1.msra.mxu0 %v204
    %225 = vmatprep.subr.mxu0 0.0
    %226 = vmatpush1.msra.mxu0 %v205
    %227 = vmatprep.subr.mxu0 0.0
    %228 = vmatpush1.msra.mxu0 0.0
    %229 = vmatprep.subr.mxu0 0.0
    %230 = vmatpush1.msra.mxu0 0.0
    %231 = vmatprep.subr.mxu0 0.0
    %232 = vmatpush1.msra.mxu0 0.0
    %233 = vmatprep.subr.mxu0 0.0
    %234 = vmatpush1.msra.mxu0 0.0
    %235 = vmatprep.subr.mxu0 0.0
    %236 = vmatpush1.msra.mxu0 0.0
    %237 = vmatprep.subr.mxu0 0.0
    %238 = vmatpush1.msra.mxu0 0.0
    %239 = vmatprep.subr.mxu0 0.0
    %240 = vmatpush1.msra.mxu0 0.0
    %241 = vmatprep.subr.mxu0 0.0
    %242 = vmatpush1.msra.mxu0 0.0
    %243 = vmatprep.subr.mxu0 0.0
    %244 = vmatpush1.msra.mxu0 0.0
    %245 = vmatprep.subr.mxu0 0.0
    %246 = vmatpush1.msra.mxu0 0.0
    %247 = vmatprep.subr.mxu0 0.0
    %248 = vmatpush1.msra.mxu0 0.0
    %249 = vmatprep.subr.mxu0 0.0
    %250 = vmatpush1.msra.mxu0 0.0
    %251 = vmatprep.subr.mxu0 0.0
    %252 = vmatpush1.msra.mxu0 0.0
    %253 = vmatprep.subr.mxu0 0.0
    %254 = vmatpush1.msra.mxu0 0.0
    %255 = vmatprep.subr.mxu0 0.0
    %256 = vmatpush1.msra.mxu0 0.0
    %257 = vmatprep.subr.mxu0 0.0
    %258 = vmatpush1.msra.mxu0 0.0
    %259 = vmatprep.subr.mxu0 0.0
    %260 = vmatpush1.msra.mxu0 0.0
    %261 = vmatprep.subr.mxu0 0.0
    %262 = vmatpush1.msra.mxu0 0.0
    %263 = vmatprep.subr.mxu0 0.0
    %264 = vmatpush1.msra.mxu0 0.0
    %265 = vmatprep.subr.mxu0 0.0
    %266 = vmatpush1.msra.mxu0 0.0
    %267 = vmatprep.subr.mxu0 0.0
    %268 = vmatpush1.msra.mxu0 0.0
    %269 = vmatprep.subr.mxu0 0.0
    %270 = vmatpush1.msra.mxu0 0.0
    %271 = vmatprep.subr.mxu0 0.0
    %272 = vmatpush1.msra.mxu0 0.0
    %273 = vmatprep.subr.mxu0 0.0
    %274 = vmatpush1.msra.mxu0 0.0
    %275 = vmatprep.subr.mxu0 0.0
    %276 = vmatpush1.msra.mxu0 0.0
    %277 = vmatprep.subr.mxu0 0.0
    %278 = vmatpush1.msra.mxu0 0.0
    %279 = vmatprep.subr.mxu0 0.0
    %280 = vmatpush1.msra.mxu0 0.0
    %281 = vmatprep.subr.mxu0 0.0
    %282 = vmatpush1.msra.mxu0 0.0
    %283 = vmatprep.mubr.f32.mxu0 0.0
    %284 = vmatmul.mubr.f32.gmra.mrb[0].mxu0 %v208
    %v285 = vpop.f32.mrb[0].mxu0
    %v286 = vadd.f32 0.0, %v285
    %v287 = vpop.f32.mrb[0].mxu0
    %288 = vmatprep.mubr.f32.mxu0 0.0
    %289 = vmatmul.mubr.f32.gmra.mrb[0].mxu0 %v211
    %v290 = vpop.f32.mrb[0].mxu0
    %v291 = vadd.f32 0.0, %v290
    %v292 = vpop.f32.mrb[0].mxu0
    %293 = vmatprep.mubr.f32.mxu0 0.0
    %294 = vmatmul.mubr.f32.gmra.mrb[0].mxu0 %v214
    %v295 = vpop.f32.mrb[0].mxu0
    %v296 = vadd.f32 0.0, %v295
    %v297 = vpop.f32.mrb[0].mxu0
    %298 = vmatprep.mubr.f32.mxu0 0.0
    %299 = vmatmul.mubr.f32.gmra.mrb[0].mxu0 %v217
    %v300 = vpop.f32.mrb[0].mxu0
    %v301 = vadd.f32 0.0, %v300
    %v302 = vpop.f32.mrb[0].mxu0
    %303 = vdwg.mxu0
    %v304 = vmul.f32 %v286, %v286
    %v305 = vmul.f32 %v291, %v291
    %v306 = vmul.f32 %v296, %v296
    %v307 = vmul.f32 %v301, %v301
    %vm308 = vcmask 130048
    %v309 = vsel %vm308, %v304, 0.0
    %310 = vadd.xlane.f32.xlu0 %v309
    %v311 = vpop.xlane.xlu0 %310
    %v312 = vsel %vm308, %v305, 0.0
    %313 = vadd.xlane.f32.xlu0 %v312
    %v314 = vpop.xlane.xlu0 %313
    %v315 = vsel %vm308, %v306, 0.0
    %316 = vadd.xlane.f32.xlu0 %v315
    %v317 = vpop.xlane.xlu0 %316
    %v318 = vsel %vm308, %v307, 0.0
    %319 = vadd.xlane.f32.xlu0 %v318
    %v320 = vpop.xlane.xlu0 %319
    %v321 = vmax.f32 %v311, 1e-24
    %v322 = vmax.f32 %v314, 1e-24
    %v323 = vmax.f32 %v317, 1e-24
    %v324 = vmax.f32 %v320, 1e-24
    %v325 = vrsqrt.pop %v321
    %v326 = vrsqrt.pop %v322
    %v327 = vrsqrt.pop %v323
    %v328 = vrsqrt.pop %v324
    %v329 = vmul.f32 %v286, %v325
    %v330 = vmul.f32 %v291, %v326
    %v331 = vmul.f32 %v296, %v327
    %v332 = vmul.f32 %v301, %v328
    %v334 = vsel %vm206, %v63, 0
    %v337 = vsel %vm206, %v64, 0
    %339 = vmatprep.subr.mxu0 0.0
    %340 = vmatpush1.msra.mxu0 %v194
    %341 = vmatprep.subr.mxu0 0.0
    %342 = vmatpush1.msra.mxu0 %v195
    %343 = vmatprep.subr.mxu0 0.0
    %344 = vmatpush1.msra.mxu0 %v196
    %345 = vmatprep.subr.mxu0 0.0
    %346 = vmatpush1.msra.mxu0 %v197
    %347 = vmatprep.subr.mxu0 0.0
    %348 = vmatpush1.msra.mxu0 0.0
    %349 = vmatprep.subr.mxu0 0.0
    %350 = vmatpush1.msra.mxu0 0.0
    %351 = vmatprep.subr.mxu0 0.0
    %352 = vmatpush1.msra.mxu0 0.0
    %353 = vmatprep.subr.mxu0 0.0
    %354 = vmatpush1.msra.mxu0 0.0
    %355 = vmatprep.subr.mxu0 0.0
    %356 = vmatpush1.msra.mxu0 0.0
    %357 = vmatprep.subr.mxu0 0.0
    %358 = vmatpush1.msra.mxu0 0.0
    %359 = vmatprep.subr.mxu0 0.0
    %360 = vmatpush1.msra.mxu0 0.0
    %361 = vmatprep.subr.mxu0 0.0
    %362 = vmatpush1.msra.mxu0 0.0
    %363 = vmatprep.subr.mxu0 0.0
    %364 = vmatpush1.msra.mxu0 0.0
    %365 = vmatprep.subr.mxu0 0.0
    %366 = vmatpush1.msra.mxu0 0.0
    %367 = vmatprep.subr.mxu0 0.0
    %368 = vmatpush1.msra.mxu0 0.0
    %369 = vmatprep.subr.mxu0 0.0
    %370 = vmatpush1.msra.mxu0 0.0
    %371 = vmatprep.subr.mxu0 0.0
    %372 = vmatpush1.msra.mxu0 0.0
    %373 = vmatprep.subr.mxu0 0.0
    %374 = vmatpush1.msra.mxu0 0.0
    %375 = vmatprep.subr.mxu0 0.0
    %376 = vmatpush1.msra.mxu0 0.0
    %377 = vmatprep.subr.mxu0 0.0
    %378 = vmatpush1.msra.mxu0 0.0
    %379 = vmatprep.subr.mxu0 0.0
    %380 = vmatpush1.msra.mxu0 0.0
    %381 = vmatprep.subr.mxu0 0.0
    %382 = vmatpush1.msra.mxu0 0.0
    %383 = vmatprep.subr.mxu0 0.0
    %384 = vmatpush1.msra.mxu0 0.0
    %385 = vmatprep.subr.mxu0 0.0
    %386 = vmatpush1.msra.mxu0 0.0
    %387 = vmatprep.subr.mxu0 0.0
    %388 = vmatpush1.msra.mxu0 0.0
    %389 = vmatprep.subr.mxu0 0.0
    %390 = vmatpush1.msra.mxu0 0.0
    %391 = vmatprep.subr.mxu0 0.0
    %392 = vmatpush1.msra.mxu0 0.0
    %393 = vmatprep.subr.mxu0 0.0
    %394 = vmatpush1.msra.mxu0 0.0
    %395 = vmatprep.subr.mxu0 0.0
    %396 = vmatpush1.msra.mxu0 0.0
    %397 = vmatprep.subr.mxu0 0.0
    %398 = vmatpush1.msra.mxu0 0.0
    %399 = vmatprep.subr.mxu0 0.0
    %400 = vmatpush1.msra.mxu0 0.0
    %401 = vmatprep.subr.mxu0 0.0
    %402 = vmatpush1.msra.mxu0 0.0
    %403 = vmatprep.mubr.f32.mxu0 0.0
    %404 = vmatmul.mubr.f32.gmra.mrb[0].mxu0 %v334
    %v405 = vpop.f32.mrb[0].mxu0
    %v406 = vadd.f32 0.0, %v405
    %v407 = vpop.f32.mrb[0].mxu0
    %408 = vmatprep.mubr.f32.mxu0 0.0
    %409 = vmatmul.mubr.f32.gmra.mrb[0].mxu0 %v337
    %v410 = vpop.f32.mrb[0].mxu0
    %v411 = vadd.f32 0.0, %v410
    %v412 = vpop.f32.mrb[0].mxu0
    %413 = vdwg.mxu0
    %v414 = vmul.f32 %v406, %v406
    %v415 = vmul.f32 %v411, %v411
    %v416 = vsel %vm308, %v414, 0.0
    %417 = vadd.xlane.f32.xlu0 %v416
    %v418 = vpop.xlane.xlu0 %417
    %v419 = vsel %vm308, %v415, 0.0
    %420 = vadd.xlane.f32.xlu0 %v419
    %v421 = vpop.xlane.xlu0 %420
    %v422 = vmax.f32 %v418, 1e-24
    %v423 = vmax.f32 %v421, 1e-24
    %v424 = vrsqrt.pop %v422
    %v425 = vrsqrt.pop %v423
    %v426 = vmul.f32 %v406, %v424
    %v427 = vmul.f32 %v411, %v425
    %430 = vrot.lane.b32.xlu0 %v414, 112
    %v431 = vpop.permute.xlu0 %430
    %432 = vrot.lane.b32.xlu0 %v415, 112
    %v433 = vpop.permute.xlu0 %432
    %v436 = vsel %vm308, %v431, 0.0
    %437 = vadd.xlane.f32.xlu0 %v436
    %v438 = vpop.xlane.xlu0 %437
    %v439 = vsel %vm308, %v433, 0.0
    %440 = vadd.xlane.f32.xlu0 %v439
    %v441 = vpop.xlane.xlu0 %440
    %v442 = vmax.f32 %v438, 1e-24
    %v443 = vmax.f32 %v441, 1e-24
    %v444 = vrsqrt.pop %v442
    %v445 = vrsqrt.pop %v443
    %v446 = vmul.f32 %v406, %v444
    %v447 = vmul.f32 %v411, %v445
    %450 = vrot.lane.b32.xlu0 %v446, 112
    %v451 = vpop.permute.xlu0 %450
    %452 = vrot.lane.b32.xlu0 %v447, 112
    %v453 = vpop.permute.xlu0 %452
    %v455 = vsel %vm308, %v426, 0
    %v458 = vsel %vm308, %v427, 0
    %v460 = vsel %vm308, %v451, 0
    %v462 = vsel %vm308, %v453, 0
    %464 = vmatprep.subr.mxu0 0.0
    %465 = vmatpush1.xpose.msra.mxu0 %v460
    %466 = vmatprep.subr.mxu0 0.0
    %467 = vmatpush1.xpose.msra.mxu0 %v462
    %468 = vmatprep.subr.mxu0 0.0
    %469 = vmatpush1.xpose.msra.mxu0 0.0
    %470 = vmatprep.subr.mxu0 0.0
    %471 = vmatpush1.xpose.msra.mxu0 0.0
    %472 = vmatprep.subr.mxu0 0.0
    %473 = vmatpush1.xpose.msra.mxu0 0.0
    %474 = vmatprep.subr.mxu0 0.0
    %475 = vmatpush1.xpose.msra.mxu0 0.0
    %476 = vmatprep.subr.mxu0 0.0
    %477 = vmatpush1.xpose.msra.mxu0 0.0
    %478 = vmatprep.subr.mxu0 0.0
    %479 = vmatpush1.xpose.msra.mxu0 0.0
    %480 = vmatprep.subr.mxu0 0.0
    %481 = vmatpush1.xpose.msra.mxu0 0.0
    %482 = vmatprep.subr.mxu0 0.0
    %483 = vmatpush1.xpose.msra.mxu0 0.0
    %484 = vmatprep.subr.mxu0 0.0
    %485 = vmatpush1.xpose.msra.mxu0 0.0
    %486 = vmatprep.subr.mxu0 0.0
    %487 = vmatpush1.xpose.msra.mxu0 0.0
    %488 = vmatprep.subr.mxu0 0.0
    %489 = vmatpush1.xpose.msra.mxu0 0.0
    %490 = vmatprep.subr.mxu0 0.0
    %491 = vmatpush1.xpose.msra.mxu0 0.0
    %492 = vmatprep.subr.mxu0 0.0
    %493 = vmatpush1.xpose.msra.mxu0 0.0
    %494 = vmatprep.subr.mxu0 0.0
    %495 = vmatpush1.xpose.msra.mxu0 0.0
    %496 = vmatprep.subr.mxu0 0.0
    %497 = vmatpush1.xpose.msra.mxu0 0.0
    %498 = vmatprep.subr.mxu0 0.0
    %499 = vmatpush1.xpose.msra.mxu0 0.0
    %500 = vmatprep.subr.mxu0 0.0
    %501 = vmatpush1.xpose.msra.mxu0 0.0
    %502 = vmatprep.subr.mxu0 0.0
    %503 = vmatpush1.xpose.msra.mxu0 0.0
    %504 = vmatprep.subr.mxu0 0.0
    %505 = vmatpush1.xpose.msra.mxu0 0.0
    %506 = vmatprep.subr.mxu0 0.0
    %507 = vmatpush1.xpose.msra.mxu0 0.0
    %508 = vmatprep.subr.mxu0 0.0
    %509 = vmatpush1.xpose.msra.mxu0 0.0
    %510 = vmatprep.subr.mxu0 0.0
    %511 = vmatpush1.xpose.msra.mxu0 0.0
    %512 = vmatprep.subr.mxu0 0.0
    %513 = vmatpush1.xpose.msra.mxu0 0.0
    %514 = vmatprep.subr.mxu0 0.0
    %515 = vmatpush1.xpose.msra.mxu0 0.0
    %516 = vmatprep.subr.mxu0 0.0
    %517 = vmatpush1.xpose.msra.mxu0 0.0
    %518 = vmatprep.subr.mxu0 0.0
    %519 = vmatpush1.xpose.msra.mxu0 0.0
    %520 = vmatprep.subr.mxu0 0.0
    %521 = vmatpush1.xpose.msra.mxu0 0.0
    %522 = vmatprep.subr.mxu0 0.0
    %523 = vmatpush1.xpose.msra.mxu0 0.0
    %524 = vmatprep.subr.mxu0 0.0
    %525 = vmatpush1.xpose.msra.mxu0 0.0
    %526 = vmatprep.subr.mxu0 0.0
    %527 = vmatpush1.xpose.msra.mxu0 0.0
    %528 = vmatprep.mubr.f32.mxu0 0.0
    %529 = vmatmul.mubr.f32.gmra.mrb[0].mxu0 %v455
    %v530 = vpop.f32.mrb[0].mxu0
    %v531 = vadd.f32 0.0, %v530
    %v532 = vpop.f32.mrb[0].mxu0
    %533 = vmatprep.mubr.f32.mxu0 0.0
    %534 = vmatmul.mubr.f32.gmra.mrb[0].mxu0 %v458
    %v535 = vpop.f32.mrb[0].mxu0
    %v536 = vadd.f32 0.0, %v535
    %v537 = vpop.f32.mrb[0].mxu0
    %538 = vdwg.mxu0
    %v539 = vsel %vm308, %v531, -inf
    %540 = vmax.xlane.f32.xlu0 %v539
    %v541 = vpop.xlane.xlu0 %540
    %v542 = vsel %vm308, %v536, -inf
    %543 = vmax.xlane.f32.xlu0 %v542
    %v544 = vpop.xlane.xlu0 %543
    %v545 = vsub.f32 %v531, %v541
    %v546 = vsub.f32 %v536, %v544
    %v547 = vmul.f32 %v545, 1.442695
    %v548 = vpow.pop %v547
    %v549 = vmul.f32 %v546, 1.442695
    %v550 = vpow.pop %v549
    %v551 = vmul.f32 %v548, %v114
    %v552 = vmul.f32 %v550, %v115
    %v553 = vsel %vm308, %v551, 0.0
    %554 = vadd.xlane.f32.xlu0 %v553
    %v555 = vpop.xlane.xlu0 %554
    %v556 = vsel %vm308, %v552, 0.0
    %557 = vadd.xlane.f32.xlu0 %v556
    %v558 = vpop.xlane.xlu0 %557
    %v559 = vrcp.pop %v555
    %v560 = vmul.f32 1.0, %v559
    %v561 = vrcp.pop %v558
    %v562 = vmul.f32 1.0, %v561
    %v563 = vmul.f32 %v551, %v560
    %v564 = vmul.f32 %v552, %v562
    %v565 = vsel %vm308, %v563, 0.0
    %v566 = vsel %vm308, %v564, 0.0
    %v567 = vadd.f32 %v565, %v566
    %v568 = vrot.slane %v567, 4
    %v569 = vadd.f32 %v567, %v568
    %v570 = vrot.slane %v569, 2
    %v571 = vadd.f32 %v569, %v570
    %v572 = vrot.slane %v571, 1
    %v573 = vadd.f32 %v571, %v572
    %v574 = vadd.f32 %v573, 1e-09
    %v575 = vrcp.pop %v574
    %v576 = vmul.f32 1.0, %v575
    %v577 = vmul.f32 %v563, %v576
    %v578 = vmul.f32 %v564, %v576
    %581 = vrot.lane.b32.xlu0 %v406, 96
    %v582 = vpop.permute.xlu0 %581
    %583 = vrot.lane.b32.xlu0 %v411, 96
    %v584 = vpop.permute.xlu0 %583
    %v588 = vsel %vm308, %v577, 0
    %v591 = vsel %vm308, %v578, 0
    %593 = vmatprep.subr.mxu0 0.0
    %594 = vmatpush1.msra.mxu0 %v582
    %595 = vmatprep.subr.mxu0 0.0
    %596 = vmatpush1.msra.mxu0 %v584
    %597 = vmatprep.subr.mxu0 0.0
    %598 = vmatpush1.msra.mxu0 0.0
    %599 = vmatprep.subr.mxu0 0.0
    %600 = vmatpush1.msra.mxu0 0.0
    %601 = vmatprep.subr.mxu0 0.0
    %602 = vmatpush1.msra.mxu0 0.0
    %603 = vmatprep.subr.mxu0 0.0
    %604 = vmatpush1.msra.mxu0 0.0
    %605 = vmatprep.subr.mxu0 0.0
    %606 = vmatpush1.msra.mxu0 0.0
    %607 = vmatprep.subr.mxu0 0.0
    %608 = vmatpush1.msra.mxu0 0.0
    %609 = vmatprep.subr.mxu0 0.0
    %610 = vmatpush1.msra.mxu0 0.0
    %611 = vmatprep.subr.mxu0 0.0
    %612 = vmatpush1.msra.mxu0 0.0
    %613 = vmatprep.subr.mxu0 0.0
    %614 = vmatpush1.msra.mxu0 0.0
    %615 = vmatprep.subr.mxu0 0.0
    %616 = vmatpush1.msra.mxu0 0.0
    %617 = vmatprep.subr.mxu0 0.0
    %618 = vmatpush1.msra.mxu0 0.0
    %619 = vmatprep.subr.mxu0 0.0
    %620 = vmatpush1.msra.mxu0 0.0
    %621 = vmatprep.subr.mxu0 0.0
    %622 = vmatpush1.msra.mxu0 0.0
    %623 = vmatprep.subr.mxu0 0.0
    %624 = vmatpush1.msra.mxu0 0.0
    %625 = vmatprep.subr.mxu0 0.0
    %626 = vmatpush1.msra.mxu0 0.0
    %627 = vmatprep.subr.mxu0 0.0
    %628 = vmatpush1.msra.mxu0 0.0
    %629 = vmatprep.subr.mxu0 0.0
    %630 = vmatpush1.msra.mxu0 0.0
    %631 = vmatprep.subr.mxu0 0.0
    %632 = vmatpush1.msra.mxu0 0.0
    %633 = vmatprep.subr.mxu0 0.0
    %634 = vmatpush1.msra.mxu0 0.0
    %635 = vmatprep.subr.mxu0 0.0
    %636 = vmatpush1.msra.mxu0 0.0
    %637 = vmatprep.subr.mxu0 0.0
    %638 = vmatpush1.msra.mxu0 0.0
    %639 = vmatprep.subr.mxu0 0.0
    %640 = vmatpush1.msra.mxu0 0.0
    %641 = vmatprep.subr.mxu0 0.0
    %642 = vmatpush1.msra.mxu0 0.0
    %643 = vmatprep.subr.mxu0 0.0
    %644 = vmatpush1.msra.mxu0 0.0
    %645 = vmatprep.subr.mxu0 0.0
    %646 = vmatpush1.msra.mxu0 0.0
    %647 = vmatprep.subr.mxu0 0.0
    %648 = vmatpush1.msra.mxu0 0.0
    %649 = vmatprep.subr.mxu0 0.0
    %650 = vmatpush1.msra.mxu0 0.0
    %651 = vmatprep.subr.mxu0 0.0
    %652 = vmatpush1.msra.mxu0 0.0
    %653 = vmatprep.subr.mxu0 0.0
    %654 = vmatpush1.msra.mxu0 0.0
    %655 = vmatprep.subr.mxu0 0.0
    %656 = vmatpush1.msra.mxu0 0.0
    %657 = vmatprep.mubr.f32.mxu0 0.0
    %658 = vmatmul.mubr.f32.gmra.mrb[0].mxu0 %v588
    %v659 = vpop.f32.mrb[0].mxu0
    %v660 = vadd.f32 0.0, %v659
    %v661 = vpop.f32.mrb[0].mxu0
    %662 = vmatprep.mubr.f32.mxu0 0.0
    %663 = vmatmul.mubr.f32.gmra.mrb[0].mxu0 %v591
    %v664 = vpop.f32.mrb[0].mxu0
    %v665 = vadd.f32 0.0, %v664
    %v666 = vpop.f32.mrb[0].mxu0
    %667 = vdwg.mxu0
    %v668 = vsub.f32 %v63, %v660
    %v669 = vsub.f32 %v64, %v665
    %v671 = vsel %vm206, %v668, 0
    %v674 = vsel %vm206, %v669, 0
    %676 = vmatprep.subr.mxu0 0.0
    %677 = vmatpush1.msra.mxu0 %v118
    %678 = vmatprep.subr.mxu0 0.0
    %679 = vmatpush1.msra.mxu0 %v119
    %680 = vmatprep.subr.mxu0 0.0
    %681 = vmatpush1.msra.mxu0 %v120
    %682 = vmatprep.subr.mxu0 0.0
    %683 = vmatpush1.msra.mxu0 %v121
    %684 = vmatprep.subr.mxu0 0.0
    %685 = vmatpush1.msra.mxu0 0.0
    %686 = vmatprep.subr.mxu0 0.0
    %687 = vmatpush1.msra.mxu0 0.0
    %688 = vmatprep.subr.mxu0 0.0
    %689 = vmatpush1.msra.mxu0 0.0
    %690 = vmatprep.subr.mxu0 0.0
    %691 = vmatpush1.msra.mxu0 0.0
    %692 = vmatprep.subr.mxu0 0.0
    %693 = vmatpush1.msra.mxu0 0.0
    %694 = vmatprep.subr.mxu0 0.0
    %695 = vmatpush1.msra.mxu0 0.0
    %696 = vmatprep.subr.mxu0 0.0
    %697 = vmatpush1.msra.mxu0 0.0
    %698 = vmatprep.subr.mxu0 0.0
    %699 = vmatpush1.msra.mxu0 0.0
    %700 = vmatprep.subr.mxu0 0.0
    %701 = vmatpush1.msra.mxu0 0.0
    %702 = vmatprep.subr.mxu0 0.0
    %703 = vmatpush1.msra.mxu0 0.0
    %704 = vmatprep.subr.mxu0 0.0
    %705 = vmatpush1.msra.mxu0 0.0
    %706 = vmatprep.subr.mxu0 0.0
    %707 = vmatpush1.msra.mxu0 0.0
    %708 = vmatprep.subr.mxu0 0.0
    %709 = vmatpush1.msra.mxu0 0.0
    %710 = vmatprep.subr.mxu0 0.0
    %711 = vmatpush1.msra.mxu0 0.0
    %712 = vmatprep.subr.mxu0 0.0
    %713 = vmatpush1.msra.mxu0 0.0
    %714 = vmatprep.subr.mxu0 0.0
    %715 = vmatpush1.msra.mxu0 0.0
    %716 = vmatprep.subr.mxu0 0.0
    %717 = vmatpush1.msra.mxu0 0.0
    %718 = vmatprep.subr.mxu0 0.0
    %719 = vmatpush1.msra.mxu0 0.0
    %720 = vmatprep.subr.mxu0 0.0
    %721 = vmatpush1.msra.mxu0 0.0
    %722 = vmatprep.subr.mxu0 0.0
    %723 = vmatpush1.msra.mxu0 0.0
    %724 = vmatprep.subr.mxu0 0.0
    %725 = vmatpush1.msra.mxu0 0.0
    %726 = vmatprep.subr.mxu0 0.0
    %727 = vmatpush1.msra.mxu0 0.0
    %728 = vmatprep.subr.mxu0 0.0
    %729 = vmatpush1.msra.mxu0 0.0
    %730 = vmatprep.subr.mxu0 0.0
    %731 = vmatpush1.msra.mxu0 0.0
    %732 = vmatprep.subr.mxu0 0.0
    %733 = vmatpush1.msra.mxu0 0.0
    %734 = vmatprep.subr.mxu0 0.0
    %735 = vmatpush1.msra.mxu0 0.0
    %736 = vmatprep.subr.mxu0 0.0
    %737 = vmatpush1.msra.mxu0 0.0
    %738 = vmatprep.subr.mxu0 0.0
    %739 = vmatpush1.msra.mxu0 0.0
    %740 = vmatprep.mubr.f32.mxu0 0.0
    %741 = vmatmul.mubr.f32.gmra.mrb[0].mxu0 %v671
    %v742 = vpop.f32.mrb[0].mxu0
    %v743 = vadd.f32 0.0, %v742
    %v744 = vpop.f32.mrb[0].mxu0
    %745 = vmatprep.mubr.f32.mxu0 0.0
    %746 = vmatmul.mubr.f32.gmra.mrb[0].mxu0 %v674
    %v747 = vpop.f32.mrb[0].mxu0
    %v748 = vadd.f32 0.0, %v747
    %v749 = vpop.f32.mrb[0].mxu0
    %750 = vdwg.mxu0
    %v751 = vmax.f32 %v743, 0.0
    %v752 = vmax.f32 %v748, 0.0
    %v754 = vsel %vm206, %v751, 0
    %v757 = vsel %vm206, %v752, 0
    %759 = vmatprep.subr.mxu0 0.0
    %760 = vmatpush1.msra.mxu0 %v122
    %761 = vmatprep.subr.mxu0 0.0
    %762 = vmatpush1.msra.mxu0 %v123
    %763 = vmatprep.subr.mxu0 0.0
    %764 = vmatpush1.msra.mxu0 %v124
    %765 = vmatprep.subr.mxu0 0.0
    %766 = vmatpush1.msra.mxu0 %v125
    %767 = vmatprep.subr.mxu0 0.0
    %768 = vmatpush1.msra.mxu0 0.0
    %769 = vmatprep.subr.mxu0 0.0
    %770 = vmatpush1.msra.mxu0 0.0
    %771 = vmatprep.subr.mxu0 0.0
    %772 = vmatpush1.msra.mxu0 0.0
    %773 = vmatprep.subr.mxu0 0.0
    %774 = vmatpush1.msra.mxu0 0.0
    %775 = vmatprep.subr.mxu0 0.0
    %776 = vmatpush1.msra.mxu0 0.0
    %777 = vmatprep.subr.mxu0 0.0
    %778 = vmatpush1.msra.mxu0 0.0
    %779 = vmatprep.subr.mxu0 0.0
    %780 = vmatpush1.msra.mxu0 0.0
    %781 = vmatprep.subr.mxu0 0.0
    %782 = vmatpush1.msra.mxu0 0.0
    %783 = vmatprep.subr.mxu0 0.0
    %784 = vmatpush1.msra.mxu0 0.0
    %785 = vmatprep.subr.mxu0 0.0
    %786 = vmatpush1.msra.mxu0 0.0
    %787 = vmatprep.subr.mxu0 0.0
    %788 = vmatpush1.msra.mxu0 0.0
    %789 = vmatprep.subr.mxu0 0.0
    %790 = vmatpush1.msra.mxu0 0.0
    %791 = vmatprep.subr.mxu0 0.0
    %792 = vmatpush1.msra.mxu0 0.0
    %793 = vmatprep.subr.mxu0 0.0
    %794 = vmatpush1.msra.mxu0 0.0
    %795 = vmatprep.subr.mxu0 0.0
    %796 = vmatpush1.msra.mxu0 0.0
    %797 = vmatprep.subr.mxu0 0.0
    %798 = vmatpush1.msra.mxu0 0.0
    %799 = vmatprep.subr.mxu0 0.0
    %800 = vmatpush1.msra.mxu0 0.0
    %801 = vmatprep.subr.mxu0 0.0
    %802 = vmatpush1.msra.mxu0 0.0
    %803 = vmatprep.subr.mxu0 0.0
    %804 = vmatpush1.msra.mxu0 0.0
    %805 = vmatprep.subr.mxu0 0.0
    %806 = vmatpush1.msra.mxu0 0.0
    %807 = vmatprep.subr.mxu0 0.0
    %808 = vmatpush1.msra.mxu0 0.0
    %809 = vmatprep.subr.mxu0 0.0
    %810 = vmatpush1.msra.mxu0 0.0
    %811 = vmatprep.subr.mxu0 0.0
    %812 = vmatpush1.msra.mxu0 0.0
    %813 = vmatprep.subr.mxu0 0.0
    %814 = vmatpush1.msra.mxu0 0.0
    %815 = vmatprep.subr.mxu0 0.0
    %816 = vmatpush1.msra.mxu0 0.0
    %817 = vmatprep.subr.mxu0 0.0
    %818 = vmatpush1.msra.mxu0 0.0
    %819 = vmatprep.subr.mxu0 0.0
    %820 = vmatpush1.msra.mxu0 0.0
    %821 = vmatprep.subr.mxu0 0.0
    %822 = vmatpush1.msra.mxu0 0.0
    %823 = vmatprep.mubr.f32.mxu0 0.0
    %824 = vmatmul.mubr.f32.gmra.mrb[0].mxu0 %v754
    %v825 = vpop.f32.mrb[0].mxu0
    %v826 = vadd.f32 %v131, %v825
    %v827 = vpop.f32.mrb[0].mxu0
    %828 = vmatprep.mubr.f32.mxu0 0.0
    %829 = vmatmul.mubr.f32.gmra.mrb[0].mxu0 %v757
    %v830 = vpop.f32.mrb[0].mxu0
    %v831 = vadd.f32 %v131, %v830
    %v832 = vpop.f32.mrb[0].mxu0
    %833 = vdwg.mxu0
    %v834 = vmax.f32 %v826, 0.0
    %v835 = vmax.f32 %v831, 0.0
    %v837 = vsel %vm308, %v834, 0
    %v840 = vsel %vm308, %v835, 0
    %842 = vmatprep.subr.mxu0 0.0
    %843 = vmatpush1.msra.mxu0 %v133
    %844 = vmatprep.subr.mxu0 0.0
    %845 = vmatpush1.msra.mxu0 %v134
    %846 = vmatprep.subr.mxu0 0.0
    %847 = vmatpush1.msra.mxu0 0.0
    %848 = vmatprep.subr.mxu0 0.0
    %849 = vmatpush1.msra.mxu0 0.0
    %850 = vmatprep.subr.mxu0 0.0
    %851 = vmatpush1.msra.mxu0 0.0
    %852 = vmatprep.subr.mxu0 0.0
    %853 = vmatpush1.msra.mxu0 0.0
    %854 = vmatprep.subr.mxu0 0.0
    %855 = vmatpush1.msra.mxu0 0.0
    %856 = vmatprep.subr.mxu0 0.0
    %857 = vmatpush1.msra.mxu0 0.0
    %858 = vmatprep.subr.mxu0 0.0
    %859 = vmatpush1.msra.mxu0 0.0
    %860 = vmatprep.subr.mxu0 0.0
    %861 = vmatpush1.msra.mxu0 0.0
    %862 = vmatprep.subr.mxu0 0.0
    %863 = vmatpush1.msra.mxu0 0.0
    %864 = vmatprep.subr.mxu0 0.0
    %865 = vmatpush1.msra.mxu0 0.0
    %866 = vmatprep.subr.mxu0 0.0
    %867 = vmatpush1.msra.mxu0 0.0
    %868 = vmatprep.subr.mxu0 0.0
    %869 = vmatpush1.msra.mxu0 0.0
    %870 = vmatprep.subr.mxu0 0.0
    %871 = vmatpush1.msra.mxu0 0.0
    %872 = vmatprep.subr.mxu0 0.0
    %873 = vmatpush1.msra.mxu0 0.0
    %874 = vmatprep.subr.mxu0 0.0
    %875 = vmatpush1.msra.mxu0 0.0
    %876 = vmatprep.subr.mxu0 0.0
    %877 = vmatpush1.msra.mxu0 0.0
    %878 = vmatprep.subr.mxu0 0.0
    %879 = vmatpush1.msra.mxu0 0.0
    %880 = vmatprep.subr.mxu0 0.0
    %881 = vmatpush1.msra.mxu0 0.0
    %882 = vmatprep.subr.mxu0 0.0
    %883 = vmatpush1.msra.mxu0 0.0
    %884 = vmatprep.subr.mxu0 0.0
    %885 = vmatpush1.msra.mxu0 0.0
    %886 = vmatprep.subr.mxu0 0.0
    %887 = vmatpush1.msra.mxu0 0.0
    %888 = vmatprep.subr.mxu0 0.0
    %889 = vmatpush1.msra.mxu0 0.0
    %890 = vmatprep.subr.mxu0 0.0
    %891 = vmatpush1.msra.mxu0 0.0
    %892 = vmatprep.subr.mxu0 0.0
    %893 = vmatpush1.msra.mxu0 0.0
    %894 = vmatprep.subr.mxu0 0.0
    %895 = vmatpush1.msra.mxu0 0.0
    %896 = vmatprep.subr.mxu0 0.0
    %897 = vmatpush1.msra.mxu0 0.0
    %898 = vmatprep.subr.mxu0 0.0
    %899 = vmatpush1.msra.mxu0 0.0
    %900 = vmatprep.subr.mxu0 0.0
    %901 = vmatpush1.msra.mxu0 0.0
    %902 = vmatprep.subr.mxu0 0.0
    %903 = vmatpush1.msra.mxu0 0.0
    %904 = vmatprep.subr.mxu0 0.0
    %905 = vmatpush1.msra.mxu0 0.0
    %906 = vmatprep.mubr.f32.mxu0 0.0
    %907 = vmatmul.mubr.f32.gmra.mrb[0].mxu0 %v837
    %v908 = vpop.f32.mrb[0].mxu0
    %v909 = vadd.f32 0.0, %v908
    %v910 = vpop.f32.mrb[0].mxu0
    %911 = vmatprep.mubr.f32.mxu0 0.0
    %912 = vmatmul.mubr.f32.gmra.mrb[0].mxu0 %v840
    %v913 = vpop.f32.mrb[0].mxu0
    %v914 = vadd.f32 0.0, %v913
    %v915 = vpop.f32.mrb[0].mxu0
    %916 = vdwg.mxu0
    %v917 = vadd.f32 %v751, %v909
    %v918 = vadd.f32 %v752, %v914
    %v919 = vadd.f32 %v917, %v140
    %v920 = vadd.f32 %v918, %v140
    %v921 = vsel %vm206, %v919, 0.0
    %922 = vadd.xlane.f32.xlu0 %v921
    %v923 = vpop.xlane.xlu0 %922
    %v924 = vsel %vm206, %v920, 0.0
    %925 = vadd.xlane.f32.xlu0 %v924
    %v926 = vpop.xlane.xlu0 %925
    %v927 = vrcp.pop 32.0
    %v928 = vmul.f32 %v923, %v927
    %v929 = vmul.f32 %v926, %v927
    %v930 = vsub.f32 %v919, %v928
    %v931 = vsub.f32 %v920, %v929
    %v932 = vmul.f32 %v930, %v930
    %v933 = vmul.f32 %v931, %v931
    %v934 = vsel %vm206, %v932, 0.0
    %935 = vadd.xlane.f32.xlu0 %v934
    %v936 = vpop.xlane.xlu0 %935
    %v937 = vsel %vm206, %v933, 0.0
    %938 = vadd.xlane.f32.xlu0 %v937
    %v939 = vpop.xlane.xlu0 %938
    %v940 = vmul.f32 %v936, %v927
    %v941 = vmul.f32 %v939, %v927
    %v942 = vadd.f32 %v940, 1e-05
    %v943 = vadd.f32 %v941, 1e-05
    %v944 = vrsqrt.pop %v942
    %v945 = vrsqrt.pop %v943
    %v946 = vmul.f32 %v930, %v944
    %v947 = vmul.f32 %v931, %v945
    %v948 = vmul.f32 %v946, %v147
    %v949 = vmul.f32 %v947, %v147
    %v950 = vadd.f32 %v948, %v154
    %v951 = vadd.f32 %v949, %v154
    %v952 = vadd.f32 %v63, %v950
    %v953 = vadd.f32 %v64, %v951
    %v955 = vsel %vm308, %v116, 0
    %v958 = vsel %vm308, %v117, 0
    %960 = vmatprep.subr.mxu0 0.0
    %961 = vmatpush1.msra.mxu0 %v952
    %962 = vmatprep.subr.mxu0 0.0
    %963 = vmatpush1.msra.mxu0 %v953
    %964 = vmatprep.subr.mxu0 0.0
    %965 = vmatpush1.msra.mxu0 0.0
    %966 = vmatprep.subr.mxu0 0.0
    %967 = vmatpush1.msra.mxu0 0.0
    %968 = vmatprep.subr.mxu0 0.0
    %969 = vmatpush1.msra.mxu0 0.0
    %970 = vmatprep.subr.mxu0 0.0
    %971 = vmatpush1.msra.mxu0 0.0
    %972 = vmatprep.subr.mxu0 0.0
    %973 = vmatpush1.msra.mxu0 0.0
    %974 = vmatprep.subr.mxu0 0.0
    %975 = vmatpush1.msra.mxu0 0.0
    %976 = vmatprep.subr.mxu0 0.0
    %977 = vmatpush1.msra.mxu0 0.0
    %978 = vmatprep.subr.mxu0 0.0
    %979 = vmatpush1.msra.mxu0 0.0
    %980 = vmatprep.subr.mxu0 0.0
    %981 = vmatpush1.msra.mxu0 0.0
    %982 = vmatprep.subr.mxu0 0.0
    %983 = vmatpush1.msra.mxu0 0.0
    %984 = vmatprep.subr.mxu0 0.0
    %985 = vmatpush1.msra.mxu0 0.0
    %986 = vmatprep.subr.mxu0 0.0
    %987 = vmatpush1.msra.mxu0 0.0
    %988 = vmatprep.subr.mxu0 0.0
    %989 = vmatpush1.msra.mxu0 0.0
    %990 = vmatprep.subr.mxu0 0.0
    %991 = vmatpush1.msra.mxu0 0.0
    %992 = vmatprep.subr.mxu0 0.0
    %993 = vmatpush1.msra.mxu0 0.0
    %994 = vmatprep.subr.mxu0 0.0
    %995 = vmatpush1.msra.mxu0 0.0
    %996 = vmatprep.subr.mxu0 0.0
    %997 = vmatpush1.msra.mxu0 0.0
    %998 = vmatprep.subr.mxu0 0.0
    %999 = vmatpush1.msra.mxu0 0.0
    %1000 = vmatprep.subr.mxu0 0.0
    %1001 = vmatpush1.msra.mxu0 0.0
    %1002 = vmatprep.subr.mxu0 0.0
    %1003 = vmatpush1.msra.mxu0 0.0
    %1004 = vmatprep.subr.mxu0 0.0
    %1005 = vmatpush1.msra.mxu0 0.0
    %1006 = vmatprep.subr.mxu0 0.0
    %1007 = vmatpush1.msra.mxu0 0.0
    %1008 = vmatprep.subr.mxu0 0.0
    %1009 = vmatpush1.msra.mxu0 0.0
    %1010 = vmatprep.subr.mxu0 0.0
    %1011 = vmatpush1.msra.mxu0 0.0
    %1012 = vmatprep.subr.mxu0 0.0
    %1013 = vmatpush1.msra.mxu0 0.0
    %1014 = vmatprep.subr.mxu0 0.0
    %1015 = vmatpush1.msra.mxu0 0.0
    %1016 = vmatprep.subr.mxu0 0.0
    %1017 = vmatpush1.msra.mxu0 0.0
    %1018 = vmatprep.subr.mxu0 0.0
    %1019 = vmatpush1.msra.mxu0 0.0
    %1020 = vmatprep.subr.mxu0 0.0
    %1021 = vmatpush1.msra.mxu0 0.0
    %1022 = vmatprep.subr.mxu0 0.0
    %1023 = vmatpush1.msra.mxu0 0.0
    %1024 = vmatprep.mubr.f32.mxu0 0.0
    %1025 = vmatmul.mubr.f32.gmra.mrb[0].mxu0 %v955
    %v1026 = vpop.f32.mrb[0].mxu0
    %v1027 = vadd.f32 0.0, %v1026
    %v1028 = vpop.f32.mrb[0].mxu0
    %1029 = vmatprep.mubr.f32.mxu0 0.0
    %1030 = vmatmul.mubr.f32.gmra.mrb[0].mxu0 %v958
    %v1031 = vpop.f32.mrb[0].mxu0
    %v1032 = vadd.f32 0.0, %v1031
    %v1033 = vpop.f32.mrb[0].mxu0
    %1034 = vdwg.mxu0
    %v1035 = vsub.f32 %v952, %v1027
    %v1036 = vsub.f32 %v953, %v1032
    %v1037 = vmul.f32 %v1035, %v1035
    %v1038 = vmul.f32 %v1036, %v1036
    %1039 = vmatprep.subr.mxu0 0.0
    %1040 = vmatpush1.msra.mxu0 %v1037
    %1041 = vmatprep.subr.mxu0 0.0
    %1042 = vmatpush1.msra.mxu0 %v1038
    %1043 = vmatprep.subr.mxu0 0.0
    %1044 = vmatpush1.msra.mxu0 0.0
    %1045 = vmatprep.subr.mxu0 0.0
    %1046 = vmatpush1.msra.mxu0 0.0
    %1047 = vmatprep.subr.mxu0 0.0
    %1048 = vmatpush1.msra.mxu0 0.0
    %1049 = vmatprep.subr.mxu0 0.0
    %1050 = vmatpush1.msra.mxu0 0.0
    %1051 = vmatprep.subr.mxu0 0.0
    %1052 = vmatpush1.msra.mxu0 0.0
    %1053 = vmatprep.subr.mxu0 0.0
    %1054 = vmatpush1.msra.mxu0 0.0
    %1055 = vmatprep.subr.mxu0 0.0
    %1056 = vmatpush1.msra.mxu0 0.0
    %1057 = vmatprep.subr.mxu0 0.0
    %1058 = vmatpush1.msra.mxu0 0.0
    %1059 = vmatprep.subr.mxu0 0.0
    %1060 = vmatpush1.msra.mxu0 0.0
    %1061 = vmatprep.subr.mxu0 0.0
    %1062 = vmatpush1.msra.mxu0 0.0
    %1063 = vmatprep.subr.mxu0 0.0
    %1064 = vmatpush1.msra.mxu0 0.0
    %1065 = vmatprep.subr.mxu0 0.0
    %1066 = vmatpush1.msra.mxu0 0.0
    %1067 = vmatprep.subr.mxu0 0.0
    %1068 = vmatpush1.msra.mxu0 0.0
    %1069 = vmatprep.subr.mxu0 0.0
    %1070 = vmatpush1.msra.mxu0 0.0
    %1071 = vmatprep.subr.mxu0 0.0
    %1072 = vmatpush1.msra.mxu0 0.0
    %1073 = vmatprep.subr.mxu0 0.0
    %1074 = vmatpush1.msra.mxu0 0.0
    %1075 = vmatprep.subr.mxu0 0.0
    %1076 = vmatpush1.msra.mxu0 0.0
    %1077 = vmatprep.subr.mxu0 0.0
    %1078 = vmatpush1.msra.mxu0 0.0
    %1079 = vmatprep.subr.mxu0 0.0
    %1080 = vmatpush1.msra.mxu0 0.0
    %1081 = vmatprep.subr.mxu0 0.0
    %1082 = vmatpush1.msra.mxu0 0.0
    %1083 = vmatprep.subr.mxu0 0.0
    %1084 = vmatpush1.msra.mxu0 0.0
    %1085 = vmatprep.subr.mxu0 0.0
    %1086 = vmatpush1.msra.mxu0 0.0
    %1087 = vmatprep.subr.mxu0 0.0
    %1088 = vmatpush1.msra.mxu0 0.0
    %1089 = vmatprep.subr.mxu0 0.0
    %1090 = vmatpush1.msra.mxu0 0.0
    %1091 = vmatprep.subr.mxu0 0.0
    %1092 = vmatpush1.msra.mxu0 0.0
    %1093 = vmatprep.subr.mxu0 0.0
    %1094 = vmatpush1.msra.mxu0 0.0
    %1095 = vmatprep.subr.mxu0 0.0
    %1096 = vmatpush1.msra.mxu0 0.0
    %1097 = vmatprep.subr.mxu0 0.0
    %1098 = vmatpush1.msra.mxu0 0.0
    %1099 = vmatprep.subr.mxu0 0.0
    %1100 = vmatpush1.msra.mxu0 0.0
    %1101 = vmatprep.subr.mxu0 0.0
    %1102 = vmatpush1.msra.mxu0 0.0
    %1103 = vmatprep.mubr.f32.mxu0 0.0
    %1104 = vmatmul.mubr.f32.gmra.mrb[0].mxu0 %v955
    %v1105 = vpop.f32.mrb[0].mxu0
    %v1106 = vadd.f32 1e-05, %v1105
    %v1107 = vpop.f32.mrb[0].mxu0
    %1108 = vmatprep.mubr.f32.mxu0 0.0
    %1109 = vmatmul.mubr.f32.gmra.mrb[0].mxu0 %v958
    %v1110 = vpop.f32.mrb[0].mxu0
    %v1111 = vadd.f32 1e-05, %v1110
    %v1112 = vpop.f32.mrb[0].mxu0
    %1113 = vdwg.mxu0
    %v1114 = vrsqrt.pop %v1106
    %v1115 = vrsqrt.pop %v1111
    %v1116 = vmul.f32 %v1035, %v1114
    %v1117 = vmul.f32 %v1036, %v1115
    %v1118 = vmax.f32 %v1116, 0.0
    %v1119 = vmax.f32 %v1117, 0.0
    %v1121 = vsel %vm206, %v1118, 0
    %v1124 = vsel %vm206, %v1119, 0
    %1126 = vmatprep.subr.mxu0 0.0
    %1127 = vmatpush1.msra.mxu0 %v198
    %1128 = vmatprep.subr.mxu0 0.0
    %1129 = vmatpush1.msra.mxu0 %v199
    %1130 = vmatprep.subr.mxu0 0.0
    %1131 = vmatpush1.msra.mxu0 %v200
    %1132 = vmatprep.subr.mxu0 0.0
    %1133 = vmatpush1.msra.mxu0 %v201
    %1134 = vmatprep.subr.mxu0 0.0
    %1135 = vmatpush1.msra.mxu0 0.0
    %1136 = vmatprep.subr.mxu0 0.0
    %1137 = vmatpush1.msra.mxu0 0.0
    %1138 = vmatprep.subr.mxu0 0.0
    %1139 = vmatpush1.msra.mxu0 0.0
    %1140 = vmatprep.subr.mxu0 0.0
    %1141 = vmatpush1.msra.mxu0 0.0
    %1142 = vmatprep.subr.mxu0 0.0
    %1143 = vmatpush1.msra.mxu0 0.0
    %1144 = vmatprep.subr.mxu0 0.0
    %1145 = vmatpush1.msra.mxu0 0.0
    %1146 = vmatprep.subr.mxu0 0.0
    %1147 = vmatpush1.msra.mxu0 0.0
    %1148 = vmatprep.subr.mxu0 0.0
    %1149 = vmatpush1.msra.mxu0 0.0
    %1150 = vmatprep.subr.mxu0 0.0
    %1151 = vmatpush1.msra.mxu0 0.0
    %1152 = vmatprep.subr.mxu0 0.0
    %1153 = vmatpush1.msra.mxu0 0.0
    %1154 = vmatprep.subr.mxu0 0.0
    %1155 = vmatpush1.msra.mxu0 0.0
    %1156 = vmatprep.subr.mxu0 0.0
    %1157 = vmatpush1.msra.mxu0 0.0
    %1158 = vmatprep.subr.mxu0 0.0
    %1159 = vmatpush1.msra.mxu0 0.0
    %1160 = vmatprep.subr.mxu0 0.0
    %1161 = vmatpush1.msra.mxu0 0.0
    %1162 = vmatprep.subr.mxu0 0.0
    %1163 = vmatpush1.msra.mxu0 0.0
    %1164 = vmatprep.subr.mxu0 0.0
    %1165 = vmatpush1.msra.mxu0 0.0
    %1166 = vmatprep.subr.mxu0 0.0
    %1167 = vmatpush1.msra.mxu0 0.0
    %1168 = vmatprep.subr.mxu0 0.0
    %1169 = vmatpush1.msra.mxu0 0.0
    %1170 = vmatprep.subr.mxu0 0.0
    %1171 = vmatpush1.msra.mxu0 0.0
    %1172 = vmatprep.subr.mxu0 0.0
    %1173 = vmatpush1.msra.mxu0 0.0
    %1174 = vmatprep.subr.mxu0 0.0
    %1175 = vmatpush1.msra.mxu0 0.0
    %1176 = vmatprep.subr.mxu0 0.0
    %1177 = vmatpush1.msra.mxu0 0.0
    %1178 = vmatprep.subr.mxu0 0.0
    %1179 = vmatpush1.msra.mxu0 0.0
    %1180 = vmatprep.subr.mxu0 0.0
    %1181 = vmatpush1.msra.mxu0 0.0
    %1182 = vmatprep.subr.mxu0 0.0
    %1183 = vmatpush1.msra.mxu0 0.0
    %1184 = vmatprep.subr.mxu0 0.0
    %1185 = vmatpush1.msra.mxu0 0.0
    %1186 = vmatprep.subr.mxu0 0.0
    %1187 = vmatpush1.msra.mxu0 0.0
    %1188 = vmatprep.subr.mxu0 0.0
    %1189 = vmatpush1.msra.mxu0 0.0
    %1190 = vmatprep.mubr.f32.mxu0 0.0
    %1191 = vmatmul.mubr.f32.gmra.mrb[0].mxu0 %v1121
    %v1192 = vpop.f32.mrb[0].mxu0
    %v1193 = vadd.f32 0.0, %v1192
    %v1194 = vpop.f32.mrb[0].mxu0
    %1195 = vmatprep.mubr.f32.mxu0 0.0
    %1196 = vmatmul.mubr.f32.gmra.mrb[0].mxu0 %v1124
    %v1197 = vpop.f32.mrb[0].mxu0
    %v1198 = vadd.f32 0.0, %v1197
    %v1199 = vpop.f32.mrb[0].mxu0
    %1200 = vdwg.mxu0
    %v1201 = vmul.f32 %v1193, %v1193
    %v1202 = vmul.f32 %v1198, %v1198
    %v1203 = vsel %vm308, %v1201, 0.0
    %1204 = vadd.xlane.f32.xlu0 %v1203
    %v1205 = vpop.xlane.xlu0 %1204
    %v1206 = vsel %vm308, %v1202, 0.0
    %1207 = vadd.xlane.f32.xlu0 %v1206
    %v1208 = vpop.xlane.xlu0 %1207
    %v1209 = vmax.f32 %v1205, 1e-24
    %v1210 = vmax.f32 %v1208, 1e-24
    %v1211 = vrsqrt.pop %v1209
    %v1212 = vrsqrt.pop %v1210
    %v1213 = vmul.f32 %v1193, %v1211
    %v1214 = vmul.f32 %v1198, %v1212
    %v1216 = vsel %vm308, %v1213, 0
    %v1219 = vsel %vm308, %v1214, 0
    %v1222 = vsel %vm308, %v329, 0
    %v1225 = vsel %vm308, %v330, 0
    %v1228 = vsel %vm308, %v331, 0
    %v1231 = vsel %vm308, %v332, 0
    %1233 = vmatprep.subr.mxu0 0.0
    %1234 = vmatpush1.xpose.msra.mxu0 %v1222
    %1235 = vmatprep.subr.mxu0 0.0
    %1236 = vmatpush1.xpose.msra.mxu0 %v1225
    %1237 = vmatprep.subr.mxu0 0.0
    %1238 = vmatpush1.xpose.msra.mxu0 %v1228
    %1239 = vmatprep.subr.mxu0 0.0
    %1240 = vmatpush1.xpose.msra.mxu0 %v1231
    %1241 = vmatprep.subr.mxu0 0.0
    %1242 = vmatpush1.xpose.msra.mxu0 0.0
    %1243 = vmatprep.subr.mxu0 0.0
    %1244 = vmatpush1.xpose.msra.mxu0 0.0
    %1245 = vmatprep.subr.mxu0 0.0
    %1246 = vmatpush1.xpose.msra.mxu0 0.0
    %1247 = vmatprep.subr.mxu0 0.0
    %1248 = vmatpush1.xpose.msra.mxu0 0.0
    %1249 = vmatprep.subr.mxu0 0.0
    %1250 = vmatpush1.xpose.msra.mxu0 0.0
    %1251 = vmatprep.subr.mxu0 0.0
    %1252 = vmatpush1.xpose.msra.mxu0 0.0
    %1253 = vmatprep.subr.mxu0 0.0
    %1254 = vmatpush1.xpose.msra.mxu0 0.0
    %1255 = vmatprep.subr.mxu0 0.0
    %1256 = vmatpush1.xpose.msra.mxu0 0.0
    %1257 = vmatprep.subr.mxu0 0.0
    %1258 = vmatpush1.xpose.msra.mxu0 0.0
    %1259 = vmatprep.subr.mxu0 0.0
    %1260 = vmatpush1.xpose.msra.mxu0 0.0
    %1261 = vmatprep.subr.mxu0 0.0
    %1262 = vmatpush1.xpose.msra.mxu0 0.0
    %1263 = vmatprep.subr.mxu0 0.0
    %1264 = vmatpush1.xpose.msra.mxu0 0.0
    %1265 = vmatprep.subr.mxu0 0.0
    %1266 = vmatpush1.xpose.msra.mxu0 0.0
    %1267 = vmatprep.subr.mxu0 0.0
    %1268 = vmatpush1.xpose.msra.mxu0 0.0
    %1269 = vmatprep.subr.mxu0 0.0
    %1270 = vmatpush1.xpose.msra.mxu0 0.0
    %1271 = vmatprep.subr.mxu0 0.0
    %1272 = vmatpush1.xpose.msra.mxu0 0.0
    %1273 = vmatprep.subr.mxu0 0.0
    %1274 = vmatpush1.xpose.msra.mxu0 0.0
    %1275 = vmatprep.subr.mxu0 0.0
    %1276 = vmatpush1.xpose.msra.mxu0 0.0
    %1277 = vmatprep.subr.mxu0 0.0
    %1278 = vmatpush1.xpose.msra.mxu0 0.0
    %1279 = vmatprep.subr.mxu0 0.0
    %1280 = vmatpush1.xpose.msra.mxu0 0.0
    %1281 = vmatprep.subr.mxu0 0.0
    %1282 = vmatpush1.xpose.msra.mxu0 0.0
    %1283 = vmatprep.subr.mxu0 0.0
    %1284 = vmatpush1.xpose.msra.mxu0 0.0
    %1285 = vmatprep.subr.mxu0 0.0
    %1286 = vmatpush1.xpose.msra.mxu0 0.0
    %1287 = vmatprep.subr.mxu0 0.0
    %1288 = vmatpush1.xpose.msra.mxu0 0.0
    %1289 = vmatprep.subr.mxu0 0.0
    %1290 = vmatpush1.xpose.msra.mxu0 0.0
    %1291 = vmatprep.subr.mxu0 0.0
    %1292 = vmatpush1.xpose.msra.mxu0 0.0
    %1293 = vmatprep.subr.mxu0 0.0
    %1294 = vmatpush1.xpose.msra.mxu0 0.0
    %1295 = vmatprep.subr.mxu0 0.0
    %1296 = vmatpush1.xpose.msra.mxu0 0.0
    %1297 = vmatprep.mubr.f32.mxu0 0.0
    %1298 = vmatmul.mubr.f32.gmra.mrb[0].mxu0 %v1216
    %v1299 = vpop.f32.mrb[0].mxu0
    %v1300 = vadd.f32 0.0, %v1299
    %v1301 = vpop.f32.mrb[0].mxu0
    %1302 = vmatprep.mubr.f32.mxu0 0.0
    %1303 = vmatmul.mubr.f32.gmra.mrb[0].mxu0 %v1219
    %v1304 = vpop.f32.mrb[0].mxu0
    %v1305 = vadd.f32 0.0, %v1304
    %v1306 = vpop.f32.mrb[0].mxu0
    %1307 = vdwg.mxu0
    %v1308 = vsel %vm206, %v1300, -inf
    %1309 = vmax.xlane.f32.xlu0 %v1308
    %v1310 = vpop.xlane.xlu0 %1309
    %v1311 = vsel %vm206, %v1305, -inf
    %1312 = vmax.xlane.f32.xlu0 %v1311
    %v1313 = vpop.xlane.xlu0 %1312
    %v1314 = vsub.f32 %v1300, %v1310
    %v1315 = vsub.f32 %v1305, %v1313
    %v1316 = vmul.f32 %v1314, 1.442695
    %v1317 = vpow.pop %v1316
    %v1318 = vmul.f32 %v1315, 1.442695
    %v1319 = vpow.pop %v1318
    %v1320 = vmul.f32 %v1317, %v114
    %v1321 = vmul.f32 %v1319, %v115
    %v1322 = vsel %vm206, %v1320, 0.0
    %1323 = vadd.xlane.f32.xlu0 %v1322
    %v1324 = vpop.xlane.xlu0 %1323
    %v1325 = vsel %vm206, %v1321, 0.0
    %1326 = vadd.xlane.f32.xlu0 %v1325
    %v1327 = vpop.xlane.xlu0 %1326
    %v1328 = vrcp.pop %v1324
    %v1329 = vmul.f32 1.0, %v1328
    %v1330 = vrcp.pop %v1327
    %v1331 = vmul.f32 1.0, %v1330
    %v1332 = vmul.f32 %v1320, %v1329
    %v1333 = vmul.f32 %v1321, %v1331
    %v1334 = vsel %vm206, %v1332, 0.0
    %v1335 = vsel %vm206, %v1333, 0.0
    %v1336 = vadd.f32 %v1334, %v1335
    %v1337 = vrot.slane %v1336, 4
    %v1338 = vadd.f32 %v1336, %v1337
    %v1339 = vrot.slane %v1338, 2
    %v1340 = vadd.f32 %v1338, %v1339
    %v1341 = vrot.slane %v1340, 1
    %v1342 = vadd.f32 %v1340, %v1341
    %v1343 = vadd.f32 %v1342, 1e-09
    %v1344 = vrcp.pop %v1343
    %v1345 = vmul.f32 1.0, %v1344
    %v1346 = vmul.f32 %v1332, %v1345
    %v1347 = vmul.f32 %v1333, %v1345
    %1352 = vrot.lane.b32.xlu0 %v286, 112
    %v1353 = vpop.permute.xlu0 %1352
    %1354 = vrot.lane.b32.xlu0 %v291, 112
    %v1355 = vpop.permute.xlu0 %1354
    %1356 = vrot.lane.b32.xlu0 %v296, 112
    %v1357 = vpop.permute.xlu0 %1356
    %1358 = vrot.lane.b32.xlu0 %v301, 112
    %v1359 = vpop.permute.xlu0 %1358
    %v1365 = vsel %vm206, %v1346, 0
    %v1368 = vsel %vm206, %v1347, 0
    %1370 = vmatprep.subr.mxu0 0.0
    %1371 = vmatpush1.msra.mxu0 %v1353
    %1372 = vmatprep.subr.mxu0 0.0
    %1373 = vmatpush1.msra.mxu0 %v1355
    %1374 = vmatprep.subr.mxu0 0.0
    %1375 = vmatpush1.msra.mxu0 %v1357
    %1376 = vmatprep.subr.mxu0 0.0
    %1377 = vmatpush1.msra.mxu0 %v1359
    %1378 = vmatprep.subr.mxu0 0.0
    %1379 = vmatpush1.msra.mxu0 0.0
    %1380 = vmatprep.subr.mxu0 0.0
    %1381 = vmatpush1.msra.mxu0 0.0
    %1382 = vmatprep.subr.mxu0 0.0
    %1383 = vmatpush1.msra.mxu0 0.0
    %1384 = vmatprep.subr.mxu0 0.0
    %1385 = vmatpush1.msra.mxu0 0.0
    %1386 = vmatprep.subr.mxu0 0.0
    %1387 = vmatpush1.msra.mxu0 0.0
    %1388 = vmatprep.subr.mxu0 0.0
    %1389 = vmatpush1.msra.mxu0 0.0
    %1390 = vmatprep.subr.mxu0 0.0
    %1391 = vmatpush1.msra.mxu0 0.0
    %1392 = vmatprep.subr.mxu0 0.0
    %1393 = vmatpush1.msra.mxu0 0.0
    %1394 = vmatprep.subr.mxu0 0.0
    %1395 = vmatpush1.msra.mxu0 0.0
    %1396 = vmatprep.subr.mxu0 0.0
    %1397 = vmatpush1.msra.mxu0 0.0
    %1398 = vmatprep.subr.mxu0 0.0
    %1399 = vmatpush1.msra.mxu0 0.0
    %1400 = vmatprep.subr.mxu0 0.0
    %1401 = vmatpush1.msra.mxu0 0.0
    %1402 = vmatprep.subr.mxu0 0.0
    %1403 = vmatpush1.msra.mxu0 0.0
    %1404 = vmatprep.subr.mxu0 0.0
    %1405 = vmatpush1.msra.mxu0 0.0
    %1406 = vmatprep.subr.mxu0 0.0
    %1407 = vmatpush1.msra.mxu0 0.0
    %1408 = vmatprep.subr.mxu0 0.0
    %1409 = vmatpush1.msra.mxu0 0.0
    %1410 = vmatprep.subr.mxu0 0.0
    %1411 = vmatpush1.msra.mxu0 0.0
    %1412 = vmatprep.subr.mxu0 0.0
    %1413 = vmatpush1.msra.mxu0 0.0
    %1414 = vmatprep.subr.mxu0 0.0
    %1415 = vmatpush1.msra.mxu0 0.0
    %1416 = vmatprep.subr.mxu0 0.0
    %1417 = vmatpush1.msra.mxu0 0.0
    %1418 = vmatprep.subr.mxu0 0.0
    %1419 = vmatpush1.msra.mxu0 0.0
    %1420 = vmatprep.subr.mxu0 0.0
    %1421 = vmatpush1.msra.mxu0 0.0
    %1422 = vmatprep.subr.mxu0 0.0
    %1423 = vmatpush1.msra.mxu0 0.0
    %1424 = vmatprep.subr.mxu0 0.0
    %1425 = vmatpush1.msra.mxu0 0.0
    %1426 = vmatprep.subr.mxu0 0.0
    %1427 = vmatpush1.msra.mxu0 0.0
    %1428 = vmatprep.subr.mxu0 0.0
    %1429 = vmatpush1.msra.mxu0 0.0
    %1430 = vmatprep.subr.mxu0 0.0
    %1431 = vmatpush1.msra.mxu0 0.0
    %1432 = vmatprep.subr.mxu0 0.0
    %1433 = vmatpush1.msra.mxu0 0.0
    %1434 = vmatprep.mubr.f32.mxu0 0.0
    %1435 = vmatmul.mubr.f32.gmra.mrb[0].mxu0 %v1365
    %v1436 = vpop.f32.mrb[0].mxu0
    %v1437 = vadd.f32 0.0, %v1436
    %v1438 = vpop.f32.mrb[0].mxu0
    %1439 = vmatprep.mubr.f32.mxu0 0.0
    %1440 = vmatmul.mubr.f32.gmra.mrb[0].mxu0 %v1368
    %v1441 = vpop.f32.mrb[0].mxu0
    %v1442 = vadd.f32 0.0, %v1441
    %v1443 = vpop.f32.mrb[0].mxu0
    %1444 = vdwg.mxu0
    %v1445 = vsub.f32 %v1118, %v1437
    %v1446 = vsub.f32 %v1119, %v1442
    %v1448 = vsel %vm206, %v1445, 0
    %v1451 = vsel %vm206, %v1446, 0
    %1453 = vmatprep.subr.mxu0 0.0
    %1454 = vmatpush1.msra.mxu0 %v156
    %1455 = vmatprep.subr.mxu0 0.0
    %1456 = vmatpush1.msra.mxu0 %v157
    %1457 = vmatprep.subr.mxu0 0.0
    %1458 = vmatpush1.msra.mxu0 %v158
    %1459 = vmatprep.subr.mxu0 0.0
    %1460 = vmatpush1.msra.mxu0 %v159
    %1461 = vmatprep.subr.mxu0 0.0
    %1462 = vmatpush1.msra.mxu0 0.0
    %1463 = vmatprep.subr.mxu0 0.0
    %1464 = vmatpush1.msra.mxu0 0.0
    %1465 = vmatprep.subr.mxu0 0.0
    %1466 = vmatpush1.msra.mxu0 0.0
    %1467 = vmatprep.subr.mxu0 0.0
    %1468 = vmatpush1.msra.mxu0 0.0
    %1469 = vmatprep.subr.mxu0 0.0
    %1470 = vmatpush1.msra.mxu0 0.0
    %1471 = vmatprep.subr.mxu0 0.0
    %1472 = vmatpush1.msra.mxu0 0.0
    %1473 = vmatprep.subr.mxu0 0.0
    %1474 = vmatpush1.msra.mxu0 0.0
    %1475 = vmatprep.subr.mxu0 0.0
    %1476 = vmatpush1.msra.mxu0 0.0
    %1477 = vmatprep.subr.mxu0 0.0
    %1478 = vmatpush1.msra.mxu0 0.0
    %1479 = vmatprep.subr.mxu0 0.0
    %1480 = vmatpush1.msra.mxu0 0.0
    %1481 = vmatprep.subr.mxu0 0.0
    %1482 = vmatpush1.msra.mxu0 0.0
    %1483 = vmatprep.subr.mxu0 0.0
    %1484 = vmatpush1.msra.mxu0 0.0
    %1485 = vmatprep.subr.mxu0 0.0
    %1486 = vmatpush1.msra.mxu0 0.0
    %1487 = vmatprep.subr.mxu0 0.0
    %1488 = vmatpush1.msra.mxu0 0.0
    %1489 = vmatprep.subr.mxu0 0.0
    %1490 = vmatpush1.msra.mxu0 0.0
    %1491 = vmatprep.subr.mxu0 0.0
    %1492 = vmatpush1.msra.mxu0 0.0
    %1493 = vmatprep.subr.mxu0 0.0
    %1494 = vmatpush1.msra.mxu0 0.0
    %1495 = vmatprep.subr.mxu0 0.0
    %1496 = vmatpush1.msra.mxu0 0.0
    %1497 = vmatprep.subr.mxu0 0.0
    %1498 = vmatpush1.msra.mxu0 0.0
    %1499 = vmatprep.subr.mxu0 0.0
    %1500 = vmatpush1.msra.mxu0 0.0
    %1501 = vmatprep.subr.mxu0 0.0
    %1502 = vmatpush1.msra.mxu0 0.0
    %1503 = vmatprep.subr.mxu0 0.0
    %1504 = vmatpush1.msra.mxu0 0.0
    %1505 = vmatprep.subr.mxu0 0.0
    %1506 = vmatpush1.msra.mxu0 0.0
    %1507 = vmatprep.subr.mxu0 0.0
    %1508 = vmatpush1.msra.mxu0 0.0
    %1509 = vmatprep.subr.mxu0 0.0
    %1510 = vmatpush1.msra.mxu0 0.0
    %1511 = vmatprep.subr.mxu0 0.0
    %1512 = vmatpush1.msra.mxu0 0.0
    %1513 = vmatprep.subr.mxu0 0.0
    %1514 = vmatpush1.msra.mxu0 0.0
    %1515 = vmatprep.subr.mxu0 0.0
    %1516 = vmatpush1.msra.mxu0 0.0
    %1517 = vmatprep.mubr.f32.mxu0 0.0
    %1518 = vmatmul.mubr.f32.gmra.mrb[0].mxu0 %v1448
    %v1519 = vpop.f32.mrb[0].mxu0
    %v1520 = vadd.f32 0.0, %v1519
    %v1521 = vpop.f32.mrb[0].mxu0
    %1522 = vmatprep.mubr.f32.mxu0 0.0
    %1523 = vmatmul.mubr.f32.gmra.mrb[0].mxu0 %v1451
    %v1524 = vpop.f32.mrb[0].mxu0
    %v1525 = vadd.f32 0.0, %v1524
    %v1526 = vpop.f32.mrb[0].mxu0
    %1527 = vdwg.mxu0
    %v1528 = vmax.f32 %v1520, 0.0
    %v1529 = vmax.f32 %v1525, 0.0
    %v1531 = vsel %vm206, %v1528, 0
    %v1534 = vsel %vm206, %v1529, 0
    %1536 = vmatprep.subr.mxu0 0.0
    %1537 = vmatpush1.msra.mxu0 %v160
    %1538 = vmatprep.subr.mxu0 0.0
    %1539 = vmatpush1.msra.mxu0 %v161
    %1540 = vmatprep.subr.mxu0 0.0
    %1541 = vmatpush1.msra.mxu0 %v162
    %1542 = vmatprep.subr.mxu0 0.0
    %1543 = vmatpush1.msra.mxu0 %v163
    %1544 = vmatprep.subr.mxu0 0.0
    %1545 = vmatpush1.msra.mxu0 0.0
    %1546 = vmatprep.subr.mxu0 0.0
    %1547 = vmatpush1.msra.mxu0 0.0
    %1548 = vmatprep.subr.mxu0 0.0
    %1549 = vmatpush1.msra.mxu0 0.0
    %1550 = vmatprep.subr.mxu0 0.0
    %1551 = vmatpush1.msra.mxu0 0.0
    %1552 = vmatprep.subr.mxu0 0.0
    %1553 = vmatpush1.msra.mxu0 0.0
    %1554 = vmatprep.subr.mxu0 0.0
    %1555 = vmatpush1.msra.mxu0 0.0
    %1556 = vmatprep.subr.mxu0 0.0
    %1557 = vmatpush1.msra.mxu0 0.0
    %1558 = vmatprep.subr.mxu0 0.0
    %1559 = vmatpush1.msra.mxu0 0.0
    %1560 = vmatprep.subr.mxu0 0.0
    %1561 = vmatpush1.msra.mxu0 0.0
    %1562 = vmatprep.subr.mxu0 0.0
    %1563 = vmatpush1.msra.mxu0 0.0
    %1564 = vmatprep.subr.mxu0 0.0
    %1565 = vmatpush1.msra.mxu0 0.0
    %1566 = vmatprep.subr.mxu0 0.0
    %1567 = vmatpush1.msra.mxu0 0.0
    %1568 = vmatprep.subr.mxu0 0.0
    %1569 = vmatpush1.msra.mxu0 0.0
    %1570 = vmatprep.subr.mxu0 0.0
    %1571 = vmatpush1.msra.mxu0 0.0
    %1572 = vmatprep.subr.mxu0 0.0
    %1573 = vmatpush1.msra.mxu0 0.0
    %1574 = vmatprep.subr.mxu0 0.0
    %1575 = vmatpush1.msra.mxu0 0.0
    %1576 = vmatprep.subr.mxu0 0.0
    %1577 = vmatpush1.msra.mxu0 0.0
    %1578 = vmatprep.subr.mxu0 0.0
    %1579 = vmatpush1.msra.mxu0 0.0
    %1580 = vmatprep.subr.mxu0 0.0
    %1581 = vmatpush1.msra.mxu0 0.0
    %1582 = vmatprep.subr.mxu0 0.0
    %1583 = vmatpush1.msra.mxu0 0.0
    %1584 = vmatprep.subr.mxu0 0.0
    %1585 = vmatpush1.msra.mxu0 0.0
    %1586 = vmatprep.subr.mxu0 0.0
    %1587 = vmatpush1.msra.mxu0 0.0
    %1588 = vmatprep.subr.mxu0 0.0
    %1589 = vmatpush1.msra.mxu0 0.0
    %1590 = vmatprep.subr.mxu0 0.0
    %1591 = vmatpush1.msra.mxu0 0.0
    %1592 = vmatprep.subr.mxu0 0.0
    %1593 = vmatpush1.msra.mxu0 0.0
    %1594 = vmatprep.subr.mxu0 0.0
    %1595 = vmatpush1.msra.mxu0 0.0
    %1596 = vmatprep.subr.mxu0 0.0
    %1597 = vmatpush1.msra.mxu0 0.0
    %1598 = vmatprep.subr.mxu0 0.0
    %1599 = vmatpush1.msra.mxu0 0.0
    %1600 = vmatprep.mubr.f32.mxu0 0.0
    %1601 = vmatmul.mubr.f32.gmra.mrb[0].mxu0 %v1531
    %v1602 = vpop.f32.mrb[0].mxu0
    %v1603 = vadd.f32 %v169, %v1602
    %v1604 = vpop.f32.mrb[0].mxu0
    %1605 = vmatprep.mubr.f32.mxu0 0.0
    %1606 = vmatmul.mubr.f32.gmra.mrb[0].mxu0 %v1534
    %v1607 = vpop.f32.mrb[0].mxu0
    %v1608 = vadd.f32 %v169, %v1607
    %v1609 = vpop.f32.mrb[0].mxu0
    %1610 = vdwg.mxu0
    %v1611 = vmax.f32 %v1603, 0.0
    %v1612 = vmax.f32 %v1608, 0.0
    %v1614 = vsel %vm308, %v1611, 0
    %v1617 = vsel %vm308, %v1612, 0
    %1619 = vmatprep.subr.mxu0 0.0
    %1620 = vmatpush1.msra.mxu0 %v171
    %1621 = vmatprep.subr.mxu0 0.0
    %1622 = vmatpush1.msra.mxu0 %v172
    %1623 = vmatprep.subr.mxu0 0.0
    %1624 = vmatpush1.msra.mxu0 0.0
    %1625 = vmatprep.subr.mxu0 0.0
    %1626 = vmatpush1.msra.mxu0 0.0
    %1627 = vmatprep.subr.mxu0 0.0
    %1628 = vmatpush1.msra.mxu0 0.0
    %1629 = vmatprep.subr.mxu0 0.0
    %1630 = vmatpush1.msra.mxu0 0.0
    %1631 = vmatprep.subr.mxu0 0.0
    %1632 = vmatpush1.msra.mxu0 0.0
    %1633 = vmatprep.subr.mxu0 0.0
    %1634 = vmatpush1.msra.mxu0 0.0
    %1635 = vmatprep.subr.mxu0 0.0
    %1636 = vmatpush1.msra.mxu0 0.0
    %1637 = vmatprep.subr.mxu0 0.0
    %1638 = vmatpush1.msra.mxu0 0.0
    %1639 = vmatprep.subr.mxu0 0.0
    %1640 = vmatpush1.msra.mxu0 0.0
    %1641 = vmatprep.subr.mxu0 0.0
    %1642 = vmatpush1.msra.mxu0 0.0
    %1643 = vmatprep.subr.mxu0 0.0
    %1644 = vmatpush1.msra.mxu0 0.0
    %1645 = vmatprep.subr.mxu0 0.0
    %1646 = vmatpush1.msra.mxu0 0.0
    %1647 = vmatprep.subr.mxu0 0.0
    %1648 = vmatpush1.msra.mxu0 0.0
    %1649 = vmatprep.subr.mxu0 0.0
    %1650 = vmatpush1.msra.mxu0 0.0
    %1651 = vmatprep.subr.mxu0 0.0
    %1652 = vmatpush1.msra.mxu0 0.0
    %1653 = vmatprep.subr.mxu0 0.0
    %1654 = vmatpush1.msra.mxu0 0.0
    %1655 = vmatprep.subr.mxu0 0.0
    %1656 = vmatpush1.msra.mxu0 0.0
    %1657 = vmatprep.subr.mxu0 0.0
    %1658 = vmatpush1.msra.mxu0 0.0
    %1659 = vmatprep.subr.mxu0 0.0
    %1660 = vmatpush1.msra.mxu0 0.0
    %1661 = vmatprep.subr.mxu0 0.0
    %1662 = vmatpush1.msra.mxu0 0.0
    %1663 = vmatprep.subr.mxu0 0.0
    %1664 = vmatpush1.msra.mxu0 0.0
    %1665 = vmatprep.subr.mxu0 0.0
    %1666 = vmatpush1.msra.mxu0 0.0
    %1667 = vmatprep.subr.mxu0 0.0
    %1668 = vmatpush1.msra.mxu0 0.0
    %1669 = vmatprep.subr.mxu0 0.0
    %1670 = vmatpush1.msra.mxu0 0.0
    %1671 = vmatprep.subr.mxu0 0.0
    %1672 = vmatpush1.msra.mxu0 0.0
    %1673 = vmatprep.subr.mxu0 0.0
    %1674 = vmatpush1.msra.mxu0 0.0
    %1675 = vmatprep.subr.mxu0 0.0
    %1676 = vmatpush1.msra.mxu0 0.0
    %1677 = vmatprep.subr.mxu0 0.0
    %1678 = vmatpush1.msra.mxu0 0.0
    %1679 = vmatprep.subr.mxu0 0.0
    %1680 = vmatpush1.msra.mxu0 0.0
    %1681 = vmatprep.subr.mxu0 0.0
    %1682 = vmatpush1.msra.mxu0 0.0
    %1683 = vmatprep.mubr.f32.mxu0 0.0
    %1684 = vmatmul.mubr.f32.gmra.mrb[0].mxu0 %v1614
    %v1685 = vpop.f32.mrb[0].mxu0
    %v1686 = vadd.f32 0.0, %v1685
    %v1687 = vpop.f32.mrb[0].mxu0
    %1688 = vmatprep.mubr.f32.mxu0 0.0
    %1689 = vmatmul.mubr.f32.gmra.mrb[0].mxu0 %v1617
    %v1690 = vpop.f32.mrb[0].mxu0
    %v1691 = vadd.f32 0.0, %v1690
    %v1692 = vpop.f32.mrb[0].mxu0
    %1693 = vdwg.mxu0
    %v1694 = vadd.f32 %v1528, %v1686
    %v1695 = vadd.f32 %v1529, %v1691
    %v1696 = vadd.f32 %v1694, %v178
    %v1697 = vadd.f32 %v1695, %v178
    %v1698 = vsel %vm206, %v1696, 0.0
    %1699 = vadd.xlane.f32.xlu0 %v1698
    %v1700 = vpop.xlane.xlu0 %1699
    %v1701 = vsel %vm206, %v1697, 0.0
    %1702 = vadd.xlane.f32.xlu0 %v1701
    %v1703 = vpop.xlane.xlu0 %1702
    %v1704 = vmul.f32 %v1700, %v927
    %v1705 = vmul.f32 %v1703, %v927
    %v1706 = vsub.f32 %v1696, %v1704
    %v1707 = vsub.f32 %v1697, %v1705
    %v1708 = vmul.f32 %v1706, %v1706
    %v1709 = vmul.f32 %v1707, %v1707
    %v1710 = vsel %vm206, %v1708, 0.0
    %1711 = vadd.xlane.f32.xlu0 %v1710
    %v1712 = vpop.xlane.xlu0 %1711
    %v1713 = vsel %vm206, %v1709, 0.0
    %1714 = vadd.xlane.f32.xlu0 %v1713
    %v1715 = vpop.xlane.xlu0 %1714
    %v1716 = vmul.f32 %v1712, %v927
    %v1717 = vmul.f32 %v1715, %v927
    %v1718 = vadd.f32 %v1716, 1e-05
    %v1719 = vadd.f32 %v1717, 1e-05
    %v1720 = vrsqrt.pop %v1718
    %v1721 = vrsqrt.pop %v1719
    %v1722 = vmul.f32 %v1706, %v1720
    %v1723 = vmul.f32 %v1707, %v1721
    %v1724 = vmul.f32 %v1722, %v185
    %v1725 = vmul.f32 %v1723, %v185
    %v1726 = vadd.f32 %v1724, %v192
    %v1727 = vadd.f32 %v1725, %v192
    %v1728 = vadd.f32 %v1118, %v1726
    %v1729 = vadd.f32 %v1119, %v1727
    %1730 = vmatprep.subr.mxu0 0.0
    %1731 = vmatpush1.msra.mxu0 %v1728
    %1732 = vmatprep.subr.mxu0 0.0
    %1733 = vmatpush1.msra.mxu0 %v1729
    %1734 = vmatprep.subr.mxu0 0.0
    %1735 = vmatpush1.msra.mxu0 0.0
    %1736 = vmatprep.subr.mxu0 0.0
    %1737 = vmatpush1.msra.mxu0 0.0
    %1738 = vmatprep.subr.mxu0 0.0
    %1739 = vmatpush1.msra.mxu0 0.0
    %1740 = vmatprep.subr.mxu0 0.0
    %1741 = vmatpush1.msra.mxu0 0.0
    %1742 = vmatprep.subr.mxu0 0.0
    %1743 = vmatpush1.msra.mxu0 0.0
    %1744 = vmatprep.subr.mxu0 0.0
    %1745 = vmatpush1.msra.mxu0 0.0
    %1746 = vmatprep.subr.mxu0 0.0
    %1747 = vmatpush1.msra.mxu0 0.0
    %1748 = vmatprep.subr.mxu0 0.0
    %1749 = vmatpush1.msra.mxu0 0.0
    %1750 = vmatprep.subr.mxu0 0.0
    %1751 = vmatpush1.msra.mxu0 0.0
    %1752 = vmatprep.subr.mxu0 0.0
    %1753 = vmatpush1.msra.mxu0 0.0
    %1754 = vmatprep.subr.mxu0 0.0
    %1755 = vmatpush1.msra.mxu0 0.0
    %1756 = vmatprep.subr.mxu0 0.0
    %1757 = vmatpush1.msra.mxu0 0.0
    %1758 = vmatprep.subr.mxu0 0.0
    %1759 = vmatpush1.msra.mxu0 0.0
    %1760 = vmatprep.subr.mxu0 0.0
    %1761 = vmatpush1.msra.mxu0 0.0
    %1762 = vmatprep.subr.mxu0 0.0
    %1763 = vmatpush1.msra.mxu0 0.0
    %1764 = vmatprep.subr.mxu0 0.0
    %1765 = vmatpush1.msra.mxu0 0.0
    %1766 = vmatprep.subr.mxu0 0.0
    %1767 = vmatpush1.msra.mxu0 0.0
    %1768 = vmatprep.subr.mxu0 0.0
    %1769 = vmatpush1.msra.mxu0 0.0
    %1770 = vmatprep.subr.mxu0 0.0
    %1771 = vmatpush1.msra.mxu0 0.0
    %1772 = vmatprep.subr.mxu0 0.0
    %1773 = vmatpush1.msra.mxu0 0.0
    %1774 = vmatprep.subr.mxu0 0.0
    %1775 = vmatpush1.msra.mxu0 0.0
    %1776 = vmatprep.subr.mxu0 0.0
    %1777 = vmatpush1.msra.mxu0 0.0
    %1778 = vmatprep.subr.mxu0 0.0
    %1779 = vmatpush1.msra.mxu0 0.0
    %1780 = vmatprep.subr.mxu0 0.0
    %1781 = vmatpush1.msra.mxu0 0.0
    %1782 = vmatprep.subr.mxu0 0.0
    %1783 = vmatpush1.msra.mxu0 0.0
    %1784 = vmatprep.subr.mxu0 0.0
    %1785 = vmatpush1.msra.mxu0 0.0
    %1786 = vmatprep.subr.mxu0 0.0
    %1787 = vmatpush1.msra.mxu0 0.0
    %1788 = vmatprep.subr.mxu0 0.0
    %1789 = vmatpush1.msra.mxu0 0.0
    %1790 = vmatprep.subr.mxu0 0.0
    %1791 = vmatpush1.msra.mxu0 0.0
    %1792 = vmatprep.subr.mxu0 0.0
    %1793 = vmatpush1.msra.mxu0 0.0
    %1794 = vmatprep.mubr.f32.mxu0 0.0
    %1795 = vmatmul.mubr.f32.gmra.mrb[0].mxu0 %v955
    %v1796 = vpop.f32.mrb[0].mxu0
    %v1797 = vadd.f32 0.0, %v1796
    %v1798 = vpop.f32.mrb[0].mxu0
    %1799 = vmatprep.mubr.f32.mxu0 0.0
    %1800 = vmatmul.mubr.f32.gmra.mrb[0].mxu0 %v958
    %v1801 = vpop.f32.mrb[0].mxu0
    %v1802 = vadd.f32 0.0, %v1801
    %v1803 = vpop.f32.mrb[0].mxu0
    %1804 = vdwg.mxu0
    %v1805 = vsub.f32 %v1728, %v1797
    %v1806 = vsub.f32 %v1729, %v1802
    %v1807 = vmul.f32 %v1805, %v1805
    %v1808 = vmul.f32 %v1806, %v1806
    %1809 = vmatprep.subr.mxu0 0.0
    %1810 = vmatpush1.msra.mxu0 %v1807
    %1811 = vmatprep.subr.mxu0 0.0
    %1812 = vmatpush1.msra.mxu0 %v1808
    %1813 = vmatprep.subr.mxu0 0.0
    %1814 = vmatpush1.msra.mxu0 0.0
    %1815 = vmatprep.subr.mxu0 0.0
    %1816 = vmatpush1.msra.mxu0 0.0
    %1817 = vmatprep.subr.mxu0 0.0
    %1818 = vmatpush1.msra.mxu0 0.0
    %1819 = vmatprep.subr.mxu0 0.0
    %1820 = vmatpush1.msra.mxu0 0.0
    %1821 = vmatprep.subr.mxu0 0.0
    %1822 = vmatpush1.msra.mxu0 0.0
    %1823 = vmatprep.subr.mxu0 0.0
    %1824 = vmatpush1.msra.mxu0 0.0
    %1825 = vmatprep.subr.mxu0 0.0
    %1826 = vmatpush1.msra.mxu0 0.0
    %1827 = vmatprep.subr.mxu0 0.0
    %1828 = vmatpush1.msra.mxu0 0.0
    %1829 = vmatprep.subr.mxu0 0.0
    %1830 = vmatpush1.msra.mxu0 0.0
    %1831 = vmatprep.subr.mxu0 0.0
    %1832 = vmatpush1.msra.mxu0 0.0
    %1833 = vmatprep.subr.mxu0 0.0
    %1834 = vmatpush1.msra.mxu0 0.0
    %1835 = vmatprep.subr.mxu0 0.0
    %1836 = vmatpush1.msra.mxu0 0.0
    %1837 = vmatprep.subr.mxu0 0.0
    %1838 = vmatpush1.msra.mxu0 0.0
    %1839 = vmatprep.subr.mxu0 0.0
    %1840 = vmatpush1.msra.mxu0 0.0
    %1841 = vmatprep.subr.mxu0 0.0
    %1842 = vmatpush1.msra.mxu0 0.0
    %1843 = vmatprep.subr.mxu0 0.0
    %1844 = vmatpush1.msra.mxu0 0.0
    %1845 = vmatprep.subr.mxu0 0.0
    %1846 = vmatpush1.msra.mxu0 0.0
    %1847 = vmatprep.subr.mxu0 0.0
    %1848 = vmatpush1.msra.mxu0 0.0
    %1849 = vmatprep.subr.mxu0 0.0
    %1850 = vmatpush1.msra.mxu0 0.0
    %1851 = vmatprep.subr.mxu0 0.0
    %1852 = vmatpush1.msra.mxu0 0.0
    %1853 = vmatprep.subr.mxu0 0.0
    %1854 = vmatpush1.msra.mxu0 0.0
    %1855 = vmatprep.subr.mxu0 0.0
    %1856 = vmatpush1.msra.mxu0 0.0
    %1857 = vmatprep.subr.mxu0 0.0
    %1858 = vmatpush1.msra.mxu0 0.0
    %1859 = vmatprep.subr.mxu0 0.0
    %1860 = vmatpush1.msra.mxu0 0.0
    %1861 = vmatprep.subr.mxu0 0.0
    %1862 = vmatpush1.msra.mxu0 0.0
    %1863 = vmatprep.subr.mxu0 0.0
    %1864 = vmatpush1.msra.mxu0 0.0
    %1865 = vmatprep.subr.mxu0 0.0
    %1866 = vmatpush1.msra.mxu0 0.0
    %1867 = vmatprep.subr.mxu0 0.0
    %1868 = vmatpush1.msra.mxu0 0.0
    %1869 = vmatprep.subr.mxu0 0.0
    %1870 = vmatpush1.msra.mxu0 0.0
    %1871 = vmatprep.subr.mxu0 0.0
    %1872 = vmatpush1.msra.mxu0 0.0
    %1873 = vmatprep.mubr.f32.mxu0 0.0
    %1874 = vmatmul.mubr.f32.gmra.mrb[0].mxu0 %v955
    %v1875 = vpop.f32.mrb[0].mxu0
    %v1876 = vadd.f32 1e-05, %v1875
    %v1877 = vpop.f32.mrb[0].mxu0
    %1878 = vmatprep.mubr.f32.mxu0 0.0
    %1879 = vmatmul.mubr.f32.gmra.mrb[0].mxu0 %v958
    %v1880 = vpop.f32.mrb[0].mxu0
    %v1881 = vadd.f32 1e-05, %v1880
    %v1882 = vpop.f32.mrb[0].mxu0
    %1883 = vdwg.mxu0
    %v1884 = vrsqrt.pop %v1876
    %v1885 = vrsqrt.pop %v1881
    %v1886 = vmul.f32 %v1805, %v1884
    %v1887 = vmul.f32 %v1806, %v1885
    %v1888 = vmax.f32 %v1886, 0.0
    %v1889 = vmax.f32 %v1887, 0.0
    %v1891 = vsel %vm206, %v1888, 0
    %v1894 = vsel %vm206, %v1889, 0
    %1896 = vmatprep.subr.mxu0 0.0
    %1897 = vmatpush1.msra.mxu0 %v194
    %1898 = vmatprep.subr.mxu0 0.0
    %1899 = vmatpush1.msra.mxu0 %v195
    %1900 = vmatprep.subr.mxu0 0.0
    %1901 = vmatpush1.msra.mxu0 %v196
    %1902 = vmatprep.subr.mxu0 0.0
    %1903 = vmatpush1.msra.mxu0 %v197
    %1904 = vmatprep.subr.mxu0 0.0
    %1905 = vmatpush1.msra.mxu0 0.0
    %1906 = vmatprep.subr.mxu0 0.0
    %1907 = vmatpush1.msra.mxu0 0.0
    %1908 = vmatprep.subr.mxu0 0.0
    %1909 = vmatpush1.msra.mxu0 0.0
    %1910 = vmatprep.subr.mxu0 0.0
    %1911 = vmatpush1.msra.mxu0 0.0
    %1912 = vmatprep.subr.mxu0 0.0
    %1913 = vmatpush1.msra.mxu0 0.0
    %1914 = vmatprep.subr.mxu0 0.0
    %1915 = vmatpush1.msra.mxu0 0.0
    %1916 = vmatprep.subr.mxu0 0.0
    %1917 = vmatpush1.msra.mxu0 0.0
    %1918 = vmatprep.subr.mxu0 0.0
    %1919 = vmatpush1.msra.mxu0 0.0
    %1920 = vmatprep.subr.mxu0 0.0
    %1921 = vmatpush1.msra.mxu0 0.0
    %1922 = vmatprep.subr.mxu0 0.0
    %1923 = vmatpush1.msra.mxu0 0.0
    %1924 = vmatprep.subr.mxu0 0.0
    %1925 = vmatpush1.msra.mxu0 0.0
    %1926 = vmatprep.subr.mxu0 0.0
    %1927 = vmatpush1.msra.mxu0 0.0
    %1928 = vmatprep.subr.mxu0 0.0
    %1929 = vmatpush1.msra.mxu0 0.0
    %1930 = vmatprep.subr.mxu0 0.0
    %1931 = vmatpush1.msra.mxu0 0.0
    %1932 = vmatprep.subr.mxu0 0.0
    %1933 = vmatpush1.msra.mxu0 0.0
    %1934 = vmatprep.subr.mxu0 0.0
    %1935 = vmatpush1.msra.mxu0 0.0
    %1936 = vmatprep.subr.mxu0 0.0
    %1937 = vmatpush1.msra.mxu0 0.0
    %1938 = vmatprep.subr.mxu0 0.0
    %1939 = vmatpush1.msra.mxu0 0.0
    %1940 = vmatprep.subr.mxu0 0.0
    %1941 = vmatpush1.msra.mxu0 0.0
    %1942 = vmatprep.subr.mxu0 0.0
    %1943 = vmatpush1.msra.mxu0 0.0
    %1944 = vmatprep.subr.mxu0 0.0
    %1945 = vmatpush1.msra.mxu0 0.0
    %1946 = vmatprep.subr.mxu0 0.0
    %1947 = vmatpush1.msra.mxu0 0.0
    %1948 = vmatprep.subr.mxu0 0.0
    %1949 = vmatpush1.msra.mxu0 0.0
    %1950 = vmatprep.subr.mxu0 0.0
    %1951 = vmatpush1.msra.mxu0 0.0
    %1952 = vmatprep.subr.mxu0 0.0
    %1953 = vmatpush1.msra.mxu0 0.0
    %1954 = vmatprep.subr.mxu0 0.0
    %1955 = vmatpush1.msra.mxu0 0.0
    %1956 = vmatprep.subr.mxu0 0.0
    %1957 = vmatpush1.msra.mxu0 0.0
    %1958 = vmatprep.subr.mxu0 0.0
    %1959 = vmatpush1.msra.mxu0 0.0
    %1960 = vmatprep.mubr.f32.mxu0 0.0
    %1961 = vmatmul.mubr.f32.gmra.mrb[0].mxu0 %v1891
    %v1962 = vpop.f32.mrb[0].mxu0
    %v1963 = vadd.f32 0.0, %v1962
    %v1964 = vpop.f32.mrb[0].mxu0
    %1965 = vmatprep.mubr.f32.mxu0 0.0
    %1966 = vmatmul.mubr.f32.gmra.mrb[0].mxu0 %v1894
    %v1967 = vpop.f32.mrb[0].mxu0
    %v1968 = vadd.f32 0.0, %v1967
    %v1969 = vpop.f32.mrb[0].mxu0
    %1970 = vdwg.mxu0
    %v1971 = vmul.f32 %v1963, %v1963
    %v1972 = vmul.f32 %v1968, %v1968
    %v1973 = vsel %vm308, %v1971, 0.0
    %1974 = vadd.xlane.f32.xlu0 %v1973
    %v1975 = vpop.xlane.xlu0 %1974
    %v1976 = vsel %vm308, %v1972, 0.0
    %1977 = vadd.xlane.f32.xlu0 %v1976
    %v1978 = vpop.xlane.xlu0 %1977
    %v1979 = vmax.f32 %v1975, 1e-24
    %v1980 = vmax.f32 %v1978, 1e-24
    %v1981 = vrsqrt.pop %v1979
    %v1982 = vrsqrt.pop %v1980
    %v1983 = vmul.f32 %v1963, %v1981
    %v1984 = vmul.f32 %v1968, %v1982
    %1987 = vrot.lane.b32.xlu0 %v1971, 112
    %v1988 = vpop.permute.xlu0 %1987
    %1989 = vrot.lane.b32.xlu0 %v1972, 112
    %v1990 = vpop.permute.xlu0 %1989
    %v1993 = vsel %vm308, %v1988, 0.0
    %1994 = vadd.xlane.f32.xlu0 %v1993
    %v1995 = vpop.xlane.xlu0 %1994
    %v1996 = vsel %vm308, %v1990, 0.0
    %1997 = vadd.xlane.f32.xlu0 %v1996
    %v1998 = vpop.xlane.xlu0 %1997
    %v1999 = vmax.f32 %v1995, 1e-24
    %v2000 = vmax.f32 %v1998, 1e-24
    %v2001 = vrsqrt.pop %v1999
    %v2002 = vrsqrt.pop %v2000
    %v2003 = vmul.f32 %v1963, %v2001
    %v2004 = vmul.f32 %v1968, %v2002
    %2007 = vrot.lane.b32.xlu0 %v2003, 112
    %v2008 = vpop.permute.xlu0 %2007
    %2009 = vrot.lane.b32.xlu0 %v2004, 112
    %v2010 = vpop.permute.xlu0 %2009
    %v2012 = vsel %vm308, %v1983, 0
    %v2015 = vsel %vm308, %v1984, 0
    %v2017 = vsel %vm308, %v2008, 0
    %v2019 = vsel %vm308, %v2010, 0
    %2021 = vmatprep.subr.mxu0 0.0
    %2022 = vmatpush1.xpose.msra.mxu0 %v2017
    %2023 = vmatprep.subr.mxu0 0.0
    %2024 = vmatpush1.xpose.msra.mxu0 %v2019
    %2025 = vmatprep.subr.mxu0 0.0
    %2026 = vmatpush1.xpose.msra.mxu0 0.0
    %2027 = vmatprep.subr.mxu0 0.0
    %2028 = vmatpush1.xpose.msra.mxu0 0.0
    %2029 = vmatprep.subr.mxu0 0.0
    %2030 = vmatpush1.xpose.msra.mxu0 0.0
    %2031 = vmatprep.subr.mxu0 0.0
    %2032 = vmatpush1.xpose.msra.mxu0 0.0
    %2033 = vmatprep.subr.mxu0 0.0
    %2034 = vmatpush1.xpose.msra.mxu0 0.0
    %2035 = vmatprep.subr.mxu0 0.0
    %2036 = vmatpush1.xpose.msra.mxu0 0.0
    %2037 = vmatprep.subr.mxu0 0.0
    %2038 = vmatpush1.xpose.msra.mxu0 0.0
    %2039 = vmatprep.subr.mxu0 0.0
    %2040 = vmatpush1.xpose.msra.mxu0 0.0
    %2041 = vmatprep.subr.mxu0 0.0
    %2042 = vmatpush1.xpose.msra.mxu0 0.0
    %2043 = vmatprep.subr.mxu0 0.0
    %2044 = vmatpush1.xpose.msra.mxu0 0.0
    %2045 = vmatprep.subr.mxu0 0.0
    %2046 = vmatpush1.xpose.msra.mxu0 0.0
    %2047 = vmatprep.subr.mxu0 0.0
    %2048 = vmatpush1.xpose.msra.mxu0 0.0
    %2049 = vmatprep.subr.mxu0 0.0
    %2050 = vmatpush1.xpose.msra.mxu0 0.0
    %2051 = vmatprep.subr.mxu0 0.0
    %2052 = vmatpush1.xpose.msra.mxu0 0.0
    %2053 = vmatprep.subr.mxu0 0.0
    %2054 = vmatpush1.xpose.msra.mxu0 0.0
    %2055 = vmatprep.subr.mxu0 0.0
    %2056 = vmatpush1.xpose.msra.mxu0 0.0
    %2057 = vmatprep.subr.mxu0 0.0
    %2058 = vmatpush1.xpose.msra.mxu0 0.0
    %2059 = vmatprep.subr.mxu0 0.0
    %2060 = vmatpush1.xpose.msra.mxu0 0.0
    %2061 = vmatprep.subr.mxu0 0.0
    %2062 = vmatpush1.xpose.msra.mxu0 0.0
    %2063 = vmatprep.subr.mxu0 0.0
    %2064 = vmatpush1.xpose.msra.mxu0 0.0
    %2065 = vmatprep.subr.mxu0 0.0
    %2066 = vmatpush1.xpose.msra.mxu0 0.0
    %2067 = vmatprep.subr.mxu0 0.0
    %2068 = vmatpush1.xpose.msra.mxu0 0.0
    %2069 = vmatprep.subr.mxu0 0.0
    %2070 = vmatpush1.xpose.msra.mxu0 0.0
    %2071 = vmatprep.subr.mxu0 0.0
    %2072 = vmatpush1.xpose.msra.mxu0 0.0
    %2073 = vmatprep.subr.mxu0 0.0
    %2074 = vmatpush1.xpose.msra.mxu0 0.0
    %2075 = vmatprep.subr.mxu0 0.0
    %2076 = vmatpush1.xpose.msra.mxu0 0.0
    %2077 = vmatprep.subr.mxu0 0.0
    %2078 = vmatpush1.xpose.msra.mxu0 0.0
    %2079 = vmatprep.subr.mxu0 0.0
    %2080 = vmatpush1.xpose.msra.mxu0 0.0
    %2081 = vmatprep.subr.mxu0 0.0
    %2082 = vmatpush1.xpose.msra.mxu0 0.0
    %2083 = vmatprep.subr.mxu0 0.0
    %2084 = vmatpush1.xpose.msra.mxu0 0.0
    %2085 = vmatprep.mubr.f32.mxu0 0.0
    %2086 = vmatmul.mubr.f32.gmra.mrb[0].mxu0 %v2012
    %v2087 = vpop.f32.mrb[0].mxu0
    %v2088 = vadd.f32 0.0, %v2087
    %v2089 = vpop.f32.mrb[0].mxu0
    %2090 = vmatprep.mubr.f32.mxu0 0.0
    %2091 = vmatmul.mubr.f32.gmra.mrb[0].mxu0 %v2015
    %v2092 = vpop.f32.mrb[0].mxu0
    %v2093 = vadd.f32 0.0, %v2092
    %v2094 = vpop.f32.mrb[0].mxu0
    %2095 = vdwg.mxu0
    %v2096 = vsel %vm308, %v2088, -inf
    %2097 = vmax.xlane.f32.xlu0 %v2096
    %v2098 = vpop.xlane.xlu0 %2097
    %v2099 = vsel %vm308, %v2093, -inf
    %2100 = vmax.xlane.f32.xlu0 %v2099
    %v2101 = vpop.xlane.xlu0 %2100
    %v2102 = vsub.f32 %v2088, %v2098
    %v2103 = vsub.f32 %v2093, %v2101
    %v2104 = vmul.f32 %v2102, 1.442695
    %v2105 = vpow.pop %v2104
    %v2106 = vmul.f32 %v2103, 1.442695
    %v2107 = vpow.pop %v2106
    %v2108 = vmul.f32 %v2105, %v114
    %v2109 = vmul.f32 %v2107, %v115
    %v2110 = vsel %vm308, %v2108, 0.0
    %2111 = vadd.xlane.f32.xlu0 %v2110
    %v2112 = vpop.xlane.xlu0 %2111
    %v2113 = vsel %vm308, %v2109, 0.0
    %2114 = vadd.xlane.f32.xlu0 %v2113
    %v2115 = vpop.xlane.xlu0 %2114
    %v2116 = vrcp.pop %v2112
    %v2117 = vmul.f32 1.0, %v2116
    %v2118 = vrcp.pop %v2115
    %v2119 = vmul.f32 1.0, %v2118
    %v2120 = vmul.f32 %v2108, %v2117
    %v2121 = vmul.f32 %v2109, %v2119
    %v2122 = vsel %vm308, %v2120, 0.0
    %v2123 = vsel %vm308, %v2121, 0.0
    %v2124 = vadd.f32 %v2122, %v2123
    %v2125 = vrot.slane %v2124, 4
    %v2126 = vadd.f32 %v2124, %v2125
    %v2127 = vrot.slane %v2126, 2
    %v2128 = vadd.f32 %v2126, %v2127
    %v2129 = vrot.slane %v2128, 1
    %v2130 = vadd.f32 %v2128, %v2129
    %v2131 = vadd.f32 %v2130, 1e-09
    %v2132 = vrcp.pop %v2131
    %v2133 = vmul.f32 1.0, %v2132
    %v2134 = vmul.f32 %v2120, %v2133
    %v2135 = vmul.f32 %v2121, %v2133
    %2138 = vrot.lane.b32.xlu0 %v1963, 96
    %v2139 = vpop.permute.xlu0 %2138
    %2140 = vrot.lane.b32.xlu0 %v1968, 96
    %v2141 = vpop.permute.xlu0 %2140
    %v2145 = vsel %vm308, %v2134, 0
    %v2148 = vsel %vm308, %v2135, 0
    %2150 = vmatprep.subr.mxu0 0.0
    %2151 = vmatpush1.msra.mxu0 %v2139
    %2152 = vmatprep.subr.mxu0 0.0
    %2153 = vmatpush1.msra.mxu0 %v2141
    %2154 = vmatprep.subr.mxu0 0.0
    %2155 = vmatpush1.msra.mxu0 0.0
    %2156 = vmatprep.subr.mxu0 0.0
    %2157 = vmatpush1.msra.mxu0 0.0
    %2158 = vmatprep.subr.mxu0 0.0
    %2159 = vmatpush1.msra.mxu0 0.0
    %2160 = vmatprep.subr.mxu0 0.0
    %2161 = vmatpush1.msra.mxu0 0.0
    %2162 = vmatprep.subr.mxu0 0.0
    %2163 = vmatpush1.msra.mxu0 0.0
    %2164 = vmatprep.subr.mxu0 0.0
    %2165 = vmatpush1.msra.mxu0 0.0
    %2166 = vmatprep.subr.mxu0 0.0
    %2167 = vmatpush1.msra.mxu0 0.0
    %2168 = vmatprep.subr.mxu0 0.0
    %2169 = vmatpush1.msra.mxu0 0.0
    %2170 = vmatprep.subr.mxu0 0.0
    %2171 = vmatpush1.msra.mxu0 0.0
    %2172 = vmatprep.subr.mxu0 0.0
    %2173 = vmatpush1.msra.mxu0 0.0
    %2174 = vmatprep.subr.mxu0 0.0
    %2175 = vmatpush1.msra.mxu0 0.0
    %2176 = vmatprep.subr.mxu0 0.0
    %2177 = vmatpush1.msra.mxu0 0.0
    %2178 = vmatprep.subr.mxu0 0.0
    %2179 = vmatpush1.msra.mxu0 0.0
    %2180 = vmatprep.subr.mxu0 0.0
    %2181 = vmatpush1.msra.mxu0 0.0
    %2182 = vmatprep.subr.mxu0 0.0
    %2183 = vmatpush1.msra.mxu0 0.0
    %2184 = vmatprep.subr.mxu0 0.0
    %2185 = vmatpush1.msra.mxu0 0.0
    %2186 = vmatprep.subr.mxu0 0.0
    %2187 = vmatpush1.msra.mxu0 0.0
    %2188 = vmatprep.subr.mxu0 0.0
    %2189 = vmatpush1.msra.mxu0 0.0
    %2190 = vmatprep.subr.mxu0 0.0
    %2191 = vmatpush1.msra.mxu0 0.0
    %2192 = vmatprep.subr.mxu0 0.0
    %2193 = vmatpush1.msra.mxu0 0.0
    %2194 = vmatprep.subr.mxu0 0.0
    %2195 = vmatpush1.msra.mxu0 0.0
    %2196 = vmatprep.subr.mxu0 0.0
    %2197 = vmatpush1.msra.mxu0 0.0
    %2198 = vmatprep.subr.mxu0 0.0
    %2199 = vmatpush1.msra.mxu0 0.0
    %2200 = vmatprep.subr.mxu0 0.0
    %2201 = vmatpush1.msra.mxu0 0.0
    %2202 = vmatprep.subr.mxu0 0.0
    %2203 = vmatpush1.msra.mxu0 0.0
    %2204 = vmatprep.subr.mxu0 0.0
    %2205 = vmatpush1.msra.mxu0 0.0
    %2206 = vmatprep.subr.mxu0 0.0
    %2207 = vmatpush1.msra.mxu0 0.0
    %2208 = vmatprep.subr.mxu0 0.0
    %2209 = vmatpush1.msra.mxu0 0.0
    %2210 = vmatprep.subr.mxu0 0.0
    %2211 = vmatpush1.msra.mxu0 0.0
    %2212 = vmatprep.subr.mxu0 0.0
    %2213 = vmatpush1.msra.mxu0 0.0
    %2214 = vmatprep.mubr.f32.mxu0 0.0
    %2215 = vmatmul.mubr.f32.gmra.mrb[0].mxu0 %v2145
    %v2216 = vpop.f32.mrb[0].mxu0
    %v2217 = vadd.f32 0.0, %v2216
    %v2218 = vpop.f32.mrb[0].mxu0
    %2219 = vmatprep.mubr.f32.mxu0 0.0
    %2220 = vmatmul.mubr.f32.gmra.mrb[0].mxu0 %v2148
    %v2221 = vpop.f32.mrb[0].mxu0
    %v2222 = vadd.f32 0.0, %v2221
    %v2223 = vpop.f32.mrb[0].mxu0
    %2224 = vdwg.mxu0
    %v2225 = vsub.f32 %v1888, %v2217
    %v2226 = vsub.f32 %v1889, %v2222
    %v2228 = vsel %vm206, %v2225, 0
    %v2231 = vsel %vm206, %v2226, 0
    %2233 = vmatprep.subr.mxu0 0.0
    %2234 = vmatpush1.msra.mxu0 %v118
    %2235 = vmatprep.subr.mxu0 0.0
    %2236 = vmatpush1.msra.mxu0 %v119
    %2237 = vmatprep.subr.mxu0 0.0
    %2238 = vmatpush1.msra.mxu0 %v120
    %2239 = vmatprep.subr.mxu0 0.0
    %2240 = vmatpush1.msra.mxu0 %v121
    %2241 = vmatprep.subr.mxu0 0.0
    %2242 = vmatpush1.msra.mxu0 0.0
    %2243 = vmatprep.subr.mxu0 0.0
    %2244 = vmatpush1.msra.mxu0 0.0
    %2245 = vmatprep.subr.mxu0 0.0
    %2246 = vmatpush1.msra.mxu0 0.0
    %2247 = vmatprep.subr.mxu0 0.0
    %2248 = vmatpush1.msra.mxu0 0.0
    %2249 = vmatprep.subr.mxu0 0.0
    %2250 = vmatpush1.msra.mxu0 0.0
    %2251 = vmatprep.subr.mxu0 0.0
    %2252 = vmatpush1.msra.mxu0 0.0
    %2253 = vmatprep.subr.mxu0 0.0
    %2254 = vmatpush1.msra.mxu0 0.0
    %2255 = vmatprep.subr.mxu0 0.0
    %2256 = vmatpush1.msra.mxu0 0.0
    %2257 = vmatprep.subr.mxu0 0.0
    %2258 = vmatpush1.msra.mxu0 0.0
    %2259 = vmatprep.subr.mxu0 0.0
    %2260 = vmatpush1.msra.mxu0 0.0
    %2261 = vmatprep.subr.mxu0 0.0
    %2262 = vmatpush1.msra.mxu0 0.0
    %2263 = vmatprep.subr.mxu0 0.0
    %2264 = vmatpush1.msra.mxu0 0.0
    %2265 = vmatprep.subr.mxu0 0.0
    %2266 = vmatpush1.msra.mxu0 0.0
    %2267 = vmatprep.subr.mxu0 0.0
    %2268 = vmatpush1.msra.mxu0 0.0
    %2269 = vmatprep.subr.mxu0 0.0
    %2270 = vmatpush1.msra.mxu0 0.0
    %2271 = vmatprep.subr.mxu0 0.0
    %2272 = vmatpush1.msra.mxu0 0.0
    %2273 = vmatprep.subr.mxu0 0.0
    %2274 = vmatpush1.msra.mxu0 0.0
    %2275 = vmatprep.subr.mxu0 0.0
    %2276 = vmatpush1.msra.mxu0 0.0
    %2277 = vmatprep.subr.mxu0 0.0
    %2278 = vmatpush1.msra.mxu0 0.0
    %2279 = vmatprep.subr.mxu0 0.0
    %2280 = vmatpush1.msra.mxu0 0.0
    %2281 = vmatprep.subr.mxu0 0.0
    %2282 = vmatpush1.msra.mxu0 0.0
    %2283 = vmatprep.subr.mxu0 0.0
    %2284 = vmatpush1.msra.mxu0 0.0
    %2285 = vmatprep.subr.mxu0 0.0
    %2286 = vmatpush1.msra.mxu0 0.0
    %2287 = vmatprep.subr.mxu0 0.0
    %2288 = vmatpush1.msra.mxu0 0.0
    %2289 = vmatprep.subr.mxu0 0.0
    %2290 = vmatpush1.msra.mxu0 0.0
    %2291 = vmatprep.subr.mxu0 0.0
    %2292 = vmatpush1.msra.mxu0 0.0
    %2293 = vmatprep.subr.mxu0 0.0
    %2294 = vmatpush1.msra.mxu0 0.0
    %2295 = vmatprep.subr.mxu0 0.0
    %2296 = vmatpush1.msra.mxu0 0.0
    %2297 = vmatprep.mubr.f32.mxu0 0.0
    %2298 = vmatmul.mubr.f32.gmra.mrb[0].mxu0 %v2228
    %v2299 = vpop.f32.mrb[0].mxu0
    %v2300 = vadd.f32 0.0, %v2299
    %v2301 = vpop.f32.mrb[0].mxu0
    %2302 = vmatprep.mubr.f32.mxu0 0.0
    %2303 = vmatmul.mubr.f32.gmra.mrb[0].mxu0 %v2231
    %v2304 = vpop.f32.mrb[0].mxu0
    %v2305 = vadd.f32 0.0, %v2304
    %v2306 = vpop.f32.mrb[0].mxu0
    %2307 = vdwg.mxu0
    %v2308 = vmax.f32 %v2300, 0.0
    %v2309 = vmax.f32 %v2305, 0.0
    %v2311 = vsel %vm206, %v2308, 0
    %v2314 = vsel %vm206, %v2309, 0
    %2316 = vmatprep.subr.mxu0 0.0
    %2317 = vmatpush1.msra.mxu0 %v122
    %2318 = vmatprep.subr.mxu0 0.0
    %2319 = vmatpush1.msra.mxu0 %v123
    %2320 = vmatprep.subr.mxu0 0.0
    %2321 = vmatpush1.msra.mxu0 %v124
    %2322 = vmatprep.subr.mxu0 0.0
    %2323 = vmatpush1.msra.mxu0 %v125
    %2324 = vmatprep.subr.mxu0 0.0
    %2325 = vmatpush1.msra.mxu0 0.0
    %2326 = vmatprep.subr.mxu0 0.0
    %2327 = vmatpush1.msra.mxu0 0.0
    %2328 = vmatprep.subr.mxu0 0.0
    %2329 = vmatpush1.msra.mxu0 0.0
    %2330 = vmatprep.subr.mxu0 0.0
    %2331 = vmatpush1.msra.mxu0 0.0
    %2332 = vmatprep.subr.mxu0 0.0
    %2333 = vmatpush1.msra.mxu0 0.0
    %2334 = vmatprep.subr.mxu0 0.0
    %2335 = vmatpush1.msra.mxu0 0.0
    %2336 = vmatprep.subr.mxu0 0.0
    %2337 = vmatpush1.msra.mxu0 0.0
    %2338 = vmatprep.subr.mxu0 0.0
    %2339 = vmatpush1.msra.mxu0 0.0
    %2340 = vmatprep.subr.mxu0 0.0
    %2341 = vmatpush1.msra.mxu0 0.0
    %2342 = vmatprep.subr.mxu0 0.0
    %2343 = vmatpush1.msra.mxu0 0.0
    %2344 = vmatprep.subr.mxu0 0.0
    %2345 = vmatpush1.msra.mxu0 0.0
    %2346 = vmatprep.subr.mxu0 0.0
    %2347 = vmatpush1.msra.mxu0 0.0
    %2348 = vmatprep.subr.mxu0 0.0
    %2349 = vmatpush1.msra.mxu0 0.0
    %2350 = vmatprep.subr.mxu0 0.0
    %2351 = vmatpush1.msra.mxu0 0.0
    %2352 = vmatprep.subr.mxu0 0.0
    %2353 = vmatpush1.msra.mxu0 0.0
    %2354 = vmatprep.subr.mxu0 0.0
    %2355 = vmatpush1.msra.mxu0 0.0
    %2356 = vmatprep.subr.mxu0 0.0
    %2357 = vmatpush1.msra.mxu0 0.0
    %2358 = vmatprep.subr.mxu0 0.0
    %2359 = vmatpush1.msra.mxu0 0.0
    %2360 = vmatprep.subr.mxu0 0.0
    %2361 = vmatpush1.msra.mxu0 0.0
    %2362 = vmatprep.subr.mxu0 0.0
    %2363 = vmatpush1.msra.mxu0 0.0
    %2364 = vmatprep.subr.mxu0 0.0
    %2365 = vmatpush1.msra.mxu0 0.0
    %2366 = vmatprep.subr.mxu0 0.0
    %2367 = vmatpush1.msra.mxu0 0.0
    %2368 = vmatprep.subr.mxu0 0.0
    %2369 = vmatpush1.msra.mxu0 0.0
    %2370 = vmatprep.subr.mxu0 0.0
    %2371 = vmatpush1.msra.mxu0 0.0
    %2372 = vmatprep.subr.mxu0 0.0
    %2373 = vmatpush1.msra.mxu0 0.0
    %2374 = vmatprep.subr.mxu0 0.0
    %2375 = vmatpush1.msra.mxu0 0.0
    %2376 = vmatprep.subr.mxu0 0.0
    %2377 = vmatpush1.msra.mxu0 0.0
    %2378 = vmatprep.subr.mxu0 0.0
    %2379 = vmatpush1.msra.mxu0 0.0
    %2380 = vmatprep.mubr.f32.mxu0 0.0
    %2381 = vmatmul.mubr.f32.gmra.mrb[0].mxu0 %v2311
    %v2382 = vpop.f32.mrb[0].mxu0
    %v2383 = vadd.f32 %v131, %v2382
    %v2384 = vpop.f32.mrb[0].mxu0
    %2385 = vmatprep.mubr.f32.mxu0 0.0
    %2386 = vmatmul.mubr.f32.gmra.mrb[0].mxu0 %v2314
    %v2387 = vpop.f32.mrb[0].mxu0
    %v2388 = vadd.f32 %v131, %v2387
    %v2389 = vpop.f32.mrb[0].mxu0
    %2390 = vdwg.mxu0
    %v2391 = vmax.f32 %v2383, 0.0
    %v2392 = vmax.f32 %v2388, 0.0
    %v2394 = vsel %vm308, %v2391, 0
    %v2397 = vsel %vm308, %v2392, 0
    %2399 = vmatprep.subr.mxu0 0.0
    %2400 = vmatpush1.msra.mxu0 %v133
    %2401 = vmatprep.subr.mxu0 0.0
    %2402 = vmatpush1.msra.mxu0 %v134
    %2403 = vmatprep.subr.mxu0 0.0
    %2404 = vmatpush1.msra.mxu0 0.0
    %2405 = vmatprep.subr.mxu0 0.0
    %2406 = vmatpush1.msra.mxu0 0.0
    %2407 = vmatprep.subr.mxu0 0.0
    %2408 = vmatpush1.msra.mxu0 0.0
    %2409 = vmatprep.subr.mxu0 0.0
    %2410 = vmatpush1.msra.mxu0 0.0
    %2411 = vmatprep.subr.mxu0 0.0
    %2412 = vmatpush1.msra.mxu0 0.0
    %2413 = vmatprep.subr.mxu0 0.0
    %2414 = vmatpush1.msra.mxu0 0.0
    %2415 = vmatprep.subr.mxu0 0.0
    %2416 = vmatpush1.msra.mxu0 0.0
    %2417 = vmatprep.subr.mxu0 0.0
    %2418 = vmatpush1.msra.mxu0 0.0
    %2419 = vmatprep.subr.mxu0 0.0
    %2420 = vmatpush1.msra.mxu0 0.0
    %2421 = vmatprep.subr.mxu0 0.0
    %2422 = vmatpush1.msra.mxu0 0.0
    %2423 = vmatprep.subr.mxu0 0.0
    %2424 = vmatpush1.msra.mxu0 0.0
    %2425 = vmatprep.subr.mxu0 0.0
    %2426 = vmatpush1.msra.mxu0 0.0
    %2427 = vmatprep.subr.mxu0 0.0
    %2428 = vmatpush1.msra.mxu0 0.0
    %2429 = vmatprep.subr.mxu0 0.0
    %2430 = vmatpush1.msra.mxu0 0.0
    %2431 = vmatprep.subr.mxu0 0.0
    %2432 = vmatpush1.msra.mxu0 0.0
    %2433 = vmatprep.subr.mxu0 0.0
    %2434 = vmatpush1.msra.mxu0 0.0
    %2435 = vmatprep.subr.mxu0 0.0
    %2436 = vmatpush1.msra.mxu0 0.0
    %2437 = vmatprep.subr.mxu0 0.0
    %2438 = vmatpush1.msra.mxu0 0.0
    %2439 = vmatprep.subr.mxu0 0.0
    %2440 = vmatpush1.msra.mxu0 0.0
    %2441 = vmatprep.subr.mxu0 0.0
    %2442 = vmatpush1.msra.mxu0 0.0
    %2443 = vmatprep.subr.mxu0 0.0
    %2444 = vmatpush1.msra.mxu0 0.0
    %2445 = vmatprep.subr.mxu0 0.0
    %2446 = vmatpush1.msra.mxu0 0.0
    %2447 = vmatprep.subr.mxu0 0.0
    %2448 = vmatpush1.msra.mxu0 0.0
    %2449 = vmatprep.subr.mxu0 0.0
    %2450 = vmatpush1.msra.mxu0 0.0
    %2451 = vmatprep.subr.mxu0 0.0
    %2452 = vmatpush1.msra.mxu0 0.0
    %2453 = vmatprep.subr.mxu0 0.0
    %2454 = vmatpush1.msra.mxu0 0.0
    %2455 = vmatprep.subr.mxu0 0.0
    %2456 = vmatpush1.msra.mxu0 0.0
    %2457 = vmatprep.subr.mxu0 0.0
    %2458 = vmatpush1.msra.mxu0 0.0
    %2459 = vmatprep.subr.mxu0 0.0
    %2460 = vmatpush1.msra.mxu0 0.0
    %2461 = vmatprep.subr.mxu0 0.0
    %2462 = vmatpush1.msra.mxu0 0.0
    %2463 = vmatprep.mubr.f32.mxu0 0.0
    %2464 = vmatmul.mubr.f32.gmra.mrb[0].mxu0 %v2394
    %v2465 = vpop.f32.mrb[0].mxu0
    %v2466 = vadd.f32 0.0, %v2465
    %v2467 = vpop.f32.mrb[0].mxu0
    %2468 = vmatprep.mubr.f32.mxu0 0.0
    %2469 = vmatmul.mubr.f32.gmra.mrb[0].mxu0 %v2397
    %v2470 = vpop.f32.mrb[0].mxu0
    %v2471 = vadd.f32 0.0, %v2470
    %v2472 = vpop.f32.mrb[0].mxu0
    %2473 = vdwg.mxu0
    %v2474 = vadd.f32 %v2308, %v2466
    %v2475 = vadd.f32 %v2309, %v2471
    %v2476 = vadd.f32 %v2474, %v140
    %v2477 = vadd.f32 %v2475, %v140
    %v2478 = vsel %vm206, %v2476, 0.0
    %2479 = vadd.xlane.f32.xlu0 %v2478
    %v2480 = vpop.xlane.xlu0 %2479
    %v2481 = vsel %vm206, %v2477, 0.0
    %2482 = vadd.xlane.f32.xlu0 %v2481
    %v2483 = vpop.xlane.xlu0 %2482
    %v2484 = vmul.f32 %v2480, %v927
    %v2485 = vmul.f32 %v2483, %v927
    %v2486 = vsub.f32 %v2476, %v2484
    %v2487 = vsub.f32 %v2477, %v2485
    %v2488 = vmul.f32 %v2486, %v2486
    %v2489 = vmul.f32 %v2487, %v2487
    %v2490 = vsel %vm206, %v2488, 0.0
    %2491 = vadd.xlane.f32.xlu0 %v2490
    %v2492 = vpop.xlane.xlu0 %2491
    %v2493 = vsel %vm206, %v2489, 0.0
    %2494 = vadd.xlane.f32.xlu0 %v2493
    %v2495 = vpop.xlane.xlu0 %2494
    %v2496 = vmul.f32 %v2492, %v927
    %v2497 = vmul.f32 %v2495, %v927
    %v2498 = vadd.f32 %v2496, 1e-05
    %v2499 = vadd.f32 %v2497, 1e-05
    %v2500 = vrsqrt.pop %v2498
    %v2501 = vrsqrt.pop %v2499
    %v2502 = vmul.f32 %v2486, %v2500
    %v2503 = vmul.f32 %v2487, %v2501
    %v2504 = vmul.f32 %v2502, %v147
    %v2505 = vmul.f32 %v2503, %v147
    %v2506 = vadd.f32 %v2504, %v154
    %v2507 = vadd.f32 %v2505, %v154
    %v2508 = vadd.f32 %v1888, %v2506
    %v2509 = vadd.f32 %v1889, %v2507
    %2510 = vmatprep.subr.mxu0 0.0
    %2511 = vmatpush1.msra.mxu0 %v2508
    %2512 = vmatprep.subr.mxu0 0.0
    %2513 = vmatpush1.msra.mxu0 %v2509
    %2514 = vmatprep.subr.mxu0 0.0
    %2515 = vmatpush1.msra.mxu0 0.0
    %2516 = vmatprep.subr.mxu0 0.0
    %2517 = vmatpush1.msra.mxu0 0.0
    %2518 = vmatprep.subr.mxu0 0.0
    %2519 = vmatpush1.msra.mxu0 0.0
    %2520 = vmatprep.subr.mxu0 0.0
    %2521 = vmatpush1.msra.mxu0 0.0
    %2522 = vmatprep.subr.mxu0 0.0
    %2523 = vmatpush1.msra.mxu0 0.0
    %2524 = vmatprep.subr.mxu0 0.0
    %2525 = vmatpush1.msra.mxu0 0.0
    %2526 = vmatprep.subr.mxu0 0.0
    %2527 = vmatpush1.msra.mxu0 0.0
    %2528 = vmatprep.subr.mxu0 0.0
    %2529 = vmatpush1.msra.mxu0 0.0
    %2530 = vmatprep.subr.mxu0 0.0
    %2531 = vmatpush1.msra.mxu0 0.0
    %2532 = vmatprep.subr.mxu0 0.0
    %2533 = vmatpush1.msra.mxu0 0.0
    %2534 = vmatprep.subr.mxu0 0.0
    %2535 = vmatpush1.msra.mxu0 0.0
    %2536 = vmatprep.subr.mxu0 0.0
    %2537 = vmatpush1.msra.mxu0 0.0
    %2538 = vmatprep.subr.mxu0 0.0
    %2539 = vmatpush1.msra.mxu0 0.0
    %2540 = vmatprep.subr.mxu0 0.0
    %2541 = vmatpush1.msra.mxu0 0.0
    %2542 = vmatprep.subr.mxu0 0.0
    %2543 = vmatpush1.msra.mxu0 0.0
    %2544 = vmatprep.subr.mxu0 0.0
    %2545 = vmatpush1.msra.mxu0 0.0
    %2546 = vmatprep.subr.mxu0 0.0
    %2547 = vmatpush1.msra.mxu0 0.0
    %2548 = vmatprep.subr.mxu0 0.0
    %2549 = vmatpush1.msra.mxu0 0.0
    %2550 = vmatprep.subr.mxu0 0.0
    %2551 = vmatpush1.msra.mxu0 0.0
    %2552 = vmatprep.subr.mxu0 0.0
    %2553 = vmatpush1.msra.mxu0 0.0
    %2554 = vmatprep.subr.mxu0 0.0
    %2555 = vmatpush1.msra.mxu0 0.0
    %2556 = vmatprep.subr.mxu0 0.0
    %2557 = vmatpush1.msra.mxu0 0.0
    %2558 = vmatprep.subr.mxu0 0.0
    %2559 = vmatpush1.msra.mxu0 0.0
    %2560 = vmatprep.subr.mxu0 0.0
    %2561 = vmatpush1.msra.mxu0 0.0
    %2562 = vmatprep.subr.mxu0 0.0
    %2563 = vmatpush1.msra.mxu0 0.0
    %2564 = vmatprep.subr.mxu0 0.0
    %2565 = vmatpush1.msra.mxu0 0.0
    %2566 = vmatprep.subr.mxu0 0.0
    %2567 = vmatpush1.msra.mxu0 0.0
    %2568 = vmatprep.subr.mxu0 0.0
    %2569 = vmatpush1.msra.mxu0 0.0
    %2570 = vmatprep.subr.mxu0 0.0
    %2571 = vmatpush1.msra.mxu0 0.0
    %2572 = vmatprep.subr.mxu0 0.0
    %2573 = vmatpush1.msra.mxu0 0.0
    %2574 = vmatprep.mubr.f32.mxu0 0.0
    %2575 = vmatmul.mubr.f32.gmra.mrb[0].mxu0 %v955
    %v2576 = vpop.f32.mrb[0].mxu0
    %v2577 = vadd.f32 0.0, %v2576
    %v2578 = vpop.f32.mrb[0].mxu0
    %2579 = vmatprep.mubr.f32.mxu0 0.0
    %2580 = vmatmul.mubr.f32.gmra.mrb[0].mxu0 %v958
    %v2581 = vpop.f32.mrb[0].mxu0
    %v2582 = vadd.f32 0.0, %v2581
    %v2583 = vpop.f32.mrb[0].mxu0
    %2584 = vdwg.mxu0
    %v2585 = vsub.f32 %v2508, %v2577
    %v2586 = vsub.f32 %v2509, %v2582
    %v2587 = vmul.f32 %v2585, %v2585
    %v2588 = vmul.f32 %v2586, %v2586
    %2589 = vmatprep.subr.mxu0 0.0
    %2590 = vmatpush1.msra.mxu0 %v2587
    %2591 = vmatprep.subr.mxu0 0.0
    %2592 = vmatpush1.msra.mxu0 %v2588
    %2593 = vmatprep.subr.mxu0 0.0
    %2594 = vmatpush1.msra.mxu0 0.0
    %2595 = vmatprep.subr.mxu0 0.0
    %2596 = vmatpush1.msra.mxu0 0.0
    %2597 = vmatprep.subr.mxu0 0.0
    %2598 = vmatpush1.msra.mxu0 0.0
    %2599 = vmatprep.subr.mxu0 0.0
    %2600 = vmatpush1.msra.mxu0 0.0
    %2601 = vmatprep.subr.mxu0 0.0
    %2602 = vmatpush1.msra.mxu0 0.0
    %2603 = vmatprep.subr.mxu0 0.0
    %2604 = vmatpush1.msra.mxu0 0.0
    %2605 = vmatprep.subr.mxu0 0.0
    %2606 = vmatpush1.msra.mxu0 0.0
    %2607 = vmatprep.subr.mxu0 0.0
    %2608 = vmatpush1.msra.mxu0 0.0
    %2609 = vmatprep.subr.mxu0 0.0
    %2610 = vmatpush1.msra.mxu0 0.0
    %2611 = vmatprep.subr.mxu0 0.0
    %2612 = vmatpush1.msra.mxu0 0.0
    %2613 = vmatprep.subr.mxu0 0.0
    %2614 = vmatpush1.msra.mxu0 0.0
    %2615 = vmatprep.subr.mxu0 0.0
    %2616 = vmatpush1.msra.mxu0 0.0
    %2617 = vmatprep.subr.mxu0 0.0
    %2618 = vmatpush1.msra.mxu0 0.0
    %2619 = vmatprep.subr.mxu0 0.0
    %2620 = vmatpush1.msra.mxu0 0.0
    %2621 = vmatprep.subr.mxu0 0.0
    %2622 = vmatpush1.msra.mxu0 0.0
    %2623 = vmatprep.subr.mxu0 0.0
    %2624 = vmatpush1.msra.mxu0 0.0
    %2625 = vmatprep.subr.mxu0 0.0
    %2626 = vmatpush1.msra.mxu0 0.0
    %2627 = vmatprep.subr.mxu0 0.0
    %2628 = vmatpush1.msra.mxu0 0.0
    %2629 = vmatprep.subr.mxu0 0.0
    %2630 = vmatpush1.msra.mxu0 0.0
    %2631 = vmatprep.subr.mxu0 0.0
    %2632 = vmatpush1.msra.mxu0 0.0
    %2633 = vmatprep.subr.mxu0 0.0
    %2634 = vmatpush1.msra.mxu0 0.0
    %2635 = vmatprep.subr.mxu0 0.0
    %2636 = vmatpush1.msra.mxu0 0.0
    %2637 = vmatprep.subr.mxu0 0.0
    %2638 = vmatpush1.msra.mxu0 0.0
    %2639 = vmatprep.subr.mxu0 0.0
    %2640 = vmatpush1.msra.mxu0 0.0
    %2641 = vmatprep.subr.mxu0 0.0
    %2642 = vmatpush1.msra.mxu0 0.0
    %2643 = vmatprep.subr.mxu0 0.0
    %2644 = vmatpush1.msra.mxu0 0.0
    %2645 = vmatprep.subr.mxu0 0.0
    %2646 = vmatpush1.msra.mxu0 0.0
    %2647 = vmatprep.subr.mxu0 0.0
    %2648 = vmatpush1.msra.mxu0 0.0
    %2649 = vmatprep.subr.mxu0 0.0
    %2650 = vmatpush1.msra.mxu0 0.0
    %2651 = vmatprep.subr.mxu0 0.0
    %2652 = vmatpush1.msra.mxu0 0.0
    %2653 = vmatprep.mubr.f32.mxu0 0.0
    %2654 = vmatmul.mubr.f32.gmra.mrb[0].mxu0 %v955
    %v2655 = vpop.f32.mrb[0].mxu0
    %v2656 = vadd.f32 1e-05, %v2655
    %v2657 = vpop.f32.mrb[0].mxu0
    %2658 = vmatprep.mubr.f32.mxu0 0.0
    %2659 = vmatmul.mubr.f32.gmra.mrb[0].mxu0 %v958
    %v2660 = vpop.f32.mrb[0].mxu0
    %v2661 = vadd.f32 1e-05, %v2660
    %v2662 = vpop.f32.mrb[0].mxu0
    %2663 = vdwg.mxu0
    %v2664 = vrsqrt.pop %v2656
    %v2665 = vrsqrt.pop %v2661
    %v2666 = vmul.f32 %v2585, %v2664
    %v2667 = vmul.f32 %v2586, %v2665
    %v2668 = vmax.f32 %v2666, 0.0
    %v2669 = vmax.f32 %v2667, 0.0
    %v2671 = vsel %vm206, %v2668, 0
    %v2674 = vsel %vm206, %v2669, 0
    %2676 = vmatprep.subr.mxu0 0.0
    %2677 = vmatpush1.msra.mxu0 %v198
    %2678 = vmatprep.subr.mxu0 0.0
    %2679 = vmatpush1.msra.mxu0 %v199
    %2680 = vmatprep.subr.mxu0 0.0
    %2681 = vmatpush1.msra.mxu0 %v200
    %2682 = vmatprep.subr.mxu0 0.0
    %2683 = vmatpush1.msra.mxu0 %v201
    %2684 = vmatprep.subr.mxu0 0.0
    %2685 = vmatpush1.msra.mxu0 0.0
    %2686 = vmatprep.subr.mxu0 0.0
    %2687 = vmatpush1.msra.mxu0 0.0
    %2688 = vmatprep.subr.mxu0 0.0
    %2689 = vmatpush1.msra.mxu0 0.0
    %2690 = vmatprep.subr.mxu0 0.0
    %2691 = vmatpush1.msra.mxu0 0.0
    %2692 = vmatprep.subr.mxu0 0.0
    %2693 = vmatpush1.msra.mxu0 0.0
    %2694 = vmatprep.subr.mxu0 0.0
    %2695 = vmatpush1.msra.mxu0 0.0
    %2696 = vmatprep.subr.mxu0 0.0
    %2697 = vmatpush1.msra.mxu0 0.0
    %2698 = vmatprep.subr.mxu0 0.0
    %2699 = vmatpush1.msra.mxu0 0.0
    %2700 = vmatprep.subr.mxu0 0.0
    %2701 = vmatpush1.msra.mxu0 0.0
    %2702 = vmatprep.subr.mxu0 0.0
    %2703 = vmatpush1.msra.mxu0 0.0
    %2704 = vmatprep.subr.mxu0 0.0
    %2705 = vmatpush1.msra.mxu0 0.0
    %2706 = vmatprep.subr.mxu0 0.0
    %2707 = vmatpush1.msra.mxu0 0.0
    %2708 = vmatprep.subr.mxu0 0.0
    %2709 = vmatpush1.msra.mxu0 0.0
    %2710 = vmatprep.subr.mxu0 0.0
    %2711 = vmatpush1.msra.mxu0 0.0
    %2712 = vmatprep.subr.mxu0 0.0
    %2713 = vmatpush1.msra.mxu0 0.0
    %2714 = vmatprep.subr.mxu0 0.0
    %2715 = vmatpush1.msra.mxu0 0.0
    %2716 = vmatprep.subr.mxu0 0.0
    %2717 = vmatpush1.msra.mxu0 0.0
    %2718 = vmatprep.subr.mxu0 0.0
    %2719 = vmatpush1.msra.mxu0 0.0
    %2720 = vmatprep.subr.mxu0 0.0
    %2721 = vmatpush1.msra.mxu0 0.0
    %2722 = vmatprep.subr.mxu0 0.0
    %2723 = vmatpush1.msra.mxu0 0.0
    %2724 = vmatprep.subr.mxu0 0.0
    %2725 = vmatpush1.msra.mxu0 0.0
    %2726 = vmatprep.subr.mxu0 0.0
    %2727 = vmatpush1.msra.mxu0 0.0
    %2728 = vmatprep.subr.mxu0 0.0
    %2729 = vmatpush1.msra.mxu0 0.0
    %2730 = vmatprep.subr.mxu0 0.0
    %2731 = vmatpush1.msra.mxu0 0.0
    %2732 = vmatprep.subr.mxu0 0.0
    %2733 = vmatpush1.msra.mxu0 0.0
    %2734 = vmatprep.subr.mxu0 0.0
    %2735 = vmatpush1.msra.mxu0 0.0
    %2736 = vmatprep.subr.mxu0 0.0
    %2737 = vmatpush1.msra.mxu0 0.0
    %2738 = vmatprep.subr.mxu0 0.0
    %2739 = vmatpush1.msra.mxu0 0.0
    %2740 = vmatprep.mubr.f32.mxu0 0.0
    %2741 = vmatmul.mubr.f32.gmra.mrb[0].mxu0 %v2671
    %v2742 = vpop.f32.mrb[0].mxu0
    %v2743 = vadd.f32 0.0, %v2742
    %v2744 = vpop.f32.mrb[0].mxu0
    %2745 = vmatprep.mubr.f32.mxu0 0.0
    %2746 = vmatmul.mubr.f32.gmra.mrb[0].mxu0 %v2674
    %v2747 = vpop.f32.mrb[0].mxu0
    %v2748 = vadd.f32 0.0, %v2747
    %v2749 = vpop.f32.mrb[0].mxu0
    %2750 = vdwg.mxu0
    %v2751 = vmul.f32 %v2743, %v2743
    %v2752 = vmul.f32 %v2748, %v2748
    %v2753 = vsel %vm308, %v2751, 0.0
    %2754 = vadd.xlane.f32.xlu0 %v2753
    %v2755 = vpop.xlane.xlu0 %2754
    %v2756 = vsel %vm308, %v2752, 0.0
    %2757 = vadd.xlane.f32.xlu0 %v2756
    %v2758 = vpop.xlane.xlu0 %2757
    %v2759 = vmax.f32 %v2755, 1e-24
    %v2760 = vmax.f32 %v2758, 1e-24
    %v2761 = vrsqrt.pop %v2759
    %v2762 = vrsqrt.pop %v2760
    %v2763 = vmul.f32 %v2743, %v2761
    %v2764 = vmul.f32 %v2748, %v2762
    %v2766 = vsel %vm308, %v2763, 0
    %v2769 = vsel %vm308, %v2764, 0
    %2771 = vmatprep.subr.mxu0 0.0
    %2772 = vmatpush1.xpose.msra.mxu0 %v1222
    %2773 = vmatprep.subr.mxu0 0.0
    %2774 = vmatpush1.xpose.msra.mxu0 %v1225
    %2775 = vmatprep.subr.mxu0 0.0
    %2776 = vmatpush1.xpose.msra.mxu0 %v1228
    %2777 = vmatprep.subr.mxu0 0.0
    %2778 = vmatpush1.xpose.msra.mxu0 %v1231
    %2779 = vmatprep.subr.mxu0 0.0
    %2780 = vmatpush1.xpose.msra.mxu0 0.0
    %2781 = vmatprep.subr.mxu0 0.0
    %2782 = vmatpush1.xpose.msra.mxu0 0.0
    %2783 = vmatprep.subr.mxu0 0.0
    %2784 = vmatpush1.xpose.msra.mxu0 0.0
    %2785 = vmatprep.subr.mxu0 0.0
    %2786 = vmatpush1.xpose.msra.mxu0 0.0
    %2787 = vmatprep.subr.mxu0 0.0
    %2788 = vmatpush1.xpose.msra.mxu0 0.0
    %2789 = vmatprep.subr.mxu0 0.0
    %2790 = vmatpush1.xpose.msra.mxu0 0.0
    %2791 = vmatprep.subr.mxu0 0.0
    %2792 = vmatpush1.xpose.msra.mxu0 0.0
    %2793 = vmatprep.subr.mxu0 0.0
    %2794 = vmatpush1.xpose.msra.mxu0 0.0
    %2795 = vmatprep.subr.mxu0 0.0
    %2796 = vmatpush1.xpose.msra.mxu0 0.0
    %2797 = vmatprep.subr.mxu0 0.0
    %2798 = vmatpush1.xpose.msra.mxu0 0.0
    %2799 = vmatprep.subr.mxu0 0.0
    %2800 = vmatpush1.xpose.msra.mxu0 0.0
    %2801 = vmatprep.subr.mxu0 0.0
    %2802 = vmatpush1.xpose.msra.mxu0 0.0
    %2803 = vmatprep.subr.mxu0 0.0
    %2804 = vmatpush1.xpose.msra.mxu0 0.0
    %2805 = vmatprep.subr.mxu0 0.0
    %2806 = vmatpush1.xpose.msra.mxu0 0.0
    %2807 = vmatprep.subr.mxu0 0.0
    %2808 = vmatpush1.xpose.msra.mxu0 0.0
    %2809 = vmatprep.subr.mxu0 0.0
    %2810 = vmatpush1.xpose.msra.mxu0 0.0
    %2811 = vmatprep.subr.mxu0 0.0
    %2812 = vmatpush1.xpose.msra.mxu0 0.0
    %2813 = vmatprep.subr.mxu0 0.0
    %2814 = vmatpush1.xpose.msra.mxu0 0.0
    %2815 = vmatprep.subr.mxu0 0.0
    %2816 = vmatpush1.xpose.msra.mxu0 0.0
    %2817 = vmatprep.subr.mxu0 0.0
    %2818 = vmatpush1.xpose.msra.mxu0 0.0
    %2819 = vmatprep.subr.mxu0 0.0
    %2820 = vmatpush1.xpose.msra.mxu0 0.0
    %2821 = vmatprep.subr.mxu0 0.0
    %2822 = vmatpush1.xpose.msra.mxu0 0.0
    %2823 = vmatprep.subr.mxu0 0.0
    %2824 = vmatpush1.xpose.msra.mxu0 0.0
    %2825 = vmatprep.subr.mxu0 0.0
    %2826 = vmatpush1.xpose.msra.mxu0 0.0
    %2827 = vmatprep.subr.mxu0 0.0
    %2828 = vmatpush1.xpose.msra.mxu0 0.0
    %2829 = vmatprep.subr.mxu0 0.0
    %2830 = vmatpush1.xpose.msra.mxu0 0.0
    %2831 = vmatprep.subr.mxu0 0.0
    %2832 = vmatpush1.xpose.msra.mxu0 0.0
    %2833 = vmatprep.subr.mxu0 0.0
    %2834 = vmatpush1.xpose.msra.mxu0 0.0
    %2835 = vmatprep.mubr.f32.mxu0 0.0
    %2836 = vmatmul.mubr.f32.gmra.mrb[0].mxu0 %v2766
    %v2837 = vpop.f32.mrb[0].mxu0
    %v2838 = vadd.f32 0.0, %v2837
    %v2839 = vpop.f32.mrb[0].mxu0
    %2840 = vmatprep.mubr.f32.mxu0 0.0
    %2841 = vmatmul.mubr.f32.gmra.mrb[0].mxu0 %v2769
    %v2842 = vpop.f32.mrb[0].mxu0
    %v2843 = vadd.f32 0.0, %v2842
    %v2844 = vpop.f32.mrb[0].mxu0
    %2845 = vdwg.mxu0
    %v2846 = vsel %vm206, %v2838, -inf
    %2847 = vmax.xlane.f32.xlu0 %v2846
    %v2848 = vpop.xlane.xlu0 %2847
    %v2849 = vsel %vm206, %v2843, -inf
    %2850 = vmax.xlane.f32.xlu0 %v2849
    %v2851 = vpop.xlane.xlu0 %2850
    %v2852 = vsub.f32 %v2838, %v2848
    %v2853 = vsub.f32 %v2843, %v2851
    %v2854 = vmul.f32 %v2852, 1.442695
    %v2855 = vpow.pop %v2854
    %v2856 = vmul.f32 %v2853, 1.442695
    %v2857 = vpow.pop %v2856
    %v2858 = vmul.f32 %v2855, %v114
    %v2859 = vmul.f32 %v2857, %v115
    %v2860 = vsel %vm206, %v2858, 0.0
    %2861 = vadd.xlane.f32.xlu0 %v2860
    %v2862 = vpop.xlane.xlu0 %2861
    %v2863 = vsel %vm206, %v2859, 0.0
    %2864 = vadd.xlane.f32.xlu0 %v2863
    %v2865 = vpop.xlane.xlu0 %2864
    %v2866 = vrcp.pop %v2862
    %v2867 = vmul.f32 1.0, %v2866
    %v2868 = vrcp.pop %v2865
    %v2869 = vmul.f32 1.0, %v2868
    %v2870 = vmul.f32 %v2858, %v2867
    %v2871 = vmul.f32 %v2859, %v2869
    %v2872 = vsel %vm206, %v2870, 0.0
    %v2873 = vsel %vm206, %v2871, 0.0
    %v2874 = vadd.f32 %v2872, %v2873
    %v2875 = vrot.slane %v2874, 4
    %v2876 = vadd.f32 %v2874, %v2875
    %v2877 = vrot.slane %v2876, 2
    %v2878 = vadd.f32 %v2876, %v2877
    %v2879 = vrot.slane %v2878, 1
    %v2880 = vadd.f32 %v2878, %v2879
    %v2881 = vadd.f32 %v2880, 1e-09
    %v2882 = vrcp.pop %v2881
    %v2883 = vmul.f32 1.0, %v2882
    %v2884 = vmul.f32 %v2870, %v2883
    %v2885 = vmul.f32 %v2871, %v2883
    %v2887 = vsel %vm206, %v2884, 0
    %v2890 = vsel %vm206, %v2885, 0
    %2892 = vmatprep.subr.mxu0 0.0
    %2893 = vmatpush1.msra.mxu0 %v1353
    %2894 = vmatprep.subr.mxu0 0.0
    %2895 = vmatpush1.msra.mxu0 %v1355
    %2896 = vmatprep.subr.mxu0 0.0
    %2897 = vmatpush1.msra.mxu0 %v1357
    %2898 = vmatprep.subr.mxu0 0.0
    %2899 = vmatpush1.msra.mxu0 %v1359
    %2900 = vmatprep.subr.mxu0 0.0
    %2901 = vmatpush1.msra.mxu0 0.0
    %2902 = vmatprep.subr.mxu0 0.0
    %2903 = vmatpush1.msra.mxu0 0.0
    %2904 = vmatprep.subr.mxu0 0.0
    %2905 = vmatpush1.msra.mxu0 0.0
    %2906 = vmatprep.subr.mxu0 0.0
    %2907 = vmatpush1.msra.mxu0 0.0
    %2908 = vmatprep.subr.mxu0 0.0
    %2909 = vmatpush1.msra.mxu0 0.0
    %2910 = vmatprep.subr.mxu0 0.0
    %2911 = vmatpush1.msra.mxu0 0.0
    %2912 = vmatprep.subr.mxu0 0.0
    %2913 = vmatpush1.msra.mxu0 0.0
    %2914 = vmatprep.subr.mxu0 0.0
    %2915 = vmatpush1.msra.mxu0 0.0
    %2916 = vmatprep.subr.mxu0 0.0
    %2917 = vmatpush1.msra.mxu0 0.0
    %2918 = vmatprep.subr.mxu0 0.0
    %2919 = vmatpush1.msra.mxu0 0.0
    %2920 = vmatprep.subr.mxu0 0.0
    %2921 = vmatpush1.msra.mxu0 0.0
    %2922 = vmatprep.subr.mxu0 0.0
    %2923 = vmatpush1.msra.mxu0 0.0
    %2924 = vmatprep.subr.mxu0 0.0
    %2925 = vmatpush1.msra.mxu0 0.0
    %2926 = vmatprep.subr.mxu0 0.0
    %2927 = vmatpush1.msra.mxu0 0.0
    %2928 = vmatprep.subr.mxu0 0.0
    %2929 = vmatpush1.msra.mxu0 0.0
    %2930 = vmatprep.subr.mxu0 0.0
    %2931 = vmatpush1.msra.mxu0 0.0
    %2932 = vmatprep.subr.mxu0 0.0
    %2933 = vmatpush1.msra.mxu0 0.0
    %2934 = vmatprep.subr.mxu0 0.0
    %2935 = vmatpush1.msra.mxu0 0.0
    %2936 = vmatprep.subr.mxu0 0.0
    %2937 = vmatpush1.msra.mxu0 0.0
    %2938 = vmatprep.subr.mxu0 0.0
    %2939 = vmatpush1.msra.mxu0 0.0
    %2940 = vmatprep.subr.mxu0 0.0
    %2941 = vmatpush1.msra.mxu0 0.0
    %2942 = vmatprep.subr.mxu0 0.0
    %2943 = vmatpush1.msra.mxu0 0.0
    %2944 = vmatprep.subr.mxu0 0.0
    %2945 = vmatpush1.msra.mxu0 0.0
    %2946 = vmatprep.subr.mxu0 0.0
    %2947 = vmatpush1.msra.mxu0 0.0
    %2948 = vmatprep.subr.mxu0 0.0
    %2949 = vmatpush1.msra.mxu0 0.0
    %2950 = vmatprep.subr.mxu0 0.0
    %2951 = vmatpush1.msra.mxu0 0.0
    %2952 = vmatprep.subr.mxu0 0.0
    %2953 = vmatpush1.msra.mxu0 0.0
    %2954 = vmatprep.subr.mxu0 0.0
    %2955 = vmatpush1.msra.mxu0 0.0
    %2956 = vmatprep.mubr.f32.mxu0 0.0
    %2957 = vmatmul.mubr.f32.gmra.mrb[0].mxu0 %v2887
    %v2958 = vpop.f32.mrb[0].mxu0
    %v2959 = vadd.f32 0.0, %v2958
    %v2960 = vpop.f32.mrb[0].mxu0
    %2961 = vmatprep.mubr.f32.mxu0 0.0
    %2962 = vmatmul.mubr.f32.gmra.mrb[0].mxu0 %v2890
    %v2963 = vpop.f32.mrb[0].mxu0
    %v2964 = vadd.f32 0.0, %v2963
    %v2965 = vpop.f32.mrb[0].mxu0
    %2966 = vdwg.mxu0
    %v2967 = vsub.f32 %v2668, %v2959
    %v2968 = vsub.f32 %v2669, %v2964
    %v2970 = vsel %vm206, %v2967, 0
    %v2973 = vsel %vm206, %v2968, 0
    %2975 = vmatprep.subr.mxu0 0.0
    %2976 = vmatpush1.msra.mxu0 %v156
    %2977 = vmatprep.subr.mxu0 0.0
    %2978 = vmatpush1.msra.mxu0 %v157
    %2979 = vmatprep.subr.mxu0 0.0
    %2980 = vmatpush1.msra.mxu0 %v158
    %2981 = vmatprep.subr.mxu0 0.0
    %2982 = vmatpush1.msra.mxu0 %v159
    %2983 = vmatprep.subr.mxu0 0.0
    %2984 = vmatpush1.msra.mxu0 0.0
    %2985 = vmatprep.subr.mxu0 0.0
    %2986 = vmatpush1.msra.mxu0 0.0
    %2987 = vmatprep.subr.mxu0 0.0
    %2988 = vmatpush1.msra.mxu0 0.0
    %2989 = vmatprep.subr.mxu0 0.0
    %2990 = vmatpush1.msra.mxu0 0.0
    %2991 = vmatprep.subr.mxu0 0.0
    %2992 = vmatpush1.msra.mxu0 0.0
    %2993 = vmatprep.subr.mxu0 0.0
    %2994 = vmatpush1.msra.mxu0 0.0
    %2995 = vmatprep.subr.mxu0 0.0
    %2996 = vmatpush1.msra.mxu0 0.0
    %2997 = vmatprep.subr.mxu0 0.0
    %2998 = vmatpush1.msra.mxu0 0.0
    %2999 = vmatprep.subr.mxu0 0.0
    %3000 = vmatpush1.msra.mxu0 0.0
    %3001 = vmatprep.subr.mxu0 0.0
    %3002 = vmatpush1.msra.mxu0 0.0
    %3003 = vmatprep.subr.mxu0 0.0
    %3004 = vmatpush1.msra.mxu0 0.0
    %3005 = vmatprep.subr.mxu0 0.0
    %3006 = vmatpush1.msra.mxu0 0.0
    %3007 = vmatprep.subr.mxu0 0.0
    %3008 = vmatpush1.msra.mxu0 0.0
    %3009 = vmatprep.subr.mxu0 0.0
    %3010 = vmatpush1.msra.mxu0 0.0
    %3011 = vmatprep.subr.mxu0 0.0
    %3012 = vmatpush1.msra.mxu0 0.0
    %3013 = vmatprep.subr.mxu0 0.0
    %3014 = vmatpush1.msra.mxu0 0.0
    %3015 = vmatprep.subr.mxu0 0.0
    %3016 = vmatpush1.msra.mxu0 0.0
    %3017 = vmatprep.subr.mxu0 0.0
    %3018 = vmatpush1.msra.mxu0 0.0
    %3019 = vmatprep.subr.mxu0 0.0
    %3020 = vmatpush1.msra.mxu0 0.0
    %3021 = vmatprep.subr.mxu0 0.0
    %3022 = vmatpush1.msra.mxu0 0.0
    %3023 = vmatprep.subr.mxu0 0.0
    %3024 = vmatpush1.msra.mxu0 0.0
    %3025 = vmatprep.subr.mxu0 0.0
    %3026 = vmatpush1.msra.mxu0 0.0
    %3027 = vmatprep.subr.mxu0 0.0
    %3028 = vmatpush1.msra.mxu0 0.0
    %3029 = vmatprep.subr.mxu0 0.0
    %3030 = vmatpush1.msra.mxu0 0.0
    %3031 = vmatprep.subr.mxu0 0.0
    %3032 = vmatpush1.msra.mxu0 0.0
    %3033 = vmatprep.subr.mxu0 0.0
    %3034 = vmatpush1.msra.mxu0 0.0
    %3035 = vmatprep.subr.mxu0 0.0
    %3036 = vmatpush1.msra.mxu0 0.0
    %3037 = vmatprep.subr.mxu0 0.0
    %3038 = vmatpush1.msra.mxu0 0.0
    %3039 = vmatprep.mubr.f32.mxu0 0.0
    %3040 = vmatmul.mubr.f32.gmra.mrb[0].mxu0 %v2970
    %v3041 = vpop.f32.mrb[0].mxu0
    %v3042 = vadd.f32 0.0, %v3041
    %v3043 = vpop.f32.mrb[0].mxu0
    %3044 = vmatprep.mubr.f32.mxu0 0.0
    %3045 = vmatmul.mubr.f32.gmra.mrb[0].mxu0 %v2973
    %v3046 = vpop.f32.mrb[0].mxu0
    %v3047 = vadd.f32 0.0, %v3046
    %v3048 = vpop.f32.mrb[0].mxu0
    %3049 = vdwg.mxu0
    %v3050 = vmax.f32 %v3042, 0.0
    %v3051 = vmax.f32 %v3047, 0.0
    %v3053 = vsel %vm206, %v3050, 0
    %v3056 = vsel %vm206, %v3051, 0
    %3058 = vmatprep.subr.mxu0 0.0
    %3059 = vmatpush1.msra.mxu0 %v160
    %3060 = vmatprep.subr.mxu0 0.0
    %3061 = vmatpush1.msra.mxu0 %v161
    %3062 = vmatprep.subr.mxu0 0.0
    %3063 = vmatpush1.msra.mxu0 %v162
    %3064 = vmatprep.subr.mxu0 0.0
    %3065 = vmatpush1.msra.mxu0 %v163
    %3066 = vmatprep.subr.mxu0 0.0
    %3067 = vmatpush1.msra.mxu0 0.0
    %3068 = vmatprep.subr.mxu0 0.0
    %3069 = vmatpush1.msra.mxu0 0.0
    %3070 = vmatprep.subr.mxu0 0.0
    %3071 = vmatpush1.msra.mxu0 0.0
    %3072 = vmatprep.subr.mxu0 0.0
    %3073 = vmatpush1.msra.mxu0 0.0
    %3074 = vmatprep.subr.mxu0 0.0
    %3075 = vmatpush1.msra.mxu0 0.0
    %3076 = vmatprep.subr.mxu0 0.0
    %3077 = vmatpush1.msra.mxu0 0.0
    %3078 = vmatprep.subr.mxu0 0.0
    %3079 = vmatpush1.msra.mxu0 0.0
    %3080 = vmatprep.subr.mxu0 0.0
    %3081 = vmatpush1.msra.mxu0 0.0
    %3082 = vmatprep.subr.mxu0 0.0
    %3083 = vmatpush1.msra.mxu0 0.0
    %3084 = vmatprep.subr.mxu0 0.0
    %3085 = vmatpush1.msra.mxu0 0.0
    %3086 = vmatprep.subr.mxu0 0.0
    %3087 = vmatpush1.msra.mxu0 0.0
    %3088 = vmatprep.subr.mxu0 0.0
    %3089 = vmatpush1.msra.mxu0 0.0
    %3090 = vmatprep.subr.mxu0 0.0
    %3091 = vmatpush1.msra.mxu0 0.0
    %3092 = vmatprep.subr.mxu0 0.0
    %3093 = vmatpush1.msra.mxu0 0.0
    %3094 = vmatprep.subr.mxu0 0.0
    %3095 = vmatpush1.msra.mxu0 0.0
    %3096 = vmatprep.subr.mxu0 0.0
    %3097 = vmatpush1.msra.mxu0 0.0
    %3098 = vmatprep.subr.mxu0 0.0
    %3099 = vmatpush1.msra.mxu0 0.0
    %3100 = vmatprep.subr.mxu0 0.0
    %3101 = vmatpush1.msra.mxu0 0.0
    %3102 = vmatprep.subr.mxu0 0.0
    %3103 = vmatpush1.msra.mxu0 0.0
    %3104 = vmatprep.subr.mxu0 0.0
    %3105 = vmatpush1.msra.mxu0 0.0
    %3106 = vmatprep.subr.mxu0 0.0
    %3107 = vmatpush1.msra.mxu0 0.0
    %3108 = vmatprep.subr.mxu0 0.0
    %3109 = vmatpush1.msra.mxu0 0.0
    %3110 = vmatprep.subr.mxu0 0.0
    %3111 = vmatpush1.msra.mxu0 0.0
    %3112 = vmatprep.subr.mxu0 0.0
    %3113 = vmatpush1.msra.mxu0 0.0
    %3114 = vmatprep.subr.mxu0 0.0
    %3115 = vmatpush1.msra.mxu0 0.0
    %3116 = vmatprep.subr.mxu0 0.0
    %3117 = vmatpush1.msra.mxu0 0.0
    %3118 = vmatprep.subr.mxu0 0.0
    %3119 = vmatpush1.msra.mxu0 0.0
    %3120 = vmatprep.subr.mxu0 0.0
    %3121 = vmatpush1.msra.mxu0 0.0
    %3122 = vmatprep.mubr.f32.mxu0 0.0
    %3123 = vmatmul.mubr.f32.gmra.mrb[0].mxu0 %v3053
    %v3124 = vpop.f32.mrb[0].mxu0
    %v3125 = vadd.f32 %v169, %v3124
    %v3126 = vpop.f32.mrb[0].mxu0
    %3127 = vmatprep.mubr.f32.mxu0 0.0
    %3128 = vmatmul.mubr.f32.gmra.mrb[0].mxu0 %v3056
    %v3129 = vpop.f32.mrb[0].mxu0
    %v3130 = vadd.f32 %v169, %v3129
    %v3131 = vpop.f32.mrb[0].mxu0
    %3132 = vdwg.mxu0
    %v3133 = vmax.f32 %v3125, 0.0
    %v3134 = vmax.f32 %v3130, 0.0
    %v3136 = vsel %vm308, %v3133, 0
    %v3139 = vsel %vm308, %v3134, 0
    %3141 = vmatprep.subr.mxu0 0.0
    %3142 = vmatpush1.msra.mxu0 %v171
    %3143 = vmatprep.subr.mxu0 0.0
    %3144 = vmatpush1.msra.mxu0 %v172
    %3145 = vmatprep.subr.mxu0 0.0
    %3146 = vmatpush1.msra.mxu0 0.0
    %3147 = vmatprep.subr.mxu0 0.0
    %3148 = vmatpush1.msra.mxu0 0.0
    %3149 = vmatprep.subr.mxu0 0.0
    %3150 = vmatpush1.msra.mxu0 0.0
    %3151 = vmatprep.subr.mxu0 0.0
    %3152 = vmatpush1.msra.mxu0 0.0
    %3153 = vmatprep.subr.mxu0 0.0
    %3154 = vmatpush1.msra.mxu0 0.0
    %3155 = vmatprep.subr.mxu0 0.0
    %3156 = vmatpush1.msra.mxu0 0.0
    %3157 = vmatprep.subr.mxu0 0.0
    %3158 = vmatpush1.msra.mxu0 0.0
    %3159 = vmatprep.subr.mxu0 0.0
    %3160 = vmatpush1.msra.mxu0 0.0
    %3161 = vmatprep.subr.mxu0 0.0
    %3162 = vmatpush1.msra.mxu0 0.0
    %3163 = vmatprep.subr.mxu0 0.0
    %3164 = vmatpush1.msra.mxu0 0.0
    %3165 = vmatprep.subr.mxu0 0.0
    %3166 = vmatpush1.msra.mxu0 0.0
    %3167 = vmatprep.subr.mxu0 0.0
    %3168 = vmatpush1.msra.mxu0 0.0
    %3169 = vmatprep.subr.mxu0 0.0
    %3170 = vmatpush1.msra.mxu0 0.0
    %3171 = vmatprep.subr.mxu0 0.0
    %3172 = vmatpush1.msra.mxu0 0.0
    %3173 = vmatprep.subr.mxu0 0.0
    %3174 = vmatpush1.msra.mxu0 0.0
    %3175 = vmatprep.subr.mxu0 0.0
    %3176 = vmatpush1.msra.mxu0 0.0
    %3177 = vmatprep.subr.mxu0 0.0
    %3178 = vmatpush1.msra.mxu0 0.0
    %3179 = vmatprep.subr.mxu0 0.0
    %3180 = vmatpush1.msra.mxu0 0.0
    %3181 = vmatprep.subr.mxu0 0.0
    %3182 = vmatpush1.msra.mxu0 0.0
    %3183 = vmatprep.subr.mxu0 0.0
    %3184 = vmatpush1.msra.mxu0 0.0
    %3185 = vmatprep.subr.mxu0 0.0
    %3186 = vmatpush1.msra.mxu0 0.0
    %3187 = vmatprep.subr.mxu0 0.0
    %3188 = vmatpush1.msra.mxu0 0.0
    %3189 = vmatprep.subr.mxu0 0.0
    %3190 = vmatpush1.msra.mxu0 0.0
    %3191 = vmatprep.subr.mxu0 0.0
    %3192 = vmatpush1.msra.mxu0 0.0
    %3193 = vmatprep.subr.mxu0 0.0
    %3194 = vmatpush1.msra.mxu0 0.0
    %3195 = vmatprep.subr.mxu0 0.0
    %3196 = vmatpush1.msra.mxu0 0.0
    %3197 = vmatprep.subr.mxu0 0.0
    %3198 = vmatpush1.msra.mxu0 0.0
    %3199 = vmatprep.subr.mxu0 0.0
    %3200 = vmatpush1.msra.mxu0 0.0
    %3201 = vmatprep.subr.mxu0 0.0
    %3202 = vmatpush1.msra.mxu0 0.0
    %3203 = vmatprep.subr.mxu0 0.0
    %3204 = vmatpush1.msra.mxu0 0.0
    %3205 = vmatprep.mubr.f32.mxu0 0.0
    %3206 = vmatmul.mubr.f32.gmra.mrb[0].mxu0 %v3136
    %v3207 = vpop.f32.mrb[0].mxu0
    %v3208 = vadd.f32 0.0, %v3207
    %v3209 = vpop.f32.mrb[0].mxu0
    %3210 = vmatprep.mubr.f32.mxu0 0.0
    %3211 = vmatmul.mubr.f32.gmra.mrb[0].mxu0 %v3139
    %v3212 = vpop.f32.mrb[0].mxu0
    %v3213 = vadd.f32 0.0, %v3212
    %v3214 = vpop.f32.mrb[0].mxu0
    %3215 = vdwg.mxu0
    %v3216 = vadd.f32 %v3050, %v3208
    %v3217 = vadd.f32 %v3051, %v3213
    %v3218 = vadd.f32 %v3216, %v178
    %v3219 = vadd.f32 %v3217, %v178
    %v3220 = vsel %vm206, %v3218, 0.0
    %3221 = vadd.xlane.f32.xlu0 %v3220
    %v3222 = vpop.xlane.xlu0 %3221
    %v3223 = vsel %vm206, %v3219, 0.0
    %3224 = vadd.xlane.f32.xlu0 %v3223
    %v3225 = vpop.xlane.xlu0 %3224
    %v3226 = vmul.f32 %v3222, %v927
    %v3227 = vmul.f32 %v3225, %v927
    %v3228 = vsub.f32 %v3218, %v3226
    %v3229 = vsub.f32 %v3219, %v3227
    %v3230 = vmul.f32 %v3228, %v3228
    %v3231 = vmul.f32 %v3229, %v3229
    %v3232 = vsel %vm206, %v3230, 0.0
    %3233 = vadd.xlane.f32.xlu0 %v3232
    %v3234 = vpop.xlane.xlu0 %3233
    %v3235 = vsel %vm206, %v3231, 0.0
    %3236 = vadd.xlane.f32.xlu0 %v3235
    %v3237 = vpop.xlane.xlu0 %3236
    %v3238 = vmul.f32 %v3234, %v927
    %v3239 = vmul.f32 %v3237, %v927
    %v3240 = vadd.f32 %v3238, 1e-05
    %v3241 = vadd.f32 %v3239, 1e-05
    %v3242 = vrsqrt.pop %v3240
    %v3243 = vrsqrt.pop %v3241
    %v3244 = vmul.f32 %v3228, %v3242
    %v3245 = vmul.f32 %v3229, %v3243
    %v3246 = vmul.f32 %v3244, %v185
    %v3247 = vmul.f32 %v3245, %v185
    %v3248 = vadd.f32 %v3246, %v192
    %v3249 = vadd.f32 %v3247, %v192
    %v3250 = vadd.f32 %v2668, %v3248
    %v3251 = vadd.f32 %v2669, %v3249
    %3252 = vmatprep.subr.mxu0 0.0
    %3253 = vmatpush1.msra.mxu0 %v3250
    %3254 = vmatprep.subr.mxu0 0.0
    %3255 = vmatpush1.msra.mxu0 %v3251
    %3256 = vmatprep.subr.mxu0 0.0
    %3257 = vmatpush1.msra.mxu0 0.0
    %3258 = vmatprep.subr.mxu0 0.0
    %3259 = vmatpush1.msra.mxu0 0.0
    %3260 = vmatprep.subr.mxu0 0.0
    %3261 = vmatpush1.msra.mxu0 0.0
    %3262 = vmatprep.subr.mxu0 0.0
    %3263 = vmatpush1.msra.mxu0 0.0
    %3264 = vmatprep.subr.mxu0 0.0
    %3265 = vmatpush1.msra.mxu0 0.0
    %3266 = vmatprep.subr.mxu0 0.0
    %3267 = vmatpush1.msra.mxu0 0.0
    %3268 = vmatprep.subr.mxu0 0.0
    %3269 = vmatpush1.msra.mxu0 0.0
    %3270 = vmatprep.subr.mxu0 0.0
    %3271 = vmatpush1.msra.mxu0 0.0
    %3272 = vmatprep.subr.mxu0 0.0
    %3273 = vmatpush1.msra.mxu0 0.0
    %3274 = vmatprep.subr.mxu0 0.0
    %3275 = vmatpush1.msra.mxu0 0.0
    %3276 = vmatprep.subr.mxu0 0.0
    %3277 = vmatpush1.msra.mxu0 0.0
    %3278 = vmatprep.subr.mxu0 0.0
    %3279 = vmatpush1.msra.mxu0 0.0
    %3280 = vmatprep.subr.mxu0 0.0
    %3281 = vmatpush1.msra.mxu0 0.0
    %3282 = vmatprep.subr.mxu0 0.0
    %3283 = vmatpush1.msra.mxu0 0.0
    %3284 = vmatprep.subr.mxu0 0.0
    %3285 = vmatpush1.msra.mxu0 0.0
    %3286 = vmatprep.subr.mxu0 0.0
    %3287 = vmatpush1.msra.mxu0 0.0
    %3288 = vmatprep.subr.mxu0 0.0
    %3289 = vmatpush1.msra.mxu0 0.0
    %3290 = vmatprep.subr.mxu0 0.0
    %3291 = vmatpush1.msra.mxu0 0.0
    %3292 = vmatprep.subr.mxu0 0.0
    %3293 = vmatpush1.msra.mxu0 0.0
    %3294 = vmatprep.subr.mxu0 0.0
    %3295 = vmatpush1.msra.mxu0 0.0
    %3296 = vmatprep.subr.mxu0 0.0
    %3297 = vmatpush1.msra.mxu0 0.0
    %3298 = vmatprep.subr.mxu0 0.0
    %3299 = vmatpush1.msra.mxu0 0.0
    %3300 = vmatprep.subr.mxu0 0.0
    %3301 = vmatpush1.msra.mxu0 0.0
    %3302 = vmatprep.subr.mxu0 0.0
    %3303 = vmatpush1.msra.mxu0 0.0
    %3304 = vmatprep.subr.mxu0 0.0
    %3305 = vmatpush1.msra.mxu0 0.0
    %3306 = vmatprep.subr.mxu0 0.0
    %3307 = vmatpush1.msra.mxu0 0.0
    %3308 = vmatprep.subr.mxu0 0.0
    %3309 = vmatpush1.msra.mxu0 0.0
    %3310 = vmatprep.subr.mxu0 0.0
    %3311 = vmatpush1.msra.mxu0 0.0
    %3312 = vmatprep.subr.mxu0 0.0
    %3313 = vmatpush1.msra.mxu0 0.0
    %3314 = vmatprep.subr.mxu0 0.0
    %3315 = vmatpush1.msra.mxu0 0.0
    %3316 = vmatprep.mubr.f32.mxu0 0.0
    %3317 = vmatmul.mubr.f32.gmra.mrb[0].mxu0 %v955
    %v3318 = vpop.f32.mrb[0].mxu0
    %v3319 = vadd.f32 0.0, %v3318
    %v3320 = vpop.f32.mrb[0].mxu0
    %3321 = vmatprep.mubr.f32.mxu0 0.0
    %3322 = vmatmul.mubr.f32.gmra.mrb[0].mxu0 %v958
    %v3323 = vpop.f32.mrb[0].mxu0
    %v3324 = vadd.f32 0.0, %v3323
    %v3325 = vpop.f32.mrb[0].mxu0
    %3326 = vdwg.mxu0
    %v3327 = vsub.f32 %v3250, %v3319
    %v3328 = vsub.f32 %v3251, %v3324
    %v3329 = vmul.f32 %v3327, %v3327
    %v3330 = vmul.f32 %v3328, %v3328
    %3331 = vmatprep.subr.mxu0 0.0
    %3332 = vmatpush1.msra.mxu0 %v3329
    %3333 = vmatprep.subr.mxu0 0.0
    %3334 = vmatpush1.msra.mxu0 %v3330
    %3335 = vmatprep.subr.mxu0 0.0
    %3336 = vmatpush1.msra.mxu0 0.0
    %3337 = vmatprep.subr.mxu0 0.0
    %3338 = vmatpush1.msra.mxu0 0.0
    %3339 = vmatprep.subr.mxu0 0.0
    %3340 = vmatpush1.msra.mxu0 0.0
    %3341 = vmatprep.subr.mxu0 0.0
    %3342 = vmatpush1.msra.mxu0 0.0
    %3343 = vmatprep.subr.mxu0 0.0
    %3344 = vmatpush1.msra.mxu0 0.0
    %3345 = vmatprep.subr.mxu0 0.0
    %3346 = vmatpush1.msra.mxu0 0.0
    %3347 = vmatprep.subr.mxu0 0.0
    %3348 = vmatpush1.msra.mxu0 0.0
    %3349 = vmatprep.subr.mxu0 0.0
    %3350 = vmatpush1.msra.mxu0 0.0
    %3351 = vmatprep.subr.mxu0 0.0
    %3352 = vmatpush1.msra.mxu0 0.0
    %3353 = vmatprep.subr.mxu0 0.0
    %3354 = vmatpush1.msra.mxu0 0.0
    %3355 = vmatprep.subr.mxu0 0.0
    %3356 = vmatpush1.msra.mxu0 0.0
    %3357 = vmatprep.subr.mxu0 0.0
    %3358 = vmatpush1.msra.mxu0 0.0
    %3359 = vmatprep.subr.mxu0 0.0
    %3360 = vmatpush1.msra.mxu0 0.0
    %3361 = vmatprep.subr.mxu0 0.0
    %3362 = vmatpush1.msra.mxu0 0.0
    %3363 = vmatprep.subr.mxu0 0.0
    %3364 = vmatpush1.msra.mxu0 0.0
    %3365 = vmatprep.subr.mxu0 0.0
    %3366 = vmatpush1.msra.mxu0 0.0
    %3367 = vmatprep.subr.mxu0 0.0
    %3368 = vmatpush1.msra.mxu0 0.0
    %3369 = vmatprep.subr.mxu0 0.0
    %3370 = vmatpush1.msra.mxu0 0.0
    %3371 = vmatprep.subr.mxu0 0.0
    %3372 = vmatpush1.msra.mxu0 0.0
    %3373 = vmatprep.subr.mxu0 0.0
    %3374 = vmatpush1.msra.mxu0 0.0
    %3375 = vmatprep.subr.mxu0 0.0
    %3376 = vmatpush1.msra.mxu0 0.0
    %3377 = vmatprep.subr.mxu0 0.0
    %3378 = vmatpush1.msra.mxu0 0.0
    %3379 = vmatprep.subr.mxu0 0.0
    %3380 = vmatpush1.msra.mxu0 0.0
    %3381 = vmatprep.subr.mxu0 0.0
    %3382 = vmatpush1.msra.mxu0 0.0
    %3383 = vmatprep.subr.mxu0 0.0
    %3384 = vmatpush1.msra.mxu0 0.0
    %3385 = vmatprep.subr.mxu0 0.0
    %3386 = vmatpush1.msra.mxu0 0.0
    %3387 = vmatprep.subr.mxu0 0.0
    %3388 = vmatpush1.msra.mxu0 0.0
    %3389 = vmatprep.subr.mxu0 0.0
    %3390 = vmatpush1.msra.mxu0 0.0
    %3391 = vmatprep.subr.mxu0 0.0
    %3392 = vmatpush1.msra.mxu0 0.0
    %3393 = vmatprep.subr.mxu0 0.0
    %3394 = vmatpush1.msra.mxu0 0.0
    %3395 = vmatprep.mubr.f32.mxu0 0.0
    %3396 = vmatmul.mubr.f32.gmra.mrb[0].mxu0 %v955
    %v3397 = vpop.f32.mrb[0].mxu0
    %v3398 = vadd.f32 1e-05, %v3397
    %v3399 = vpop.f32.mrb[0].mxu0
    %3400 = vmatprep.mubr.f32.mxu0 0.0
    %3401 = vmatmul.mubr.f32.gmra.mrb[0].mxu0 %v958
    %v3402 = vpop.f32.mrb[0].mxu0
    %v3403 = vadd.f32 1e-05, %v3402
    %v3404 = vpop.f32.mrb[0].mxu0
    %3405 = vdwg.mxu0
    %v3406 = vrsqrt.pop %v3398
    %v3407 = vrsqrt.pop %v3403
    %v3408 = vmul.f32 %v3327, %v3406
    %v3409 = vmul.f32 %v3328, %v3407
    %v3410 = vmax.f32 %v3408, 0.0
    %v3411 = vmax.f32 %v3409, 0.0
    %3412 = vst.msk [vmem:[#allocation2] sm:$0xff] %vm206, %v3410
    %3413 = vst.msk [vmem:[#allocation2 + $0x8] sm:$0xff] %vm206, %v3411
    // Predicated region
    $region78: #{transformer_decoder.1} parent=1 // pred_check
      _
    $region79: #{transformer_decoder.1} parent=1 // pred_check_branch
      %3415 = sbr.rel (0) target = $region81
    $region80: #{transformer_decoder.1} parent=1 // pred_region
      %s3417 = ssub.s32 256, 256
      %3418 = vsyncadd [#allocation3], %s3417
      %s3419 = sshll.u32 [#allocation2], 4
      %s3420 = int_to_ptr.vmem [resolvable:$true] %s3419
      %3425 = dma.vmem_to_hbm [thread:$0]  %s3420, 256, %s19, [#allocation3], 128, 128, 8
    $region81: #{transformer_decoder.1} parent=1 // pred_fallthru
      _
    // Predicated region
    $region82: #{transformer_decoder.1} parent=1 // pred_check
      _
    $region83: #{transformer_decoder.1} parent=1 // pred_check_branch
      %3427 = sbr.rel (0) target = $region85
    $region84: #{transformer_decoder.1} parent=1 // pred_region
      %3428 = dma.done [#allocation3], 256
    $region85: #{transformer_decoder.1} parent=1 // pred_fallthru
      _
    %3429 = vsyncpa [#allocation3], 1

</llo_original>
